<compile_context>
chip_gen: v5e
topology: v5e:2x2
jax: 0.10.0
libtpu: 0.0.40
codegen_flags: <defaults>
</compile_context>

<pallas_src>
import functools

import jax
import jax.numpy as jnp
from jax.experimental import pallas as pl
from jax.experimental.pallas import tpu as pltpu


# --------------------------------------------------------------------------
# Model configuration (consistent with MARKModel construction)
# --------------------------------------------------------------------------
IMAGE_SIZE = 32
FE_HIDDEN = 32          # FeatureExtractor hardcodes Linear(1152, ...) => 32*6*6
EMBED_DIM = 32
DIMENSIONS = [8, 16]    # KB hidden channel dims == MaskGenerator output dims
NUM_CLASSES = 5         # MARKModel hardcodes KBClassifier(EMBED_DIM, 5)
NUM_TASKS = 2
BATCH = 2
BN_EPS = 1e-5


def _round_up(x, m):
    return ((x + m - 1) // m) * m


def _full_spec(shape):
    """BlockSpec covering the entire array (single block), for grid=(1,)."""
    n = len(shape)
    return pl.BlockSpec(shape, lambda *args, _n=n: (0,) * _n)


# --------------------------------------------------------------------------
# Pallas kernels
# --------------------------------------------------------------------------
def _conv_bn_relu_kernel(p_ref, w_ref, b_ref, g_ref, bt_ref, o_ref, acc_ref,
                         *, eps, n_valid):
    """Conv-as-matmul (bf16 in, f32 acc) + bias + training-mode BatchNorm2d + ReLU.

    p_ref : (Kp, L)   im2col patches, batch folded into the lane axis, L % 128 == 0
    w_ref : (C, Kp)   reshaped conv weight (bf16)
    b/g/bt: (C, 1)    bias / gamma / beta (f32)
    o_ref : (C, L)    normalized + ReLU'd output (f32), written exactly once
    acc   : (C, L)    VMEM scratch staging the raw conv output
    """
    acc_ref[...] = jnp.dot(w_ref[...], p_ref[...],
                           preferred_element_type=jnp.float32) + b_ref[...]
    lane = jax.lax.broadcasted_iota(jnp.int32, acc_ref.shape, 1)
    valid = lane < n_valid
    cnt = jnp.float32(n_valid)
    # pass 1: mean over valid lanes only (padded lanes excluded)
    mean = jnp.sum(jnp.where(valid, acc_ref[...], 0.0), axis=1, keepdims=True) / cnt
    # pass 2: centered variance (numerically safer than E[x^2] - E[x]^2)
    cen = jnp.where(valid, acc_ref[...] - mean, 0.0)
    var = jnp.sum(cen * cen, axis=1, keepdims=True) / cnt
    scale = g_ref[...] * jax.lax.rsqrt(var + eps)
    o_ref[...] = jnp.maximum(cen * scale + bt_ref[...], 0.0)


def _conv_bias_relu_kernel(p_ref, w_ref, b_ref, o_ref):
    """Single folded matmul: (C, Kp) @ (Kp, B*N) + bias, ReLU fused."""
    o_ref[...] = jnp.maximum(
        jnp.dot(w_ref[...], p_ref[...], preferred_element_type=jnp.float32)
        + b_ref[...], 0.0)


def _front_kernel(pfe_ref, wfe_ref, bfe_ref, g_ref, bt_ref,
                  pkb_ref, wkb_ref, bkb_ref,
                  ofe_ref, okb_ref, acc_ref, *, eps, n_valid_fe):
    """FE conv1 (+bias+BN+ReLU) and KB conv1 (+bias+ReLU) fused in one launch.

    Both convs read the same input image; they are independent until the mask
    multiply much later, so one pallas_call removes a full dispatch round-trip.
    """
    # KB conv1: bias + ReLU (lane dim is already 128-aligned -> dense store)
    okb_ref[...] = jnp.maximum(
        jnp.dot(wkb_ref[...], pkb_ref[...], preferred_element_type=jnp.float32)
        + bkb_ref[...], 0.0)
    # FE conv1: bias + BatchNorm (batch statistics over valid lanes) + ReLU
    acc_ref[...] = jnp.dot(wfe_ref[...], pfe_ref[...],
                           preferred_element_type=jnp.float32) + bfe_ref[...]
    lane = jax.lax.broadcasted_iota(jnp.int32, acc_ref.shape, 1)
    valid = lane < n_valid_fe
    cnt = jnp.float32(n_valid_fe)
    mean = jnp.sum(jnp.where(valid, acc_ref[...], 0.0), axis=1, keepdims=True) / cnt
    cen = jnp.where(valid, acc_ref[...] - mean, 0.0)
    var = jnp.sum(cen * cen, axis=1, keepdims=True) / cnt
    scale = g_ref[...] * jax.lax.rsqrt(var + eps)
    ofe_ref[...] = jnp.maximum(cen * scale + bt_ref[...], 0.0)


def _fe_head_kernel(x_ref, w1_ref, b1_ref, w2_ref, b2_ref, o_ref):
    """emb = relu(x @ w1 + b1); masks = relu(emb @ w2 + b2) (mask-gens fused)."""
    emb = jnp.maximum(
        jnp.dot(x_ref[...], w1_ref[...], preferred_element_type=jnp.float32)
        + b1_ref[...], 0.0)
    o_ref[...] = jnp.maximum(
        jnp.dot(emb.astype(jnp.bfloat16), w2_ref[...],
                preferred_element_type=jnp.float32) + b2_ref[...], 0.0)


def _kb_head_kernel(x_ref, wf_ref, bf_ref, wc_ref, bc_ref, o_ref):
    """h = relu(x @ wf + bf); logits = h @ wc + bc (classifier fused)."""
    h = jnp.maximum(
        jnp.dot(x_ref[...], wf_ref[...], preferred_element_type=jnp.float32)
        + bf_ref[...], 0.0)
    o_ref[...] = (jnp.dot(h.astype(jnp.bfloat16), wc_ref[...],
                          preferred_element_type=jnp.float32) + bc_ref[...])


# --------------------------------------------------------------------------
# im2col (batch folded into lanes, channel-major rows, no in-kernel reshapes)
# --------------------------------------------------------------------------
def _im2col_folded(x, kh, kw, padding):
    """(B, C, H, W) -> patches (C*kh*kw, B*Ho*Wo).

    Rows ordered (ci, dy, dx) to match w.reshape(Cout, Cin*kh*kw); lanes ordered
    batch-major (b*Ho*Wo + y*Wo + x) so the kernel output un-folds to NCHW.
    """
    if padding:
        x = jnp.pad(x, ((0, 0), (0, 0), (padding, padding), (padding, padding)))
    B, C, H, W = x.shape
    Ho, Wo = H - kh + 1, W - kw + 1
    cols = [x[:, :, i:i + Ho, j:j + Wo] for i in range(kh) for j in range(kw)]
    p = jnp.stack(cols, axis=2)                       # (B, C, kh*kw, Ho, Wo)
    p = p.reshape(B, C * kh * kw, Ho * Wo)            # (B, K, N)
    p = jnp.transpose(p, (1, 0, 2)).reshape(C * kh * kw, B * Ho * Wo)  # (K, B*N)
    return p, Ho, Wo


def _pad_kl(p, w2):
    """Pad contraction dim to a multiple of 16 (bf16 sublanes) and the lane dim
    to a multiple of 128 (lane-dense stores)."""
    K, L = p.shape
    Kp, Lp = _round_up(K, 16), _round_up(L, 128)
    if (Kp, Lp) != (K, L):
        p = jnp.pad(p, ((0, Kp - K), (0, Lp - L)))
    if Kp != K:
        w2 = jnp.pad(w2, ((0, 0), (0, Kp - K)))
    return p, w2


def _unfold(out, B, Cout, Ho, Wo):
    """(Cout, Lpad) kernel output -> (B, Cout, Ho, Wo) NCHW (drops pad lanes)."""
    o = out[:, :B * Ho * Wo].reshape(Cout, B, Ho, Wo)
    return jnp.transpose(o, (1, 0, 2, 3))


def maxpool2(x):
    """2x2 max pool, stride 2, floor mode (NCHW)."""
    Nb, C, H, W = x.shape
    H2, W2 = H // 2, W // 2
    x = x[:, :, :H2 * 2, :W2 * 2]
    return x.reshape(Nb, C, H2, 2, W2, 2).max(axis=(3, 5))


# --------------------------------------------------------------------------
# Pallas-call wrappers
# --------------------------------------------------------------------------
def front_convs(X, fe, kb_conv0, eps=BN_EPS):
    """FE conv1 (+BN+ReLU) and KB conv1 (+bias+ReLU) in ONE pallas_call."""
    B = X.shape[0]

    pfe, Ho1, Wo1 = _im2col_folded(X, 4, 4, 0)                 # (48, 1682)
    wfe = fe["conv1_w"].reshape(FE_HIDDEN, -1)
    pfe, wfe = _pad_kl(pfe, wfe)                               # (48, 1792)
    n_valid_fe = B * Ho1 * Wo1

    pkb, Hk1, Wk1 = _im2col_folded(X, 3, 3, 1)                 # (27, 2048)
    wkb = kb_conv0["w"].reshape(DIMENSIONS[0], -1)
    pkb, wkb = _pad_kl(pkb, wkb)                               # (32, 2048)

    Cfe, Lfe = FE_HIDDEN, pfe.shape[1]
    Ckb, Lkb = DIMENSIONS[0], pkb.shape[1]

    ofe, okb = pl.pallas_call(
        functools.partial(_front_kernel, eps=eps, n_valid_fe=n_valid_fe),
        out_shape=(jax.ShapeDtypeStruct((Cfe, Lfe), jnp.float32),
                   jax.ShapeDtypeStruct((Ckb, Lkb), jnp.float32)),
        grid=(1,),
        in_specs=[_full_spec(pfe.shape), _full_spec(wfe.shape),
                  _full_spec((Cfe, 1)), _full_spec((Cfe, 1)), _full_spec((Cfe, 1)),
                  _full_spec(pkb.shape), _full_spec(wkb.shape),
                  _full_spec((Ckb, 1))],
        out_specs=[_full_spec((Cfe, Lfe)), _full_spec((Ckb, Lkb))],
        scratch_shapes=[pltpu.VMEM((Cfe, Lfe), jnp.float32)],
    )(pfe.astype(jnp.bfloat16), wfe.astype(jnp.bfloat16),
      fe["conv1_b"].reshape(-1, 1), fe["bn_gamma"].reshape(-1, 1),
      fe["bn_beta"].reshape(-1, 1),
      pkb.astype(jnp.bfloat16), wkb.astype(jnp.bfloat16),
      kb_conv0["b"].reshape(-1, 1))

    return (_unfold(ofe, B, Cfe, Ho1, Wo1),    # (B, 32, 29, 29)
            _unfold(okb, B, Ckb, Hk1, Wk1))    # (B,  8, 32, 32)


def conv2d_bn_relu(x, w, b, gamma, beta, eps=BN_EPS):
    """Conv2d (valid) + training-mode BatchNorm2d + ReLU, one folded matmul."""
    Cout, _, kh, kw = w.shape
    B = x.shape[0]
    p, Ho, Wo = _im2col_folded(x, kh, kw, 0)
    w2 = w.reshape(Cout, -1)
    p, w2 = _pad_kl(p, w2)
    L = p.shape[1]
    n_valid = B * Ho * Wo

    out = pl.pallas_call(
        functools.partial(_conv_bn_relu_kernel, eps=eps, n_valid=n_valid),
        out_shape=jax.ShapeDtypeStruct((Cout, L), jnp.float32),
        grid=(1,),
        in_specs=[_full_spec(p.shape), _full_spec(w2.shape),
                  _full_spec((Cout, 1)), _full_spec((Cout, 1)),
                  _full_spec((Cout, 1))],
        out_specs=_full_spec((Cout, L)),
        scratch_shapes=[pltpu.VMEM((Cout, L), jnp.float32)],
    )(p.astype(jnp.bfloat16), w2.astype(jnp.bfloat16),
      b.reshape(-1, 1), gamma.reshape(-1, 1), beta.reshape(-1, 1))
    return _unfold(out, B, Cout, Ho, Wo)


def conv2d_relu(x, w, b, padding=0):
    """Conv2d + bias + ReLU, one folded matmul (no batch grid)."""
    Cout, _, kh, kw = w.shape
    B = x.shape[0]
    p, Ho, Wo = _im2col_folded(x, kh, kw, padding)
    w2 = w.reshape(Cout, -1)
    p, w2 = _pad_kl(p, w2)
    L = p.shape[1]

    out = pl.pallas_call(
        _conv_bias_relu_kernel,
        out_shape=jax.ShapeDtypeStruct((Cout, L), jnp.float32),
        grid=(1,),
        in_specs=[_full_spec(p.shape), _full_spec(w2.shape),
                  _full_spec((Cout, 1))],
        out_specs=_full_spec((Cout, L)),
    )(p.astype(jnp.bfloat16), w2.astype(jnp.bfloat16), b.reshape(-1, 1))
    return _unfold(out, B, Cout, Ho, Wo)


def fe_head(xf, w1, b1, w2, b2):
    """FE Linear + ReLU + fused MaskGenerator linears + ReLU, one pallas_call."""
    Nb, Kin = xf.shape
    Hd = w1.shape[1]
    Nout = w2.shape[1]
    return pl.pallas_call(
        _fe_head_kernel,
        out_shape=jax.ShapeDtypeStruct((Nb, Nout), jnp.float32),
        grid=(1,),
        in_specs=[_full_spec((Nb, Kin)), _full_spec((Kin, Hd)),
                  _full_spec((1, Hd)), _full_spec((Hd, Nout)),
                  _full_spec((1, Nout))],
        out_specs=_full_spec((Nb, Nout)),
    )(xf.astype(jnp.bfloat16), w1.astype(jnp.bfloat16), b1.reshape(1, -1),
      w2.astype(jnp.bfloat16), b2.reshape(1, -1))


def kb_head(xk, wf, bf, wc, bc):
    """KB fc + ReLU + KBClassifier linear, one pallas_call."""
    Nb, Kin = xk.shape
    Hd = wf.shape[1]
    Nout = wc.shape[1]
    return pl.pallas_call(
        _kb_head_kernel,
        out_shape=jax.ShapeDtypeStruct((Nb, Nout), jnp.float32),
        grid=(1,),
        in_specs=[_full_spec((Nb, Kin)), _full_spec((Kin, Hd)),
                  _full_spec((1, Hd)), _full_spec((Hd, Nout)),
                  _full_spec((1, Nout))],
        out_specs=_full_spec((Nb, Nout)),
    )(xk.astype(jnp.bfloat16), wf.astype(jnp.bfloat16), bf.reshape(1, -1),
      wc.astype(jnp.bfloat16), bc.reshape(1, -1))


# --------------------------------------------------------------------------
# Parameters
# --------------------------------------------------------------------------
def init_params(key):
    keys = iter(jax.random.split(key, 128))

    def w(shape, scale=0.05):
        return scale * jax.random.normal(next(keys), shape, dtype=jnp.float32)

    def zeros(shape):
        return jnp.zeros(shape, dtype=jnp.float32)

    params = {"fes": [], "mgs": [], "kbcs": []}

    for _ in range(NUM_TASKS):
        fe = {
            "conv1_w": w((FE_HIDDEN, 3, 4, 4)),
            "conv1_b": w((FE_HIDDEN,)),
            # single BatchNorm2d module shared by both applications (as in torch)
            "bn_gamma": jnp.ones((FE_HIDDEN,), jnp.float32),
            "bn_beta": zeros((FE_HIDDEN,)),
            "conv2_w": w((FE_HIDDEN, FE_HIDDEN, 3, 3)),
            "conv2_b": w((FE_HIDDEN,)),
            "lin_w": w((FE_HIDDEN * 6 * 6, EMBED_DIM)),   # stored (in, out)
            "lin_b": w((EMBED_DIM,)),
        }
        params["fes"].append(fe)

        mg = [{"w": w((EMBED_DIM, d)), "b": w((d,))} for d in DIMENSIONS]
        params["mgs"].append(mg)

        params["kbcs"].append({"w": w((EMBED_DIM, NUM_CLASSES)),
                               "b": w((NUM_CLASSES,))})

    kb_convs = []
    in_c = 3
    for d in DIMENSIONS:
        kb_convs.append({"w": w((d, in_c, 3, 3)), "b": w((d,))})
        in_c = d
    kb_fc_in = (IMAGE_SIZE // (2 ** len(DIMENSIONS))) ** 2 * DIMENSIONS[-1]
    params["kb"] = {
        "convs": kb_convs,
        "fc_w": w((kb_fc_in, EMBED_DIM)),
        "fc_b": w((EMBED_DIM,)),
    }
    return params


# --------------------------------------------------------------------------
# Forward pass: MARKModel.forward(X, task_id) with baseline == 0
# --------------------------------------------------------------------------
def mark_forward(params, X, task_id):
    fe = params["fes"][task_id]
    kb = params["kb"]
    B = X.shape[0]

    # --- Front: FE conv1 (+BN+ReLU) and KB conv1 (+bias+ReLU) in one launch ---
    h_fe, x_kb = front_convs(X, fe, kb["convs"][0])

    # --- FeatureExtractor tail ---
    h = maxpool2(h_fe)                                          # (B, 32, 14, 14)
    h = conv2d_bn_relu(h, fe["conv2_w"], fe["conv2_b"],
                       fe["bn_gamma"], fe["bn_beta"])           # (B, 32, 12, 12)
    h = maxpool2(h)                                             # (B, 32, 6, 6)
    hf = h.reshape(B, -1)                                       # (B, 1152) NCHW

    # --- FE linear + MaskGenerator linears fused into one pallas_call ---
    mg = params["mgs"][task_id]
    w2 = jnp.concatenate([layer["w"] for layer in mg], axis=1)  # (32, sum(dims))
    b2 = jnp.concatenate([layer["b"] for layer in mg], axis=0)
    masks_cat = fe_head(hf, fe["lin_w"], fe["lin_b"], w2, b2)   # (B, sum(dims))
    masks, off = [], 0
    for d in DIMENSIONS:
        masks.append(masks_cat[:, off:off + d])
        off += d

    # --- KB tail: pool + per-channel mask multiply in glue, convs in Pallas ---
    x = maxpool2(x_kb) * masks[0][:, :, None, None]             # (B, 8, 16, 16)
    for i, conv in enumerate(kb["convs"][1:], start=1):
        x = conv2d_relu(x, conv["w"], conv["b"], padding=1)
        x = maxpool2(x) * masks[i][:, :, None, None]
    xk = x.reshape(B, -1)                                       # (B, 1024)

    # --- KB fc + ReLU + KBClassifier fused ---
    kbc = params["kbcs"][task_id]
    logits = kb_head(xk, kb["fc_w"], kb["fc_b"], kbc["w"], kbc["b"])
    return logits


if __name__ == "__main__":
    key = jax.random.PRNGKey(0)
    pkey, xkey = jax.random.split(key)
    params = init_params(pkey)

    X = jax.random.normal(xkey, (BATCH, 3, IMAGE_SIZE, IMAGE_SIZE),
                          dtype=jnp.float32)
    task_id = 0

    fwd = jax.jit(mark_forward, static_argnums=(2,))
    logits = fwd(params, X, task_id)
    logits = jax.block_until_ready(logits)

    assert logits.shape == (BATCH, NUM_CLASSES), logits.shape
    assert bool(jnp.all(jnp.isfinite(logits)))
    print("KERNEL_OK")
</pallas_src>

<mosaic_0001>
module attributes {stable_mosaic.version = 11 : i64} {
  func.func @_front_kernel(%arg0: i32, %arg1: memref<48x1792xbf16, #tpu.memory_space<vmem>>, %arg2: memref<32x48xbf16, #tpu.memory_space<vmem>>, %arg3: memref<32x1xf32, #tpu.memory_space<vmem>>, %arg4: memref<32x1xf32, #tpu.memory_space<vmem>>, %arg5: memref<32x1xf32, #tpu.memory_space<vmem>>, %arg6: memref<32x2048xbf16, #tpu.memory_space<vmem>>, %arg7: memref<8x32xbf16, #tpu.memory_space<vmem>>, %arg8: memref<8x1xf32, #tpu.memory_space<vmem>>, %arg9: memref<32x1792xf32, #tpu.memory_space<vmem>>, %arg10: memref<8x2048xf32, #tpu.memory_space<vmem>>, %arg11: memref<32x1792xf32, #tpu.memory_space<vmem>>) attributes {dimension_semantics = [#tpu.dimension_semantics<arbitrary>], iteration_bounds = array<i64: 1>, scalar_prefetch = 0 : i64, scratch_operands = 1 : i64, tpu.core_type = #tpu.core_type<tc>, window_params = [{pipeline_mode = #tpu.pipeline_mode<synchronous>, transform_indices = @transform_0, window_bounds = array<i64: 48, 1792>}, {pipeline_mode = #tpu.pipeline_mode<synchronous>, transform_indices = @transform_1, window_bounds = array<i64: 32, 48>}, {pipeline_mode = #tpu.pipeline_mode<synchronous>, transform_indices = @transform_2, window_bounds = array<i64: 32, 1>}, {pipeline_mode = #tpu.pipeline_mode<synchronous>, transform_indices = @transform_3, window_bounds = array<i64: 32, 1>}, {pipeline_mode = #tpu.pipeline_mode<synchronous>, transform_indices = @transform_4, window_bounds = array<i64: 32, 1>}, {pipeline_mode = #tpu.pipeline_mode<synchronous>, transform_indices = @transform_5, window_bounds = array<i64: 32, 2048>}, {pipeline_mode = #tpu.pipeline_mode<synchronous>, transform_indices = @transform_6, window_bounds = array<i64: 8, 32>}, {pipeline_mode = #tpu.pipeline_mode<synchronous>, transform_indices = @transform_7, window_bounds = array<i64: 8, 1>}, {pipeline_mode = #tpu.pipeline_mode<synchronous>, transform_indices = @transform_8, window_bounds = array<i64: 32, 1792>}, {pipeline_mode = #tpu.pipeline_mode<synchronous>, transform_indices = @transform_9, window_bounds = array<i64: 8, 2048>}]} {
    %c0 = arith.constant 0 : index
    %c0_0 = arith.constant 0 : index
    %0 = vector.load %arg7[%c0, %c0_0] : memref<8x32xbf16, #tpu.memory_space<vmem>>, vector<8x32xbf16>
    %c0_1 = arith.constant 0 : index
    %c0_2 = arith.constant 0 : index
    %1 = vector.load %arg6[%c0_1, %c0_2] : memref<32x2048xbf16, #tpu.memory_space<vmem>>, vector<32x2048xbf16>
    %cst = arith.constant dense<0.000000e+00> : vector<8x2048xf32>
    %2 = tpu.matmul %0, %1, %cst {dimension_numbers = #tpu.dot_dimension_numbers<[1], [0], [0], [1], [0, 0, 1, 1], [], []>} : vector<8x32xbf16>, vector<32x2048xbf16>, vector<8x2048xf32> -> vector<8x2048xf32>
    %c0_3 = arith.constant 0 : index
    %c0_4 = arith.constant 0 : index
    %3 = vector.load %arg8[%c0_3, %c0_4] : memref<8x1xf32, #tpu.memory_space<vmem>>, vector<8x1xf32>
    %4 = vector.broadcast %3 : vector<8x1xf32> to vector<8x2048xf32>
    %5 = arith.addf %2, %4 : vector<8x2048xf32>
    %cst_5 = arith.constant 0.000000e+00 : f32
    %6 = vector.broadcast %cst_5 : f32 to vector<8x2048xf32>
    %7 = arith.maximumf %5, %6 : vector<8x2048xf32>
    %c0_6 = arith.constant 0 : index
    %c0_7 = arith.constant 0 : index
    %8 = vector.load %arg10[%c0_6, %c0_7] : memref<8x2048xf32, #tpu.memory_space<vmem>>, vector<8x2048xf32>
    tpu.vector_store %arg10[%c0_6, %c0_7], %7 {strides = array<i32>} : memref<8x2048xf32, #tpu.memory_space<vmem>>, vector<8x2048xf32>,
    %c0_8 = arith.constant 0 : index
    %c0_9 = arith.constant 0 : index
    %9 = vector.load %arg2[%c0_8, %c0_9] : memref<32x48xbf16, #tpu.memory_space<vmem>>, vector<32x48xbf16>
    %c0_10 = arith.constant 0 : index
    %c0_11 = arith.constant 0 : index
    %10 = vector.load %arg1[%c0_10, %c0_11] : memref<48x1792xbf16, #tpu.memory_space<vmem>>, vector<48x1792xbf16>
    %cst_12 = arith.constant dense<0.000000e+00> : vector<32x1792xf32>
    %11 = tpu.matmul %9, %10, %cst_12 {dimension_numbers = #tpu.dot_dimension_numbers<[1], [0], [0], [1], [0, 0, 1, 1], [], []>} : vector<32x48xbf16>, vector<48x1792xbf16>, vector<32x1792xf32> -> vector<32x1792xf32>
    %c0_13 = arith.constant 0 : index
    %c0_14 = arith.constant 0 : index
    %12 = vector.load %arg3[%c0_13, %c0_14] : memref<32x1xf32, #tpu.memory_space<vmem>>, vector<32x1xf32>
    %13 = vector.broadcast %12 : vector<32x1xf32> to vector<32x1792xf32>
    %14 = arith.addf %11, %13 : vector<32x1792xf32>
    %c0_15 = arith.constant 0 : index
    %c0_16 = arith.constant 0 : index
    %15 = vector.load %arg11[%c0_15, %c0_16] : memref<32x1792xf32, #tpu.memory_space<vmem>>, vector<32x1792xf32>
    tpu.vector_store %arg11[%c0_15, %c0_16], %14 {strides = array<i32>} : memref<32x1792xf32, #tpu.memory_space<vmem>>, vector<32x1792xf32>,
    %16 = tpu.iota {dimensions = array<i32: 1>} : vector<32x1792xi32>
    %c1682_i32 = arith.constant 1682 : i32
    %17 = vector.broadcast %c1682_i32 : i32 to vector<32x1792xi32>
    %18 = arith.cmpi slt, %16, %17 : vector<32x1792xi32>
    %c0_17 = arith.constant 0 : index
    %c0_18 = arith.constant 0 : index
    %19 = vector.load %arg11[%c0_17, %c0_18] : memref<32x1792xf32, #tpu.memory_space<vmem>>, vector<32x1792xf32>
    %cst_19 = arith.constant 0.000000e+00 : f32
    %20 = vector.broadcast %cst_19 : f32 to vector<32x1792xf32>
    %21 = arith.select %18, %19, %20 : vector<32x1792xi1>, vector<32x1792xf32>
    %cst_20 = arith.constant dense<0.000000e+00> : vector<32xf32>
    %22 = vector.multi_reduction <add>, %21, %cst_20 [1] : vector<32x1792xf32> to vector<32xf32>
    %23 = vector.shape_cast %22 : vector<32xf32> to vector<32x1xf32>
    %cst_21 = arith.constant 1.682000e+03 : f32
    %24 = vector.broadcast %cst_21 : f32 to vector<32x1xf32>
    %25 = arith.divf %23, %24 : vector<32x1xf32>
    %c0_22 = arith.constant 0 : index
    %c0_23 = arith.constant 0 : index
    %26 = vector.load %arg11[%c0_22, %c0_23] : memref<32x1792xf32, #tpu.memory_space<vmem>>, vector<32x1792xf32>
    %27 = vector.broadcast %25 : vector<32x1xf32> to vector<32x1792xf32>
    %28 = arith.subf %26, %27 : vector<32x1792xf32>
    %cst_24 = arith.constant 0.000000e+00 : f32
    %29 = vector.broadcast %cst_24 : f32 to vector<32x1792xf32>
    %30 = arith.select %18, %28, %29 : vector<32x1792xi1>, vector<32x1792xf32>
    %31 = arith.mulf %30, %30 : vector<32x1792xf32>
    %cst_25 = arith.constant dense<0.000000e+00> : vector<32xf32>
    %32 = vector.multi_reduction <add>, %31, %cst_25 [1] : vector<32x1792xf32> to vector<32xf32>
    %33 = vector.shape_cast %32 : vector<32xf32> to vector<32x1xf32>
    %cst_26 = arith.constant 1.682000e+03 : f32
    %34 = vector.broadcast %cst_26 : f32 to vector<32x1xf32>
    %35 = arith.divf %33, %34 : vector<32x1xf32>
    %c0_27 = arith.constant 0 : index
    %c0_28 = arith.constant 0 : index
    %36 = vector.load %arg4[%c0_27, %c0_28] : memref<32x1xf32, #tpu.memory_space<vmem>>, vector<32x1xf32>
    %cst_29 = arith.constant 9.99999974E-6 : f32
    %37 = vector.broadcast %cst_29 : f32 to vector<32x1xf32>
    %38 = arith.addf %35, %37 : vector<32x1xf32>
    %39 = math.rsqrt %38 : vector<32x1xf32>
    %40 = arith.mulf %36, %39 : vector<32x1xf32>
    %41 = vector.broadcast %40 : vector<32x1xf32> to vector<32x1792xf32>
    %42 = arith.mulf %30, %41 : vector<32x1792xf32>
    %c0_30 = arith.constant 0 : index
    %c0_31 = arith.constant 0 : index
    %43 = vector.load %arg5[%c0_30, %c0_31] : memref<32x1xf32, #tpu.memory_space<vmem>>, vector<32x1xf32>
    %44 = vector.broadcast %43 : vector<32x1xf32> to vector<32x1792xf32>
    %45 = arith.addf %42, %44 : vector<32x1792xf32>
    %cst_32 = arith.constant 0.000000e+00 : f32
    %46 = vector.broadcast %cst_32 : f32 to vector<32x1792xf32>
    %47 = arith.maximumf %45, %46 : vector<32x1792xf32>
    %c0_33 = arith.constant 0 : index
    %c0_34 = arith.constant 0 : index
    %48 = vector.load %arg9[%c0_33, %c0_34] : memref<32x1792xf32, #tpu.memory_space<vmem>>, vector<32x1792xf32>
    tpu.vector_store %arg9[%c0_33, %c0_34], %47 {strides = array<i32>} : memref<32x1792xf32, #tpu.memory_space<vmem>>, vector<32x1792xf32>,
    return
  }
  func.func @transform_0(%arg0: i32) -> (i32, i32) {
    %c0_i32 = arith.constant 0 : i32
    %c0_i32_0 = arith.constant 0 : i32
    %c0_i32_1 = arith.constant 0 : i32
    return %c0_i32, %c0_i32_0 : i32, i32
  }
  func.func @transform_1(%arg0: i32) -> (i32, i32) {
    %c0_i32 = arith.constant 0 : i32
    %c0_i32_0 = arith.constant 0 : i32
    %c0_i32_1 = arith.constant 0 : i32
    return %c0_i32, %c0_i32_0 : i32, i32
  }
  func.func @transform_2(%arg0: i32) -> (i32, i32) {
    %c0_i32 = arith.constant 0 : i32
    %c0_i32_0 = arith.constant 0 : i32
    %c0_i32_1 = arith.constant 0 : i32
    return %c0_i32, %c0_i32_0 : i32, i32
  }
  func.func @transform_3(%arg0: i32) -> (i32, i32) {
    %c0_i32 = arith.constant 0 : i32
    %c0_i32_0 = arith.constant 0 : i32
    %c0_i32_1 = arith.constant 0 : i32
    return %c0_i32, %c0_i32_0 : i32, i32
  }
  func.func @transform_4(%arg0: i32) -> (i32, i32) {
    %c0_i32 = arith.constant 0 : i32
    %c0_i32_0 = arith.constant 0 : i32
    %c0_i32_1 = arith.constant 0 : i32
    return %c0_i32, %c0_i32_0 : i32, i32
  }
  func.func @transform_5(%arg0: i32) -> (i32, i32) {
    %c0_i32 = arith.constant 0 : i32
    %c0_i32_0 = arith.constant 0 : i32
    %c0_i32_1 = arith.constant 0 : i32
    return %c0_i32, %c0_i32_0 : i32, i32
  }
  func.func @transform_6(%arg0: i32) -> (i32, i32) {
    %c0_i32 = arith.constant 0 : i32
    %c0_i32_0 = arith.constant 0 : i32
    %c0_i32_1 = arith.constant 0 : i32
    return %c0_i32, %c0_i32_0 : i32, i32
  }
  func.func @transform_7(%arg0: i32) -> (i32, i32) {
    %c0_i32 = arith.constant 0 : i32
    %c0_i32_0 = arith.constant 0 : i32
    %c0_i32_1 = arith.constant 0 : i32
    return %c0_i32, %c0_i32_0 : i32, i32
  }
  func.func @transform_8(%arg0: i32) -> (i32, i32) {
    %c0_i32 = arith.constant 0 : i32
    %c0_i32_0 = arith.constant 0 : i32
    %c0_i32_1 = arith.constant 0 : i32
    return %c0_i32, %c0_i32_0 : i32, i32
  }
  func.func @transform_9(%arg0: i32) -> (i32, i32) {
    %c0_i32 = arith.constant 0 : i32
    %c0_i32_0 = arith.constant 0 : i32
    %c0_i32_1 = arith.constant 0 : i32
    return %c0_i32, %c0_i32_0 : i32, i32
  }
}

module attributes {stable_mosaic.version = 11 : i64} {
  func.func @_conv_bn_relu_kernel(%arg0: i32, %arg1: memref<288x384xbf16, #tpu.memory_space<vmem>>, %arg2: memref<32x288xbf16, #tpu.memory_space<vmem>>, %arg3: memref<32x1xf32, #tpu.memory_space<vmem>>, %arg4: memref<32x1xf32, #tpu.memory_space<vmem>>, %arg5: memref<32x1xf32, #tpu.memory_space<vmem>>, %arg6: memref<32x384xf32, #tpu.memory_space<vmem>>, %arg7: memref<32x384xf32, #tpu.memory_space<vmem>>) attributes {dimension_semantics = [#tpu.dimension_semantics<arbitrary>], iteration_bounds = array<i64: 1>, scalar_prefetch = 0 : i64, scratch_operands = 1 : i64, tpu.core_type = #tpu.core_type<tc>, window_params = [{pipeline_mode = #tpu.pipeline_mode<synchronous>, transform_indices = @transform_0, window_bounds = array<i64: 288, 384>}, {pipeline_mode = #tpu.pipeline_mode<synchronous>, transform_indices = @transform_1, window_bounds = array<i64: 32, 288>}, {pipeline_mode = #tpu.pipeline_mode<synchronous>, transform_indices = @transform_2, window_bounds = array<i64: 32, 1>}, {pipeline_mode = #tpu.pipeline_mode<synchronous>, transform_indices = @transform_3, window_bounds = array<i64: 32, 1>}, {pipeline_mode = #tpu.pipeline_mode<synchronous>, transform_indices = @transform_4, window_bounds = array<i64: 32, 1>}, {pipeline_mode = #tpu.pipeline_mode<synchronous>, transform_indices = @transform_5, window_bounds = array<i64: 32, 384>}]} {
    %c0 = arith.constant 0 : index
    %c0_0 = arith.constant 0 : index
    %0 = vector.load %arg2[%c0, %c0_0] : memref<32x288xbf16, #tpu.memory_space<vmem>>, vector<32x288xbf16>
    %c0_1 = arith.constant 0 : index
    %c0_2 = arith.constant 0 : index
    %1 = vector.load %arg1[%c0_1, %c0_2] : memref<288x384xbf16, #tpu.memory_space<vmem>>, vector<288x384xbf16>
    %cst = arith.constant dense<0.000000e+00> : vector<32x384xf32>
    %2 = tpu.matmul %0, %1, %cst {dimension_numbers = #tpu.dot_dimension_numbers<[1], [0], [0], [1], [0, 0, 1, 1], [], []>} : vector<32x288xbf16>, vector<288x384xbf16>, vector<32x384xf32> -> vector<32x384xf32>
    %c0_3 = arith.constant 0 : index
    %c0_4 = arith.constant 0 : index
    %3 = vector.load %arg3[%c0_3, %c0_4] : memref<32x1xf32, #tpu.memory_space<vmem>>, vector<32x1xf32>
    %4 = vector.broadcast %3 : vector<32x1xf32> to vector<32x384xf32>
    %5 = arith.addf %2, %4 : vector<32x384xf32>
    %c0_5 = arith.constant 0 : index
    %c0_6 = arith.constant 0 : index
    %6 = vector.load %arg7[%c0_5, %c0_6] : memref<32x384xf32, #tpu.memory_space<vmem>>, vector<32x384xf32>
    tpu.vector_store %arg7[%c0_5, %c0_6], %5 {strides = array<i32>} : memref<32x384xf32, #tpu.memory_space<vmem>>, vector<32x384xf32>,
    %7 = tpu.iota {dimensions = array<i32: 1>} : vector<32x384xi32>
    %c288_i32 = arith.constant 288 : i32
    %8 = vector.broadcast %c288_i32 : i32 to vector<32x384xi32>
    %9 = arith.cmpi slt, %7, %8 : vector<32x384xi32>
    %c0_7 = arith.constant 0 : index
    %c0_8 = arith.constant 0 : index
    %10 = vector.load %arg7[%c0_7, %c0_8] : memref<32x384xf32, #tpu.memory_space<vmem>>, vector<32x384xf32>
    %cst_9 = arith.constant 0.000000e+00 : f32
    %11 = vector.broadcast %cst_9 : f32 to vector<32x384xf32>
    %12 = arith.select %9, %10, %11 : vector<32x384xi1>, vector<32x384xf32>
    %cst_10 = arith.constant dense<0.000000e+00> : vector<32xf32>
    %13 = vector.multi_reduction <add>, %12, %cst_10 [1] : vector<32x384xf32> to vector<32xf32>
    %14 = vector.shape_cast %13 : vector<32xf32> to vector<32x1xf32>
    %cst_11 = arith.constant 2.880000e+02 : f32
    %15 = vector.broadcast %cst_11 : f32 to vector<32x1xf32>
    %16 = arith.divf %14, %15 : vector<32x1xf32>
    %c0_12 = arith.constant 0 : index
    %c0_13 = arith.constant 0 : index
    %17 = vector.load %arg7[%c0_12, %c0_13] : memref<32x384xf32, #tpu.memory_space<vmem>>, vector<32x384xf32>
    %18 = vector.broadcast %16 : vector<32x1xf32> to vector<32x384xf32>
    %19 = arith.subf %17, %18 : vector<32x384xf32>
    %cst_14 = arith.constant 0.000000e+00 : f32
    %20 = vector.broadcast %cst_14 : f32 to vector<32x384xf32>
    %21 = arith.select %9, %19, %20 : vector<32x384xi1>, vector<32x384xf32>
    %22 = arith.mulf %21, %21 : vector<32x384xf32>
    %cst_15 = arith.constant dense<0.000000e+00> : vector<32xf32>
    %23 = vector.multi_reduction <add>, %22, %cst_15 [1] : vector<32x384xf32> to vector<32xf32>
    %24 = vector.shape_cast %23 : vector<32xf32> to vector<32x1xf32>
    %cst_16 = arith.constant 2.880000e+02 : f32
    %25 = vector.broadcast %cst_16 : f32 to vector<32x1xf32>
    %26 = arith.divf %24, %25 : vector<32x1xf32>
    %c0_17 = arith.constant 0 : index
    %c0_18 = arith.constant 0 : index
    %27 = vector.load %arg4[%c0_17, %c0_18] : memref<32x1xf32, #tpu.memory_space<vmem>>, vector<32x1xf32>
    %cst_19 = arith.constant 9.99999974E-6 : f32
    %28 = vector.broadcast %cst_19 : f32 to vector<32x1xf32>
    %29 = arith.addf %26, %28 : vector<32x1xf32>
    %30 = math.rsqrt %29 : vector<32x1xf32>
    %31 = arith.mulf %27, %30 : vector<32x1xf32>
    %32 = vector.broadcast %31 : vector<32x1xf32> to vector<32x384xf32>
    %33 = arith.mulf %21, %32 : vector<32x384xf32>
    %c0_20 = arith.constant 0 : index
    %c0_21 = arith.constant 0 : index
    %34 = vector.load %arg5[%c0_20, %c0_21] : memref<32x1xf32, #tpu.memory_space<vmem>>, vector<32x1xf32>
    %35 = vector.broadcast %34 : vector<32x1xf32> to vector<32x384xf32>
    %36 = arith.addf %33, %35 : vector<32x384xf32>
    %cst_22 = arith.constant 0.000000e+00 : f32
    %37 = vector.broadcast %cst_22 : f32 to vector<32x384xf32>
    %38 = arith.maximumf %36, %37 : vector<32x384xf32>
    %c0_23 = arith.constant 0 : index
    %c0_24 = arith.constant 0 : index
    %39 = vector.load %arg6[%c0_23, %c0_24] : memref<32x384xf32, #tpu.memory_space<vmem>>, vector<32x384xf32>
    tpu.vector_store %arg6[%c0_23, %c0_24], %38 {strides = array<i32>} : memref<32x384xf32, #tpu.memory_space<vmem>>, vector<32x384xf32>,
    return
  }
  func.func @transform_0(%arg0: i32) -> (i32, i32) {
    %c0_i32 = arith.constant 0 : i32
    %c0_i32_0 = arith.constant 0 : i32
    %c0_i32_1 = arith.constant 0 : i32
    return %c0_i32, %c0_i32_0 : i32, i32
  }
  func.func @transform_1(%arg0: i32) -> (i32, i32) {
    %c0_i32 = arith.constant 0 : i32
    %c0_i32_0 = arith.constant 0 : i32
    %c0_i32_1 = arith.constant 0 : i32
    return %c0_i32, %c0_i32_0 : i32, i32
  }
  func.func @transform_2(%arg0: i32) -> (i32, i32) {
    %c0_i32 = arith.constant 0 : i32
    %c0_i32_0 = arith.constant 0 : i32
    %c0_i32_1 = arith.constant 0 : i32
    return %c0_i32, %c0_i32_0 : i32, i32
  }
  func.func @transform_3(%arg0: i32) -> (i32, i32) {
    %c0_i32 = arith.constant 0 : i32
    %c0_i32_0 = arith.constant 0 : i32
    %c0_i32_1 = arith.constant 0 : i32
    return %c0_i32, %c0_i32_0 : i32, i32
  }
  func.func @transform_4(%arg0: i32) -> (i32, i32) {
    %c0_i32 = arith.constant 0 : i32
    %c0_i32_0 = arith.constant 0 : i32
    %c0_i32_1 = arith.constant 0 : i32
    return %c0_i32, %c0_i32_0 : i32, i32
  }
  func.func @transform_5(%arg0: i32) -> (i32, i32) {
    %c0_i32 = arith.constant 0 : i32
    %c0_i32_0 = arith.constant 0 : i32
    %c0_i32_1 = arith.constant 0 : i32
    return %c0_i32, %c0_i32_0 : i32, i32
  }
}

module attributes {stable_mosaic.version = 11 : i64} {
  func.func @_fe_head_kernel(%arg0: i32, %arg1: memref<2x1152xbf16, #tpu.memory_space<vmem>>, %arg2: memref<1152x32xbf16, #tpu.memory_space<vmem>>, %arg3: memref<1x32xf32, #tpu.memory_space<vmem>>, %arg4: memref<32x24xbf16, #tpu.memory_space<vmem>>, %arg5: memref<1x24xf32, #tpu.memory_space<vmem>>, %arg6: memref<2x24xf32, #tpu.memory_space<vmem>>) attributes {dimension_semantics = [#tpu.dimension_semantics<arbitrary>], iteration_bounds = array<i64: 1>, scalar_prefetch = 0 : i64, scratch_operands = 0 : i64, tpu.core_type = #tpu.core_type<tc>, window_params = [{pipeline_mode = #tpu.pipeline_mode<synchronous>, transform_indices = @transform_0, window_bounds = array<i64: 2, 1152>}, {pipeline_mode = #tpu.pipeline_mode<synchronous>, transform_indices = @transform_1, window_bounds = array<i64: 1152, 32>}, {pipeline_mode = #tpu.pipeline_mode<synchronous>, transform_indices = @transform_2, window_bounds = array<i64: 1, 32>}, {pipeline_mode = #tpu.pipeline_mode<synchronous>, transform_indices = @transform_3, window_bounds = array<i64: 32, 24>}, {pipeline_mode = #tpu.pipeline_mode<synchronous>, transform_indices = @transform_4, window_bounds = array<i64: 1, 24>}, {pipeline_mode = #tpu.pipeline_mode<synchronous>, transform_indices = @transform_5, window_bounds = array<i64: 2, 24>}]} {
    %c0 = arith.constant 0 : index
    %c0_0 = arith.constant 0 : index
    %0 = vector.load %arg1[%c0, %c0_0] : memref<2x1152xbf16, #tpu.memory_space<vmem>>, vector<2x1152xbf16>
    %c0_1 = arith.constant 0 : index
    %c0_2 = arith.constant 0 : index
    %1 = vector.load %arg2[%c0_1, %c0_2] : memref<1152x32xbf16, #tpu.memory_space<vmem>>, vector<1152x32xbf16>
    %cst = arith.constant dense<0.000000e+00> : vector<2x32xf32>
    %2 = tpu.matmul %0, %1, %cst {dimension_numbers = #tpu.dot_dimension_numbers<[1], [0], [0], [1], [0, 0, 1, 1], [], []>} : vector<2x1152xbf16>, vector<1152x32xbf16>, vector<2x32xf32> -> vector<2x32xf32>
    %c0_3 = arith.constant 0 : index
    %c0_4 = arith.constant 0 : index
    %3 = vector.load %arg3[%c0_3, %c0_4] : memref<1x32xf32, #tpu.memory_space<vmem>>, vector<1x32xf32>
    %4 = vector.broadcast %3 : vector<1x32xf32> to vector<2x32xf32>
    %5 = arith.addf %2, %4 : vector<2x32xf32>
    %cst_5 = arith.constant 0.000000e+00 : f32
    %6 = vector.broadcast %cst_5 : f32 to vector<2x32xf32>
    %7 = arith.maximumf %5, %6 : vector<2x32xf32>
    %8 = arith.truncf %7 : vector<2x32xf32> to vector<2x32xbf16>
    %c0_6 = arith.constant 0 : index
    %c0_7 = arith.constant 0 : index
    %9 = vector.load %arg4[%c0_6, %c0_7] : memref<32x24xbf16, #tpu.memory_space<vmem>>, vector<32x24xbf16>
    %cst_8 = arith.constant dense<0.000000e+00> : vector<2x24xf32>
    %10 = tpu.matmul %8, %9, %cst_8 {dimension_numbers = #tpu.dot_dimension_numbers<[1], [0], [0], [1], [0, 0, 1, 1], [], []>} : vector<2x32xbf16>, vector<32x24xbf16>, vector<2x24xf32> -> vector<2x24xf32>
    %c0_9 = arith.constant 0 : index
    %c0_10 = arith.constant 0 : index
    %11 = vector.load %arg5[%c0_9, %c0_10] : memref<1x24xf32, #tpu.memory_space<vmem>>, vector<1x24xf32>
    %12 = vector.broadcast %11 : vector<1x24xf32> to vector<2x24xf32>
    %13 = arith.addf %10, %12 : vector<2x24xf32>
    %cst_11 = arith.constant 0.000000e+00 : f32
    %14 = vector.broadcast %cst_11 : f32 to vector<2x24xf32>
    %15 = arith.maximumf %13, %14 : vector<2x24xf32>
    %c0_12 = arith.constant 0 : index
    %c0_13 = arith.constant 0 : index
    %16 = vector.load %arg6[%c0_12, %c0_13] : memref<2x24xf32, #tpu.memory_space<vmem>>, vector<2x24xf32>
    tpu.vector_store %arg6[%c0_12, %c0_13], %15 {strides = array<i32>} : memref<2x24xf32, #tpu.memory_space<vmem>>, vector<2x24xf32>,
    return
  }
  func.func @transform_0(%arg0: i32) -> (i32, i32) {
    %c0_i32 = arith.constant 0 : i32
    %c0_i32_0 = arith.constant 0 : i32
    %c0_i32_1 = arith.constant 0 : i32
    return %c0_i32, %c0_i32_0 : i32, i32
  }
  func.func @transform_1(%arg0: i32) -> (i32, i32) {
    %c0_i32 = arith.constant 0 : i32
    %c0_i32_0 = arith.constant 0 : i32
    %c0_i32_1 = arith.constant 0 : i32
    return %c0_i32, %c0_i32_0 : i32, i32
  }
  func.func @transform_2(%arg0: i32) -> (i32, i32) {
    %c0_i32 = arith.constant 0 : i32
    %c0_i32_0 = arith.constant 0 : i32
    %c0_i32_1 = arith.constant 0 : i32
    return %c0_i32, %c0_i32_0 : i32, i32
  }
  func.func @transform_3(%arg0: i32) -> (i32, i32) {
    %c0_i32 = arith.constant 0 : i32
    %c0_i32_0 = arith.constant 0 : i32
    %c0_i32_1 = arith.constant 0 : i32
    return %c0_i32, %c0_i32_0 : i32, i32
  }
  func.func @transform_4(%arg0: i32) -> (i32, i32) {
    %c0_i32 = arith.constant 0 : i32
    %c0_i32_0 = arith.constant 0 : i32
    %c0_i32_1 = arith.constant 0 : i32
    return %c0_i32, %c0_i32_0 : i32, i32
  }
  func.func @transform_5(%arg0: i32) -> (i32, i32) {
    %c0_i32 = arith.constant 0 : i32
    %c0_i32_0 = arith.constant 0 : i32
    %c0_i32_1 = arith.constant 0 : i32
    return %c0_i32, %c0_i32_0 : i32, i32
  }
}

module attributes {stable_mosaic.version = 11 : i64} {
  func.func @_conv_bias_relu_kernel(%arg0: i32, %arg1: memref<80x512xbf16, #tpu.memory_space<vmem>>, %arg2: memref<16x80xbf16, #tpu.memory_space<vmem>>, %arg3: memref<16x1xf32, #tpu.memory_space<vmem>>, %arg4: memref<16x512xf32, #tpu.memory_space<vmem>>) attributes {dimension_semantics = [#tpu.dimension_semantics<arbitrary>], iteration_bounds = array<i64: 1>, scalar_prefetch = 0 : i64, scratch_operands = 0 : i64, tpu.core_type = #tpu.core_type<tc>, window_params = [{pipeline_mode = #tpu.pipeline_mode<synchronous>, transform_indices = @transform_0, window_bounds = array<i64: 80, 512>}, {pipeline_mode = #tpu.pipeline_mode<synchronous>, transform_indices = @transform_1, window_bounds = array<i64: 16, 80>}, {pipeline_mode = #tpu.pipeline_mode<synchronous>, transform_indices = @transform_2, window_bounds = array<i64: 16, 1>}, {pipeline_mode = #tpu.pipeline_mode<synchronous>, transform_indices = @transform_3, window_bounds = array<i64: 16, 512>}]} {
    %c0 = arith.constant 0 : index
    %c0_0 = arith.constant 0 : index
    %0 = vector.load %arg2[%c0, %c0_0] : memref<16x80xbf16, #tpu.memory_space<vmem>>, vector<16x80xbf16>
    %c0_1 = arith.constant 0 : index
    %c0_2 = arith.constant 0 : index
    %1 = vector.load %arg1[%c0_1, %c0_2] : memref<80x512xbf16, #tpu.memory_space<vmem>>, vector<80x512xbf16>
    %cst = arith.constant dense<0.000000e+00> : vector<16x512xf32>
    %2 = tpu.matmul %0, %1, %cst {dimension_numbers = #tpu.dot_dimension_numbers<[1], [0], [0], [1], [0, 0, 1, 1], [], []>} : vector<16x80xbf16>, vector<80x512xbf16>, vector<16x512xf32> -> vector<16x512xf32>
    %c0_3 = arith.constant 0 : index
    %c0_4 = arith.constant 0 : index
    %3 = vector.load %arg3[%c0_3, %c0_4] : memref<16x1xf32, #tpu.memory_space<vmem>>, vector<16x1xf32>
    %4 = vector.broadcast %3 : vector<16x1xf32> to vector<16x512xf32>
    %5 = arith.addf %2, %4 : vector<16x512xf32>
    %cst_5 = arith.constant 0.000000e+00 : f32
    %6 = vector.broadcast %cst_5 : f32 to vector<16x512xf32>
    %7 = arith.maximumf %5, %6 : vector<16x512xf32>
    %c0_6 = arith.constant 0 : index
    %c0_7 = arith.constant 0 : index
    %8 = vector.load %arg4[%c0_6, %c0_7] : memref<16x512xf32, #tpu.memory_space<vmem>>, vector<16x512xf32>
    tpu.vector_store %arg4[%c0_6, %c0_7], %7 {strides = array<i32>} : memref<16x512xf32, #tpu.memory_space<vmem>>, vector<16x512xf32>,
    return
  }
  func.func @transform_0(%arg0: i32) -> (i32, i32) {
    %c0_i32 = arith.constant 0 : i32
    %c0_i32_0 = arith.constant 0 : i32
    %c0_i32_1 = arith.constant 0 : i32
    return %c0_i32, %c0_i32_0 : i32, i32
  }
  func.func @transform_1(%arg0: i32) -> (i32, i32) {
    %c0_i32 = arith.constant 0 : i32
    %c0_i32_0 = arith.constant 0 : i32
    %c0_i32_1 = arith.constant 0 : i32
    return %c0_i32, %c0_i32_0 : i32, i32
  }
  func.func @transform_2(%arg0: i32) -> (i32, i32) {
    %c0_i32 = arith.constant 0 : i32
    %c0_i32_0 = arith.constant 0 : i32
    %c0_i32_1 = arith.constant 0 : i32
    return %c0_i32, %c0_i32_0 : i32, i32
  }
  func.func @transform_3(%arg0: i32) -> (i32, i32) {
    %c0_i32 = arith.constant 0 : i32
    %c0_i32_0 = arith.constant 0 : i32
    %c0_i32_1 = arith.constant 0 : i32
    return %c0_i32, %c0_i32_0 : i32, i32
  }
}

module attributes {stable_mosaic.version = 11 : i64} {
  func.func @_kb_head_kernel(%arg0: i32, %arg1: memref<2x1024xbf16, #tpu.memory_space<vmem>>, %arg2: memref<1024x32xbf16, #tpu.memory_space<vmem>>, %arg3: memref<1x32xf32, #tpu.memory_space<vmem>>, %arg4: memref<32x5xbf16, #tpu.memory_space<vmem>>, %arg5: memref<1x5xf32, #tpu.memory_space<vmem>>, %arg6: memref<2x5xf32, #tpu.memory_space<vmem>>) attributes {dimension_semantics = [#tpu.dimension_semantics<arbitrary>], iteration_bounds = array<i64: 1>, scalar_prefetch = 0 : i64, scratch_operands = 0 : i64, tpu.core_type = #tpu.core_type<tc>, window_params = [{pipeline_mode = #tpu.pipeline_mode<synchronous>, transform_indices = @transform_0, window_bounds = array<i64: 2, 1024>}, {pipeline_mode = #tpu.pipeline_mode<synchronous>, transform_indices = @transform_1, window_bounds = array<i64: 1024, 32>}, {pipeline_mode = #tpu.pipeline_mode<synchronous>, transform_indices = @transform_2, window_bounds = array<i64: 1, 32>}, {pipeline_mode = #tpu.pipeline_mode<synchronous>, transform_indices = @transform_3, window_bounds = array<i64: 32, 5>}, {pipeline_mode = #tpu.pipeline_mode<synchronous>, transform_indices = @transform_4, window_bounds = array<i64: 1, 5>}, {pipeline_mode = #tpu.pipeline_mode<synchronous>, transform_indices = @transform_5, window_bounds = array<i64: 2, 5>}]} {
    %c0 = arith.constant 0 : index
    %c0_0 = arith.constant 0 : index
    %0 = vector.load %arg1[%c0, %c0_0] : memref<2x1024xbf16, #tpu.memory_space<vmem>>, vector<2x1024xbf16>
    %c0_1 = arith.constant 0 : index
    %c0_2 = arith.constant 0 : index
    %1 = vector.load %arg2[%c0_1, %c0_2] : memref<1024x32xbf16, #tpu.memory_space<vmem>>, vector<1024x32xbf16>
    %cst = arith.constant dense<0.000000e+00> : vector<2x32xf32>
    %2 = tpu.matmul %0, %1, %cst {dimension_numbers = #tpu.dot_dimension_numbers<[1], [0], [0], [1], [0, 0, 1, 1], [], []>} : vector<2x1024xbf16>, vector<1024x32xbf16>, vector<2x32xf32> -> vector<2x32xf32>
    %c0_3 = arith.constant 0 : index
    %c0_4 = arith.constant 0 : index
    %3 = vector.load %arg3[%c0_3, %c0_4] : memref<1x32xf32, #tpu.memory_space<vmem>>, vector<1x32xf32>
    %4 = vector.broadcast %3 : vector<1x32xf32> to vector<2x32xf32>
    %5 = arith.addf %2, %4 : vector<2x32xf32>
    %cst_5 = arith.constant 0.000000e+00 : f32
    %6 = vector.broadcast %cst_5 : f32 to vector<2x32xf32>
    %7 = arith.maximumf %5, %6 : vector<2x32xf32>
    %8 = arith.truncf %7 : vector<2x32xf32> to vector<2x32xbf16>
    %c0_6 = arith.constant 0 : index
    %c0_7 = arith.constant 0 : index
    %9 = vector.load %arg4[%c0_6, %c0_7] : memref<32x5xbf16, #tpu.memory_space<vmem>>, vector<32x5xbf16>
    %cst_8 = arith.constant dense<0.000000e+00> : vector<2x5xf32>
    %10 = tpu.matmul %8, %9, %cst_8 {dimension_numbers = #tpu.dot_dimension_numbers<[1], [0], [0], [1], [0, 0, 1, 1], [], []>} : vector<2x32xbf16>, vector<32x5xbf16>, vector<2x5xf32> -> vector<2x5xf32>
    %c0_9 = arith.constant 0 : index
    %c0_10 = arith.constant 0 : index
    %11 = vector.load %arg5[%c0_9, %c0_10] : memref<1x5xf32, #tpu.memory_space<vmem>>, vector<1x5xf32>
    %12 = vector.broadcast %11 : vector<1x5xf32> to vector<2x5xf32>
    %13 = arith.addf %10, %12 : vector<2x5xf32>
    %c0_11 = arith.constant 0 : index
    %c0_12 = arith.constant 0 : index
    %14 = vector.load %arg6[%c0_11, %c0_12] : memref<2x5xf32, #tpu.memory_space<vmem>>, vector<2x5xf32>
    tpu.vector_store %arg6[%c0_11, %c0_12], %13 {strides = array<i32>} : memref<2x5xf32, #tpu.memory_space<vmem>>, vector<2x5xf32>,
    return
  }
  func.func @transform_0(%arg0: i32) -> (i32, i32) {
    %c0_i32 = arith.constant 0 : i32
    %c0_i32_0 = arith.constant 0 : i32
    %c0_i32_1 = arith.constant 0 : i32
    return %c0_i32, %c0_i32_0 : i32, i32
  }
  func.func @transform_1(%arg0: i32) -> (i32, i32) {
    %c0_i32 = arith.constant 0 : i32
    %c0_i32_0 = arith.constant 0 : i32
    %c0_i32_1 = arith.constant 0 : i32
    return %c0_i32, %c0_i32_0 : i32, i32
  }
  func.func @transform_2(%arg0: i32) -> (i32, i32) {
    %c0_i32 = arith.constant 0 : i32
    %c0_i32_0 = arith.constant 0 : i32
    %c0_i32_1 = arith.constant 0 : i32
    return %c0_i32, %c0_i32_0 : i32, i32
  }
  func.func @transform_3(%arg0: i32) -> (i32, i32) {
    %c0_i32 = arith.constant 0 : i32
    %c0_i32_0 = arith.constant 0 : i32
    %c0_i32_1 = arith.constant 0 : i32
    return %c0_i32, %c0_i32_0 : i32, i32
  }
  func.func @transform_4(%arg0: i32) -> (i32, i32) {
    %c0_i32 = arith.constant 0 : i32
    %c0_i32_0 = arith.constant 0 : i32
    %c0_i32_1 = arith.constant 0 : i32
    return %c0_i32, %c0_i32_0 : i32, i32
  }
  func.func @transform_5(%arg0: i32) -> (i32, i32) {
    %c0_i32 = arith.constant 0 : i32
    %c0_i32_0 = arith.constant 0 : i32
    %c0_i32_1 = arith.constant 0 : i32
    return %c0_i32, %c0_i32_0 : i32, i32
  }
}

</mosaic_0001>

<llo_original>
// kernel: mark_forward.5
$region0: #{mark_forward.5}
  #allocation0 [shape = 'u32[]', space=smem, size = 0x4, offset = 0x4, fixed_abs, tag = 'smem constant byte address 0x4 - core index']
  #allocation1 [shape = 'u32[72,128]{1,0:T(1,128)}', space=vmem, size = 0x9000, scoped, tag = 'internal scratch']
  #allocation2 [shape = 'f32[32,1792]{1,0:T(8,128)}', space=vmem, size = 0x38000, scoped, tag = 'scratch operand']
  %s0 = inlined_call_operand.vmem [shape: bf16[48,1792], index: 0, kind: input, shape index: {}]
  %s1 = inlined_call_operand.vmem [shape: bf16[32,48], index: 1, kind: input, shape index: {}]
  %s2 = inlined_call_operand.vmem [shape: f32[32,1], index: 2, kind: input, shape index: {}]
  %s3 = inlined_call_operand.vmem [shape: f32[32,1], index: 3, kind: input, shape index: {}]
  %s4 = inlined_call_operand.vmem [shape: f32[32,1], index: 4, kind: input, shape index: {}]
  %s5 = inlined_call_operand.vmem [shape: bf16[32,2048], index: 5, kind: input, shape index: {}]
  %s6 = inlined_call_operand.vmem [shape: bf16[8,32], index: 6, kind: input, shape index: {}]
  %s7 = inlined_call_operand.vmem [shape: f32[8,1], index: 7, kind: input, shape index: {}]
  %s8 = inlined_call_operand.vmem [shape: f32[32,1792], index: 8, kind: output, shape index: {0}]
  %s9 = inlined_call_operand.vmem [shape: f32[8,2048], index: 9, kind: output, shape index: {1}]
  %10 = xla_tuple %s8, %s9
  %s11 = sld [smem:[#allocation0]]
  $region50: #{mark_forward.5} parent=0
    _
  %s13 = ssub.s32 1, %s11
  %s14 = scalar_select 0, %s13, %s11
  // Predicated region
  $region2: #{mark_forward.5} parent=0 // pred_check
    _
  $region3: #{mark_forward.5} parent=0 // pred_check_branch
    %16 = sbr.rel (0) target = $region5
  $region4: #{mark_forward.5} parent=0 // pred_region
    _
  $region5: #{mark_forward.5} parent=0 // pred_fallthru
    _
  // Predicated region
  $region6: #{mark_forward.5} parent=0 // pred_check
    _
  $region7: #{mark_forward.5} parent=0 // pred_check_branch
    %18 = sbr.rel (0) target = $region9
  $region8: #{mark_forward.5} parent=0 // pred_region
    _
  $region9: #{mark_forward.5} parent=0 // pred_fallthru
    _
  // Predicated region
  $region10: #{mark_forward.5} parent=0 // pred_check
    _
  $region11: #{mark_forward.5} parent=0 // pred_check_branch
    %20 = sbr.rel (0) target = $region13
  $region12: #{mark_forward.5} parent=0 // pred_region
    _
  $region13: #{mark_forward.5} parent=0 // pred_fallthru
    _
  // Predicated region
  $region14: #{mark_forward.5} parent=0 // pred_check
    _
  $region15: #{mark_forward.5} parent=0 // pred_check_branch
    %22 = sbr.rel (0) target = $region17
  $region16: #{mark_forward.5} parent=0 // pred_region
    _
  $region17: #{mark_forward.5} parent=0 // pred_fallthru
    _
  // Predicated region
  $region18: #{mark_forward.5} parent=0 // pred_check
    _
  $region19: #{mark_forward.5} parent=0 // pred_check_branch
    %24 = sbr.rel (0) target = $region21
  $region20: #{mark_forward.5} parent=0 // pred_region
    _
  $region21: #{mark_forward.5} parent=0 // pred_fallthru
    _
  // Predicated region
  $region22: #{mark_forward.5} parent=0 // pred_check
    _
  $region23: #{mark_forward.5} parent=0 // pred_check_branch
    %26 = sbr.rel (0) target = $region25
  $region24: #{mark_forward.5} parent=0 // pred_region
    _
  $region25: #{mark_forward.5} parent=0 // pred_fallthru
    _
  // Predicated region
  $region26: #{mark_forward.5} parent=0 // pred_check
    _
  $region27: #{mark_forward.5} parent=0 // pred_check_branch
    %28 = sbr.rel (0) target = $region29
  $region28: #{mark_forward.5} parent=0 // pred_region
    _
  $region29: #{mark_forward.5} parent=0 // pred_fallthru
    _
  // Predicated region
  $region30: #{mark_forward.5} parent=0 // pred_check
    _
  $region31: #{mark_forward.5} parent=0 // pred_check_branch
    %30 = sbr.rel (0) target = $region33
  $region32: #{mark_forward.5} parent=0 // pred_region
    _
  $region33: #{mark_forward.5} parent=0 // pred_fallthru
    _
  %v32 = vld [vmem:[%s6] sm:$0xf]
  %v33 = vld [vmem:[%s5] sm:$0xff]
  %v34 = vld [vmem:[%s5 + $0x8] sm:$0xff]
  %v35 = vld [vmem:[%s5 + $0x10] sm:$0xff]
  %v36 = vld [vmem:[%s5 + $0x18] sm:$0xff]
  %v37 = vld [vmem:[%s5 + $0x20] sm:$0xff]
  %v38 = vld [vmem:[%s5 + $0x28] sm:$0xff]
  %v39 = vld [vmem:[%s5 + $0x30] sm:$0xff]
  %v40 = vld [vmem:[%s5 + $0x38] sm:$0xff]
  %v41 = vld [vmem:[%s5 + $0x40] sm:$0xff]
  %v42 = vld [vmem:[%s5 + $0x48] sm:$0xff]
  %v43 = vld [vmem:[%s5 + $0x50] sm:$0xff]
  %v44 = vld [vmem:[%s5 + $0x58] sm:$0xff]
  %v45 = vld [vmem:[%s5 + $0x60] sm:$0xff]
  %v46 = vld [vmem:[%s5 + $0x68] sm:$0xff]
  %v47 = vld [vmem:[%s5 + $0x70] sm:$0xff]
  %v48 = vld [vmem:[%s5 + $0x78] sm:$0xff]
  %v49 = vld [vmem:[%s5 + $0x80] sm:$0xff]
  %v50 = vld [vmem:[%s5 + $0x88] sm:$0xff]
  %v51 = vld [vmem:[%s5 + $0x90] sm:$0xff]
  %v52 = vld [vmem:[%s5 + $0x98] sm:$0xff]
  %v53 = vld [vmem:[%s5 + $0xa0] sm:$0xff]
  %v54 = vld [vmem:[%s5 + $0xa8] sm:$0xff]
  %v55 = vld [vmem:[%s5 + $0xb0] sm:$0xff]
  %v56 = vld [vmem:[%s5 + $0xb8] sm:$0xff]
  %v57 = vld [vmem:[%s5 + $0xc0] sm:$0xff]
  %v58 = vld [vmem:[%s5 + $0xc8] sm:$0xff]
  %v59 = vld [vmem:[%s5 + $0xd0] sm:$0xff]
  %v60 = vld [vmem:[%s5 + $0xd8] sm:$0xff]
  %v61 = vld [vmem:[%s5 + $0xe0] sm:$0xff]
  %v62 = vld [vmem:[%s5 + $0xe8] sm:$0xff]
  %v63 = vld [vmem:[%s5 + $0xf0] sm:$0xff]
  %v64 = vld [vmem:[%s5 + $0xf8] sm:$0xff]
  %v65 = vld [vmem:[%s7] sm:$0xff]
  %67 = vset.pattern.permute.xlu0 0
  %68 = vperm.xlu0 %67, %v65
  %v69 = vpop.permute.xlu0 %68
  %v103 = vunpack.c.l.b16 %v33
  %v104 = vunpack.c.h.b16 %v33
  %v105 = vunpack.c.l.b16 %v34
  %v106 = vunpack.c.h.b16 %v34
  %v107 = vunpack.c.l.b16 %v35
  %v108 = vunpack.c.h.b16 %v35
  %v109 = vunpack.c.l.b16 %v36
  %v110 = vunpack.c.h.b16 %v36
  %v111 = vunpack.c.l.b16 %v37
  %v112 = vunpack.c.h.b16 %v37
  %v113 = vunpack.c.l.b16 %v38
  %v114 = vunpack.c.h.b16 %v38
  %v115 = vunpack.c.l.b16 %v39
  %v116 = vunpack.c.h.b16 %v39
  %v117 = vunpack.c.l.b16 %v40
  %v118 = vunpack.c.h.b16 %v40
  %v119 = vunpack.c.l.b16 %v41
  %v120 = vunpack.c.h.b16 %v41
  %v121 = vunpack.c.l.b16 %v42
  %v122 = vunpack.c.h.b16 %v42
  %v123 = vunpack.c.l.b16 %v43
  %v124 = vunpack.c.h.b16 %v43
  %v125 = vunpack.c.l.b16 %v44
  %v126 = vunpack.c.h.b16 %v44
  %v127 = vunpack.c.l.b16 %v45
  %v128 = vunpack.c.h.b16 %v45
  %v129 = vunpack.c.l.b16 %v46
  %v130 = vunpack.c.h.b16 %v46
  %v131 = vunpack.c.l.b16 %v47
  %v132 = vunpack.c.h.b16 %v47
  %v133 = vunpack.c.l.b16 %v48
  %v134 = vunpack.c.h.b16 %v48
  %v135 = vunpack.c.l.b16 %v49
  %v136 = vunpack.c.h.b16 %v49
  %v137 = vunpack.c.l.b16 %v50
  %v138 = vunpack.c.h.b16 %v50
  %v139 = vunpack.c.l.b16 %v51
  %v140 = vunpack.c.h.b16 %v51
  %v141 = vunpack.c.l.b16 %v52
  %v142 = vunpack.c.h.b16 %v52
  %v143 = vunpack.c.l.b16 %v53
  %v144 = vunpack.c.h.b16 %v53
  %v145 = vunpack.c.l.b16 %v54
  %v146 = vunpack.c.h.b16 %v54
  %v147 = vunpack.c.l.b16 %v55
  %v148 = vunpack.c.h.b16 %v55
  %v149 = vunpack.c.l.b16 %v56
  %v150 = vunpack.c.h.b16 %v56
  %v151 = vunpack.c.l.b16 %v57
  %v152 = vunpack.c.h.b16 %v57
  %v153 = vunpack.c.l.b16 %v58
  %v154 = vunpack.c.h.b16 %v58
  %v155 = vunpack.c.l.b16 %v59
  %v156 = vunpack.c.h.b16 %v59
  %v157 = vunpack.c.l.b16 %v60
  %v158 = vunpack.c.h.b16 %v60
  %v159 = vunpack.c.l.b16 %v61
  %v160 = vunpack.c.h.b16 %v61
  %v161 = vunpack.c.l.b16 %v62
  %v162 = vunpack.c.h.b16 %v62
  %v163 = vunpack.c.l.b16 %v63
  %v164 = vunpack.c.h.b16 %v63
  %v165 = vunpack.c.l.b16 %v64
  %v166 = vunpack.c.h.b16 %v64
  %v167 = vpack.c.b16 %v119, %v103
  %v168 = vpack.c.b16 %v120, %v104
  %v169 = vpack.c.b16 %v121, %v105
  %v170 = vpack.c.b16 %v122, %v106
  %v171 = vpack.c.b16 %v123, %v107
  %v172 = vpack.c.b16 %v124, %v108
  %v173 = vpack.c.b16 %v125, %v109
  %v174 = vpack.c.b16 %v126, %v110
  %v175 = vpack.c.b16 %v127, %v111
  %v176 = vpack.c.b16 %v128, %v112
  %v177 = vpack.c.b16 %v129, %v113
  %v178 = vpack.c.b16 %v130, %v114
  %v179 = vpack.c.b16 %v131, %v115
  %v180 = vpack.c.b16 %v132, %v116
  %v181 = vpack.c.b16 %v133, %v117
  %v182 = vpack.c.b16 %v134, %v118
  %v183 = vpack.c.b16 %v151, %v135
  %v184 = vpack.c.b16 %v152, %v136
  %v185 = vpack.c.b16 %v153, %v137
  %v186 = vpack.c.b16 %v154, %v138
  %v187 = vpack.c.b16 %v155, %v139
  %v188 = vpack.c.b16 %v156, %v140
  %v189 = vpack.c.b16 %v157, %v141
  %v190 = vpack.c.b16 %v158, %v142
  %v191 = vpack.c.b16 %v159, %v143
  %v192 = vpack.c.b16 %v160, %v144
  %v193 = vpack.c.b16 %v161, %v145
  %v194 = vpack.c.b16 %v162, %v146
  %v195 = vpack.c.b16 %v163, %v147
  %v196 = vpack.c.b16 %v164, %v148
  %v197 = vpack.c.b16 %v165, %v149
  %v198 = vpack.c.b16 %v166, %v150
  %vm231 = vcmask 261120
  %v233 = vsel %vm231, %v32, 0
  %235 = vmatpush.bf16.msra.mxu0 0
  %236 = vmatpush.bf16.msra.mxu0 0
  %237 = vmatpush.bf16.msra.mxu0 0
  %238 = vmatpush.bf16.msra.mxu0 0
  %239 = vmatpush.bf16.msra.mxu0 0
  %240 = vmatpush.bf16.msra.mxu0 0
  %241 = vmatpush.bf16.msra.mxu0 %v183
  %242 = vmatpush.bf16.msra.mxu0 %v167
  %243 = vmatmul.bf16.gmra.mxu0 %v233
  %v244 = vpop.f32.mrf.mxu0
  %v245 = vadd.f32 %v69, %v244
  %v246 = vpop.f32.mrf.mxu0
  %247 = vdwg.mxu0
  %248 = vmatpush.bf16.msra.mxu0 0
  %249 = vmatpush.bf16.msra.mxu0 0
  %250 = vmatpush.bf16.msra.mxu0 0
  %251 = vmatpush.bf16.msra.mxu0 0
  %252 = vmatpush.bf16.msra.mxu0 0
  %253 = vmatpush.bf16.msra.mxu0 0
  %254 = vmatpush.bf16.msra.mxu0 %v184
  %255 = vmatpush.bf16.msra.mxu0 %v168
  %256 = vmatmul.bf16.gmra.mxu0 %v233
  %v257 = vpop.f32.mrf.mxu0
  %v258 = vadd.f32 %v69, %v257
  %v259 = vpop.f32.mrf.mxu0
  %260 = vdwg.mxu0
  %261 = vmatpush.bf16.msra.mxu0 0
  %262 = vmatpush.bf16.msra.mxu0 0
  %263 = vmatpush.bf16.msra.mxu0 0
  %264 = vmatpush.bf16.msra.mxu0 0
  %265 = vmatpush.bf16.msra.mxu0 0
  %266 = vmatpush.bf16.msra.mxu0 0
  %267 = vmatpush.bf16.msra.mxu0 %v185
  %268 = vmatpush.bf16.msra.mxu0 %v169
  %269 = vmatmul.bf16.gmra.mxu0 %v233
  %v270 = vpop.f32.mrf.mxu0
  %v271 = vadd.f32 %v69, %v270
  %v272 = vpop.f32.mrf.mxu0
  %273 = vdwg.mxu0
  %274 = vmatpush.bf16.msra.mxu0 0
  %275 = vmatpush.bf16.msra.mxu0 0
  %276 = vmatpush.bf16.msra.mxu0 0
  %277 = vmatpush.bf16.msra.mxu0 0
  %278 = vmatpush.bf16.msra.mxu0 0
  %279 = vmatpush.bf16.msra.mxu0 0
  %280 = vmatpush.bf16.msra.mxu0 %v186
  %281 = vmatpush.bf16.msra.mxu0 %v170
  %282 = vmatmul.bf16.gmra.mxu0 %v233
  %v283 = vpop.f32.mrf.mxu0
  %v284 = vadd.f32 %v69, %v283
  %v285 = vpop.f32.mrf.mxu0
  %286 = vdwg.mxu0
  %287 = vmatpush.bf16.msra.mxu0 0
  %288 = vmatpush.bf16.msra.mxu0 0
  %289 = vmatpush.bf16.msra.mxu0 0
  %290 = vmatpush.bf16.msra.mxu0 0
  %291 = vmatpush.bf16.msra.mxu0 0
  %292 = vmatpush.bf16.msra.mxu0 0
  %293 = vmatpush.bf16.msra.mxu0 %v187
  %294 = vmatpush.bf16.msra.mxu0 %v171
  %295 = vmatmul.bf16.gmra.mxu0 %v233
  %v296 = vpop.f32.mrf.mxu0
  %v297 = vadd.f32 %v69, %v296
  %v298 = vpop.f32.mrf.mxu0
  %299 = vdwg.mxu0
  %300 = vmatpush.bf16.msra.mxu0 0
  %301 = vmatpush.bf16.msra.mxu0 0
  %302 = vmatpush.bf16.msra.mxu0 0
  %303 = vmatpush.bf16.msra.mxu0 0
  %304 = vmatpush.bf16.msra.mxu0 0
  %305 = vmatpush.bf16.msra.mxu0 0
  %306 = vmatpush.bf16.msra.mxu0 %v188
  %307 = vmatpush.bf16.msra.mxu0 %v172
  %308 = vmatmul.bf16.gmra.mxu0 %v233
  %v309 = vpop.f32.mrf.mxu0
  %v310 = vadd.f32 %v69, %v309
  %v311 = vpop.f32.mrf.mxu0
  %312 = vdwg.mxu0
  %313 = vmatpush.bf16.msra.mxu0 0
  %314 = vmatpush.bf16.msra.mxu0 0
  %315 = vmatpush.bf16.msra.mxu0 0
  %316 = vmatpush.bf16.msra.mxu0 0
  %317 = vmatpush.bf16.msra.mxu0 0
  %318 = vmatpush.bf16.msra.mxu0 0
  %319 = vmatpush.bf16.msra.mxu0 %v189
  %320 = vmatpush.bf16.msra.mxu0 %v173
  %321 = vmatmul.bf16.gmra.mxu0 %v233
  %v322 = vpop.f32.mrf.mxu0
  %v323 = vadd.f32 %v69, %v322
  %v324 = vpop.f32.mrf.mxu0
  %325 = vdwg.mxu0
  %326 = vmatpush.bf16.msra.mxu0 0
  %327 = vmatpush.bf16.msra.mxu0 0
  %328 = vmatpush.bf16.msra.mxu0 0
  %329 = vmatpush.bf16.msra.mxu0 0
  %330 = vmatpush.bf16.msra.mxu0 0
  %331 = vmatpush.bf16.msra.mxu0 0
  %332 = vmatpush.bf16.msra.mxu0 %v190
  %333 = vmatpush.bf16.msra.mxu0 %v174
  %334 = vmatmul.bf16.gmra.mxu0 %v233
  %v335 = vpop.f32.mrf.mxu0
  %v336 = vadd.f32 %v69, %v335
  %v337 = vpop.f32.mrf.mxu0
  %338 = vdwg.mxu0
  %339 = vmatpush.bf16.msra.mxu0 0
  %340 = vmatpush.bf16.msra.mxu0 0
  %341 = vmatpush.bf16.msra.mxu0 0
  %342 = vmatpush.bf16.msra.mxu0 0
  %343 = vmatpush.bf16.msra.mxu0 0
  %344 = vmatpush.bf16.msra.mxu0 0
  %345 = vmatpush.bf16.msra.mxu0 %v191
  %346 = vmatpush.bf16.msra.mxu0 %v175
  %347 = vmatmul.bf16.gmra.mxu0 %v233
  %v348 = vpop.f32.mrf.mxu0
  %v349 = vadd.f32 %v69, %v348
  %v350 = vpop.f32.mrf.mxu0
  %351 = vdwg.mxu0
  %352 = vmatpush.bf16.msra.mxu0 0
  %353 = vmatpush.bf16.msra.mxu0 0
  %354 = vmatpush.bf16.msra.mxu0 0
  %355 = vmatpush.bf16.msra.mxu0 0
  %356 = vmatpush.bf16.msra.mxu0 0
  %357 = vmatpush.bf16.msra.mxu0 0
  %358 = vmatpush.bf16.msra.mxu0 %v192
  %359 = vmatpush.bf16.msra.mxu0 %v176
  %360 = vmatmul.bf16.gmra.mxu0 %v233
  %v361 = vpop.f32.mrf.mxu0
  %v362 = vadd.f32 %v69, %v361
  %v363 = vpop.f32.mrf.mxu0
  %364 = vdwg.mxu0
  %365 = vmatpush.bf16.msra.mxu0 0
  %366 = vmatpush.bf16.msra.mxu0 0
  %367 = vmatpush.bf16.msra.mxu0 0
  %368 = vmatpush.bf16.msra.mxu0 0
  %369 = vmatpush.bf16.msra.mxu0 0
  %370 = vmatpush.bf16.msra.mxu0 0
  %371 = vmatpush.bf16.msra.mxu0 %v193
  %372 = vmatpush.bf16.msra.mxu0 %v177
  %373 = vmatmul.bf16.gmra.mxu0 %v233
  %v374 = vpop.f32.mrf.mxu0
  %v375 = vadd.f32 %v69, %v374
  %v376 = vpop.f32.mrf.mxu0
  %377 = vdwg.mxu0
  %378 = vmatpush.bf16.msra.mxu0 0
  %379 = vmatpush.bf16.msra.mxu0 0
  %380 = vmatpush.bf16.msra.mxu0 0
  %381 = vmatpush.bf16.msra.mxu0 0
  %382 = vmatpush.bf16.msra.mxu0 0
  %383 = vmatpush.bf16.msra.mxu0 0
  %384 = vmatpush.bf16.msra.mxu0 %v194
  %385 = vmatpush.bf16.msra.mxu0 %v178
  %386 = vmatmul.bf16.gmra.mxu0 %v233
  %v387 = vpop.f32.mrf.mxu0
  %v388 = vadd.f32 %v69, %v387
  %v389 = vpop.f32.mrf.mxu0
  %390 = vdwg.mxu0
  %391 = vmatpush.bf16.msra.mxu0 0
  %392 = vmatpush.bf16.msra.mxu0 0
  %393 = vmatpush.bf16.msra.mxu0 0
  %394 = vmatpush.bf16.msra.mxu0 0
  %395 = vmatpush.bf16.msra.mxu0 0
  %396 = vmatpush.bf16.msra.mxu0 0
  %397 = vmatpush.bf16.msra.mxu0 %v195
  %398 = vmatpush.bf16.msra.mxu0 %v179
  %399 = vmatmul.bf16.gmra.mxu0 %v233
  %v400 = vpop.f32.mrf.mxu0
  %v401 = vadd.f32 %v69, %v400
  %v402 = vpop.f32.mrf.mxu0
  %403 = vdwg.mxu0
  %404 = vmatpush.bf16.msra.mxu0 0
  %405 = vmatpush.bf16.msra.mxu0 0
  %406 = vmatpush.bf16.msra.mxu0 0
  %407 = vmatpush.bf16.msra.mxu0 0
  %408 = vmatpush.bf16.msra.mxu0 0
  %409 = vmatpush.bf16.msra.mxu0 0
  %410 = vmatpush.bf16.msra.mxu0 %v196
  %411 = vmatpush.bf16.msra.mxu0 %v180
  %412 = vmatmul.bf16.gmra.mxu0 %v233
  %v413 = vpop.f32.mrf.mxu0
  %v414 = vadd.f32 %v69, %v413
  %v415 = vpop.f32.mrf.mxu0
  %416 = vdwg.mxu0
  %417 = vmatpush.bf16.msra.mxu0 0
  %418 = vmatpush.bf16.msra.mxu0 0
  %419 = vmatpush.bf16.msra.mxu0 0
  %420 = vmatpush.bf16.msra.mxu0 0
  %421 = vmatpush.bf16.msra.mxu0 0
  %422 = vmatpush.bf16.msra.mxu0 0
  %423 = vmatpush.bf16.msra.mxu0 %v197
  %424 = vmatpush.bf16.msra.mxu0 %v181
  %425 = vmatmul.bf16.gmra.mxu0 %v233
  %v426 = vpop.f32.mrf.mxu0
  %v427 = vadd.f32 %v69, %v426
  %v428 = vpop.f32.mrf.mxu0
  %429 = vdwg.mxu0
  %430 = vmatpush.bf16.msra.mxu0 0
  %431 = vmatpush.bf16.msra.mxu0 0
  %432 = vmatpush.bf16.msra.mxu0 0
  %433 = vmatpush.bf16.msra.mxu0 0
  %434 = vmatpush.bf16.msra.mxu0 0
  %435 = vmatpush.bf16.msra.mxu0 0
  %436 = vmatpush.bf16.msra.mxu0 %v198
  %437 = vmatpush.bf16.msra.mxu0 %v182
  %438 = vmatmul.bf16.gmra.mxu0 %v233
  %v439 = vpop.f32.mrf.mxu0
  %v440 = vadd.f32 %v69, %v439
  %v441 = vpop.f32.mrf.mxu0
  %442 = vdwg.mxu0
  %v443 = vmax.f32 %v245, 0.0
  %v444 = vmax.f32 %v258, 0.0
  %v445 = vmax.f32 %v271, 0.0
  %v446 = vmax.f32 %v284, 0.0
  %v447 = vmax.f32 %v297, 0.0
  %v448 = vmax.f32 %v310, 0.0
  %v449 = vmax.f32 %v323, 0.0
  %v450 = vmax.f32 %v336, 0.0
  %v451 = vmax.f32 %v349, 0.0
  %v452 = vmax.f32 %v362, 0.0
  %v453 = vmax.f32 %v375, 0.0
  %v454 = vmax.f32 %v388, 0.0
  %v455 = vmax.f32 %v401, 0.0
  %v456 = vmax.f32 %v414, 0.0
  %v457 = vmax.f32 %v427, 0.0
  %v458 = vmax.f32 %v440, 0.0
  %459 = vst [vmem:[%s9] sm:$0xff] %v443
  %460 = vst [vmem:[%s9 + $0x8] sm:$0xff] %v444
  %461 = vst [vmem:[%s9 + $0x10] sm:$0xff] %v445
  %462 = vst [vmem:[%s9 + $0x18] sm:$0xff] %v446
  %463 = vst [vmem:[%s9 + $0x20] sm:$0xff] %v447
  %464 = vst [vmem:[%s9 + $0x28] sm:$0xff] %v448
  %465 = vst [vmem:[%s9 + $0x30] sm:$0xff] %v449
  %466 = vst [vmem:[%s9 + $0x38] sm:$0xff] %v450
  %467 = vst [vmem:[%s9 + $0x40] sm:$0xff] %v451
  %468 = vst [vmem:[%s9 + $0x48] sm:$0xff] %v452
  %469 = vst [vmem:[%s9 + $0x50] sm:$0xff] %v453
  %470 = vst [vmem:[%s9 + $0x58] sm:$0xff] %v454
  %471 = vst [vmem:[%s9 + $0x60] sm:$0xff] %v455
  %472 = vst [vmem:[%s9 + $0x68] sm:$0xff] %v456
  %473 = vst [vmem:[%s9 + $0x70] sm:$0xff] %v457
  %474 = vst [vmem:[%s9 + $0x78] sm:$0xff] %v458
  %v475 = vld [vmem:[%s1] sm:$0xf]
  %v476 = vld [vmem:[%s1 + $0x4] sm:$0xf]
  %v477 = vld [vmem:[%s1 + $0x8] sm:$0xf]
  %v478 = vld [vmem:[%s1 + $0xc] sm:$0xf]
  %v479 = vld [vmem:[%s0] sm:$0xff]
  %v480 = vld [vmem:[%s0 + $0x8] sm:$0xff]
  %v481 = vld [vmem:[%s0 + $0x10] sm:$0xff]
  %v482 = vld [vmem:[%s0 + $0x18] sm:$0xff]
  %v483 = vld [vmem:[%s0 + $0x20] sm:$0xff]
  %v484 = vld [vmem:[%s0 + $0x28] sm:$0xff]
  %v485 = vld [vmem:[%s0 + $0x30] sm:$0xff]
  %v486 = vld [vmem:[%s0 + $0x38] sm:$0xff]
  %v487 = vld [vmem:[%s0 + $0x40] sm:$0xff]
  %v488 = vld [vmem:[%s0 + $0x48] sm:$0xff]
  %v489 = vld [vmem:[%s0 + $0x50] sm:$0xff]
  %v490 = vld [vmem:[%s0 + $0x58] sm:$0xff]
  %v491 = vld [vmem:[%s0 + $0x60] sm:$0xff]
  %v492 = vld [vmem:[%s0 + $0x68] sm:$0xff]
  %v493 = vld [vmem:[%s0 + $0x70] sm:$0xff]
  %v494 = vld [vmem:[%s0 + $0x78] sm:$0xff]
  %v495 = vld [vmem:[%s0 + $0x80] sm:$0xff]
  %v496 = vld [vmem:[%s0 + $0x88] sm:$0xff]
  %v497 = vld [vmem:[%s0 + $0x90] sm:$0xff]
  %v498 = vld [vmem:[%s0 + $0x98] sm:$0xff]
  %v499 = vld [vmem:[%s0 + $0xa0] sm:$0xff]
  %v500 = vld [vmem:[%s0 + $0xa8] sm:$0xff]
  %v501 = vld [vmem:[%s0 + $0xb0] sm:$0xff]
  %v502 = vld [vmem:[%s0 + $0xb8] sm:$0xff]
  %v503 = vld [vmem:[%s0 + $0xc0] sm:$0xff]
  %v504 = vld [vmem:[%s0 + $0xc8] sm:$0xff]
  %v505 = vld [vmem:[%s0 + $0xd0] sm:$0xff]
  %v506 = vld [vmem:[%s0 + $0xd8] sm:$0xff]
  %v507 = vld [vmem:[%s0 + $0xe0] sm:$0xff]
  %v508 = vld [vmem:[%s0 + $0xe8] sm:$0xff]
  %v509 = vld [vmem:[%s0 + $0xf0] sm:$0xff]
  %v510 = vld [vmem:[%s0 + $0xf8] sm:$0xff]
  %v511 = vld [vmem:[%s0 + $0x100] sm:$0xff]
  %v512 = vld [vmem:[%s0 + $0x108] sm:$0xff]
  %v513 = vld [vmem:[%s0 + $0x110] sm:$0xff]
  %v514 = vld [vmem:[%s0 + $0x118] sm:$0xff]
  %v515 = vld [vmem:[%s0 + $0x120] sm:$0xff]
  %v516 = vld [vmem:[%s0 + $0x128] sm:$0xff]
  %v517 = vld [vmem:[%s0 + $0x130] sm:$0xff]
  %v518 = vld [vmem:[%s0 + $0x138] sm:$0xff]
  %v519 = vld [vmem:[%s0 + $0x140] sm:$0xff]
  %v520 = vld [vmem:[%s0 + $0x148] sm:$0xff]
  %v521 = vld [vmem:[%s2] sm:$0xff]
  %v522 = vld [vmem:[%s2 + $0x8] sm:$0xff]
  %v523 = vld [vmem:[%s2 + $0x10] sm:$0xff]
  %v524 = vld [vmem:[%s2 + $0x18] sm:$0xff]
  %526 = vset.pattern.permute.xlu0 0
  %527 = vperm.xlu0 %526, %v521
  %v528 = vpop.permute.xlu0 %527
  %531 = vset.pattern.permute.xlu0 0
  %532 = vperm.xlu0 %531, %v522
  %v533 = vpop.permute.xlu0 %532
  %536 = vset.pattern.permute.xlu0 0
  %537 = vperm.xlu0 %536, %v523
  %v538 = vpop.permute.xlu0 %537
  %541 = vset.pattern.permute.xlu0 0
  %542 = vperm.xlu0 %541, %v524
  %v543 = vpop.permute.xlu0 %542
  %v549 = vunpack.c.l.b16 %v475
  %v550 = vunpack.c.l.b16 %v476
  %v551 = vunpack.c.l.b16 %v477
  %v552 = vunpack.c.l.b16 %v478
  %v553 = vpack.c.b16 %v550, %v549
  %v554 = vpack.c.b16 %v552, %v551
  %v597 = vunpack.c.l.b16 %v479
  %v598 = vunpack.c.h.b16 %v479
  %v599 = vunpack.c.l.b16 %v480
  %v600 = vunpack.c.h.b16 %v480
  %v601 = vunpack.c.l.b16 %v481
  %v602 = vunpack.c.h.b16 %v481
  %v603 = vunpack.c.l.b16 %v482
  %v604 = vunpack.c.h.b16 %v482
  %v605 = vunpack.c.l.b16 %v483
  %v606 = vunpack.c.h.b16 %v483
  %v607 = vunpack.c.l.b16 %v484
  %v608 = vunpack.c.h.b16 %v484
  %v609 = vunpack.c.l.b16 %v485
  %v610 = vunpack.c.h.b16 %v485
  %v611 = vunpack.c.l.b16 %v486
  %v612 = vunpack.c.h.b16 %v486
  %v613 = vunpack.c.l.b16 %v487
  %v614 = vunpack.c.h.b16 %v487
  %v615 = vunpack.c.l.b16 %v488
  %v616 = vunpack.c.h.b16 %v488
  %v617 = vunpack.c.l.b16 %v489
  %v618 = vunpack.c.h.b16 %v489
  %v619 = vunpack.c.l.b16 %v490
  %v620 = vunpack.c.h.b16 %v490
  %v621 = vunpack.c.l.b16 %v491
  %v622 = vunpack.c.h.b16 %v491
  %v623 = vunpack.c.l.b16 %v492
  %v624 = vunpack.c.h.b16 %v492
  %v625 = vunpack.c.l.b16 %v493
  %v626 = vunpack.c.h.b16 %v493
  %v627 = vunpack.c.l.b16 %v494
  %v628 = vunpack.c.h.b16 %v494
  %v629 = vunpack.c.l.b16 %v495
  %v630 = vunpack.c.h.b16 %v495
  %v631 = vunpack.c.l.b16 %v496
  %v632 = vunpack.c.h.b16 %v496
  %v633 = vunpack.c.l.b16 %v497
  %v634 = vunpack.c.h.b16 %v497
  %v635 = vunpack.c.l.b16 %v498
  %v636 = vunpack.c.h.b16 %v498
  %v637 = vunpack.c.l.b16 %v499
  %v638 = vunpack.c.h.b16 %v499
  %v639 = vunpack.c.l.b16 %v500
  %v640 = vunpack.c.h.b16 %v500
  %v641 = vunpack.c.l.b16 %v501
  %v642 = vunpack.c.h.b16 %v501
  %v643 = vunpack.c.l.b16 %v502
  %v644 = vunpack.c.h.b16 %v502
  %v645 = vunpack.c.l.b16 %v503
  %v646 = vunpack.c.h.b16 %v503
  %v647 = vunpack.c.l.b16 %v504
  %v648 = vunpack.c.h.b16 %v504
  %v649 = vunpack.c.l.b16 %v505
  %v650 = vunpack.c.h.b16 %v505
  %v651 = vunpack.c.l.b16 %v506
  %v652 = vunpack.c.h.b16 %v506
  %v653 = vunpack.c.l.b16 %v507
  %v654 = vunpack.c.h.b16 %v507
  %v655 = vunpack.c.l.b16 %v508
  %v656 = vunpack.c.h.b16 %v508
  %v657 = vunpack.c.l.b16 %v509
  %v658 = vunpack.c.h.b16 %v509
  %v659 = vunpack.c.l.b16 %v510
  %v660 = vunpack.c.h.b16 %v510
  %v661 = vunpack.c.l.b16 %v511
  %v662 = vunpack.c.h.b16 %v511
  %v663 = vunpack.c.l.b16 %v512
  %v664 = vunpack.c.h.b16 %v512
  %v665 = vunpack.c.l.b16 %v513
  %v666 = vunpack.c.h.b16 %v513
  %v667 = vunpack.c.l.b16 %v514
  %v668 = vunpack.c.h.b16 %v514
  %v669 = vunpack.c.l.b16 %v515
  %v670 = vunpack.c.h.b16 %v515
  %v671 = vunpack.c.l.b16 %v516
  %v672 = vunpack.c.h.b16 %v516
  %v673 = vunpack.c.l.b16 %v517
  %v674 = vunpack.c.h.b16 %v517
  %v675 = vunpack.c.l.b16 %v518
  %v676 = vunpack.c.h.b16 %v518
  %v677 = vunpack.c.l.b16 %v519
  %v678 = vunpack.c.h.b16 %v519
  %v679 = vunpack.c.l.b16 %v520
  %v680 = vunpack.c.h.b16 %v520
  %v681 = vpack.c.b16 %v611, %v597
  %v682 = vpack.c.b16 %v612, %v598
  %v683 = vpack.c.b16 %v613, %v599
  %v684 = vpack.c.b16 %v614, %v600
  %v685 = vpack.c.b16 %v615, %v601
  %v686 = vpack.c.b16 %v616, %v602
  %v687 = vpack.c.b16 %v617, %v603
  %v688 = vpack.c.b16 %v618, %v604
  %v689 = vpack.c.b16 %v619, %v605
  %v690 = vpack.c.b16 %v620, %v606
  %v691 = vpack.c.b16 %v621, %v607
  %v692 = vpack.c.b16 %v622, %v608
  %v693 = vpack.c.b16 %v623, %v609
  %v694 = vpack.c.b16 %v624, %v610
  %v695 = vpack.c.b16 %v639, %v625
  %v696 = vpack.c.b16 %v640, %v626
  %v697 = vpack.c.b16 %v641, %v627
  %v698 = vpack.c.b16 %v642, %v628
  %v699 = vpack.c.b16 %v643, %v629
  %v700 = vpack.c.b16 %v644, %v630
  %v701 = vpack.c.b16 %v645, %v631
  %v702 = vpack.c.b16 %v646, %v632
  %v703 = vpack.c.b16 %v647, %v633
  %v704 = vpack.c.b16 %v648, %v634
  %v705 = vpack.c.b16 %v649, %v635
  %v706 = vpack.c.b16 %v650, %v636
  %v707 = vpack.c.b16 %v651, %v637
  %v708 = vpack.c.b16 %v652, %v638
  %v709 = vpack.c.b16 %v667, %v653
  %v710 = vpack.c.b16 %v668, %v654
  %v711 = vpack.c.b16 %v669, %v655
  %v712 = vpack.c.b16 %v670, %v656
  %v713 = vpack.c.b16 %v671, %v657
  %v714 = vpack.c.b16 %v672, %v658
  %v715 = vpack.c.b16 %v673, %v659
  %v716 = vpack.c.b16 %v674, %v660
  %v717 = vpack.c.b16 %v675, %v661
  %v718 = vpack.c.b16 %v676, %v662
  %v719 = vpack.c.b16 %v677, %v663
  %v720 = vpack.c.b16 %v678, %v664
  %v721 = vpack.c.b16 %v679, %v665
  %v722 = vpack.c.b16 %v680, %v666
  %vm765 = vcmask 392192
  %v767 = vsel %vm765, %v553, 0
  %v770 = vsel %vm765, %v554, 0
  %772 = vmatpush.bf16.msra.mxu0 0
  %773 = vmatpush.bf16.msra.mxu0 0
  %774 = vmatpush.bf16.msra.mxu0 0
  %775 = vmatpush.bf16.msra.mxu0 0
  %776 = vmatpush.bf16.msra.mxu0 0
  %777 = vmatpush.bf16.msra.mxu0 %v709
  %778 = vmatpush.bf16.msra.mxu0 %v695
  %779 = vmatpush.bf16.msra.mxu0 %v681
  %780 = vmatmul.bf16.gmra.mxu0 %v767
  %v781 = vpop.f32.mrf.mxu0
  %v782 = vadd.f32 %v528, %v781
  %v783 = vpop.f32.mrf.mxu0
  %v784 = vadd.f32 %v533, %v783
  %785 = vmatmul.bf16.gmra.mxu0 %v770
  %v786 = vpop.f32.mrf.mxu0
  %v787 = vadd.f32 %v538, %v786
  %v788 = vpop.f32.mrf.mxu0
  %v789 = vadd.f32 %v543, %v788
  %790 = vdwg.mxu0
  %791 = vmatpush.bf16.msra.mxu0 0
  %792 = vmatpush.bf16.msra.mxu0 0
  %793 = vmatpush.bf16.msra.mxu0 0
  %794 = vmatpush.bf16.msra.mxu0 0
  %795 = vmatpush.bf16.msra.mxu0 0
  %796 = vmatpush.bf16.msra.mxu0 %v710
  %797 = vmatpush.bf16.msra.mxu0 %v696
  %798 = vmatpush.bf16.msra.mxu0 %v682
  %799 = vmatmul.bf16.gmra.mxu0 %v767
  %v800 = vpop.f32.mrf.mxu0
  %v801 = vadd.f32 %v528, %v800
  %v802 = vpop.f32.mrf.mxu0
  %v803 = vadd.f32 %v533, %v802
  %804 = vmatmul.bf16.gmra.mxu0 %v770
  %v805 = vpop.f32.mrf.mxu0
  %v806 = vadd.f32 %v538, %v805
  %v807 = vpop.f32.mrf.mxu0
  %v808 = vadd.f32 %v543, %v807
  %809 = vdwg.mxu0
  %810 = vmatpush.bf16.msra.mxu0 0
  %811 = vmatpush.bf16.msra.mxu0 0
  %812 = vmatpush.bf16.msra.mxu0 0
  %813 = vmatpush.bf16.msra.mxu0 0
  %814 = vmatpush.bf16.msra.mxu0 0
  %815 = vmatpush.bf16.msra.mxu0 %v711
  %816 = vmatpush.bf16.msra.mxu0 %v697
  %817 = vmatpush.bf16.msra.mxu0 %v683
  %818 = vmatmul.bf16.gmra.mxu0 %v767
  %v819 = vpop.f32.mrf.mxu0
  %v820 = vadd.f32 %v528, %v819
  %v821 = vpop.f32.mrf.mxu0
  %v822 = vadd.f32 %v533, %v821
  %823 = vmatmul.bf16.gmra.mxu0 %v770
  %v824 = vpop.f32.mrf.mxu0
  %v825 = vadd.f32 %v538, %v824
  %v826 = vpop.f32.mrf.mxu0
  %v827 = vadd.f32 %v543, %v826
  %828 = vdwg.mxu0
  %829 = vmatpush.bf16.msra.mxu0 0
  %830 = vmatpush.bf16.msra.mxu0 0
  %831 = vmatpush.bf16.msra.mxu0 0
  %832 = vmatpush.bf16.msra.mxu0 0
  %833 = vmatpush.bf16.msra.mxu0 0
  %834 = vmatpush.bf16.msra.mxu0 %v712
  %835 = vmatpush.bf16.msra.mxu0 %v698
  %836 = vmatpush.bf16.msra.mxu0 %v684
  %837 = vmatmul.bf16.gmra.mxu0 %v767
  %v838 = vpop.f32.mrf.mxu0
  %v839 = vadd.f32 %v528, %v838
  %v840 = vpop.f32.mrf.mxu0
  %v841 = vadd.f32 %v533, %v840
  %842 = vmatmul.bf16.gmra.mxu0 %v770
  %v843 = vpop.f32.mrf.mxu0
  %v844 = vadd.f32 %v538, %v843
  %v845 = vpop.f32.mrf.mxu0
  %v846 = vadd.f32 %v543, %v845
  %847 = vdwg.mxu0
  %848 = vmatpush.bf16.msra.mxu0 0
  %849 = vmatpush.bf16.msra.mxu0 0
  %850 = vmatpush.bf16.msra.mxu0 0
  %851 = vmatpush.bf16.msra.mxu0 0
  %852 = vmatpush.bf16.msra.mxu0 0
  %853 = vmatpush.bf16.msra.mxu0 %v713
  %854 = vmatpush.bf16.msra.mxu0 %v699
  %855 = vmatpush.bf16.msra.mxu0 %v685
  %856 = vmatmul.bf16.gmra.mxu0 %v767
  %v857 = vpop.f32.mrf.mxu0
  %v858 = vadd.f32 %v528, %v857
  %v859 = vpop.f32.mrf.mxu0
  %v860 = vadd.f32 %v533, %v859
  %861 = vmatmul.bf16.gmra.mxu0 %v770
  %v862 = vpop.f32.mrf.mxu0
  %v863 = vadd.f32 %v538, %v862
  %v864 = vpop.f32.mrf.mxu0
  %v865 = vadd.f32 %v543, %v864
  %866 = vdwg.mxu0
  %867 = vmatpush.bf16.msra.mxu0 0
  %868 = vmatpush.bf16.msra.mxu0 0
  %869 = vmatpush.bf16.msra.mxu0 0
  %870 = vmatpush.bf16.msra.mxu0 0
  %871 = vmatpush.bf16.msra.mxu0 0
  %872 = vmatpush.bf16.msra.mxu0 %v714
  %873 = vmatpush.bf16.msra.mxu0 %v700
  %874 = vmatpush.bf16.msra.mxu0 %v686
  %875 = vmatmul.bf16.gmra.mxu0 %v767
  %v876 = vpop.f32.mrf.mxu0
  %v877 = vadd.f32 %v528, %v876
  %v878 = vpop.f32.mrf.mxu0
  %v879 = vadd.f32 %v533, %v878
  %880 = vmatmul.bf16.gmra.mxu0 %v770
  %v881 = vpop.f32.mrf.mxu0
  %v882 = vadd.f32 %v538, %v881
  %v883 = vpop.f32.mrf.mxu0
  %v884 = vadd.f32 %v543, %v883
  %885 = vdwg.mxu0
  %886 = vmatpush.bf16.msra.mxu0 0
  %887 = vmatpush.bf16.msra.mxu0 0
  %888 = vmatpush.bf16.msra.mxu0 0
  %889 = vmatpush.bf16.msra.mxu0 0
  %890 = vmatpush.bf16.msra.mxu0 0
  %891 = vmatpush.bf16.msra.mxu0 %v715
  %892 = vmatpush.bf16.msra.mxu0 %v701
  %893 = vmatpush.bf16.msra.mxu0 %v687
  %894 = vmatmul.bf16.gmra.mxu0 %v767
  %v895 = vpop.f32.mrf.mxu0
  %v896 = vadd.f32 %v528, %v895
  %v897 = vpop.f32.mrf.mxu0
  %v898 = vadd.f32 %v533, %v897
  %899 = vmatmul.bf16.gmra.mxu0 %v770
  %v900 = vpop.f32.mrf.mxu0
  %v901 = vadd.f32 %v538, %v900
  %v902 = vpop.f32.mrf.mxu0
  %v903 = vadd.f32 %v543, %v902
  %904 = vdwg.mxu0
  %905 = vmatpush.bf16.msra.mxu0 0
  %906 = vmatpush.bf16.msra.mxu0 0
  %907 = vmatpush.bf16.msra.mxu0 0
  %908 = vmatpush.bf16.msra.mxu0 0
  %909 = vmatpush.bf16.msra.mxu0 0
  %910 = vmatpush.bf16.msra.mxu0 %v716
  %911 = vmatpush.bf16.msra.mxu0 %v702
  %912 = vmatpush.bf16.msra.mxu0 %v688
  %913 = vmatmul.bf16.gmra.mxu0 %v767
  %v914 = vpop.f32.mrf.mxu0
  %v915 = vadd.f32 %v528, %v914
  %v916 = vpop.f32.mrf.mxu0
  %v917 = vadd.f32 %v533, %v916
  %918 = vmatmul.bf16.gmra.mxu0 %v770
  %v919 = vpop.f32.mrf.mxu0
  %v920 = vadd.f32 %v538, %v919
  %v921 = vpop.f32.mrf.mxu0
  %v922 = vadd.f32 %v543, %v921
  %923 = vdwg.mxu0
  %924 = vmatpush.bf16.msra.mxu0 0
  %925 = vmatpush.bf16.msra.mxu0 0
  %926 = vmatpush.bf16.msra.mxu0 0
  %927 = vmatpush.bf16.msra.mxu0 0
  %928 = vmatpush.bf16.msra.mxu0 0
  %929 = vmatpush.bf16.msra.mxu0 %v717
  %930 = vmatpush.bf16.msra.mxu0 %v703
  %931 = vmatpush.bf16.msra.mxu0 %v689
  %932 = vmatmul.bf16.gmra.mxu0 %v767
  %v933 = vpop.f32.mrf.mxu0
  %v934 = vadd.f32 %v528, %v933
  %v935 = vpop.f32.mrf.mxu0
  %v936 = vadd.f32 %v533, %v935
  %937 = vmatmul.bf16.gmra.mxu0 %v770
  %v938 = vpop.f32.mrf.mxu0
  %v939 = vadd.f32 %v538, %v938
  %v940 = vpop.f32.mrf.mxu0
  %v941 = vadd.f32 %v543, %v940
  %942 = vdwg.mxu0
  %943 = vmatpush.bf16.msra.mxu0 0
  %944 = vmatpush.bf16.msra.mxu0 0
  %945 = vmatpush.bf16.msra.mxu0 0
  %946 = vmatpush.bf16.msra.mxu0 0
  %947 = vmatpush.bf16.msra.mxu0 0
  %948 = vmatpush.bf16.msra.mxu0 %v718
  %949 = vmatpush.bf16.msra.mxu0 %v704
  %950 = vmatpush.bf16.msra.mxu0 %v690
  %951 = vmatmul.bf16.gmra.mxu0 %v767
  %v952 = vpop.f32.mrf.mxu0
  %v953 = vadd.f32 %v528, %v952
  %v954 = vpop.f32.mrf.mxu0
  %v955 = vadd.f32 %v533, %v954
  %956 = vmatmul.bf16.gmra.mxu0 %v770
  %v957 = vpop.f32.mrf.mxu0
  %v958 = vadd.f32 %v538, %v957
  %v959 = vpop.f32.mrf.mxu0
  %v960 = vadd.f32 %v543, %v959
  %961 = vdwg.mxu0
  %962 = vmatpush.bf16.msra.mxu0 0
  %963 = vmatpush.bf16.msra.mxu0 0
  %964 = vmatpush.bf16.msra.mxu0 0
  %965 = vmatpush.bf16.msra.mxu0 0
  %966 = vmatpush.bf16.msra.mxu0 0
  %967 = vmatpush.bf16.msra.mxu0 %v719
  %968 = vmatpush.bf16.msra.mxu0 %v705
  %969 = vmatpush.bf16.msra.mxu0 %v691
  %970 = vmatmul.bf16.gmra.mxu0 %v767
  %v971 = vpop.f32.mrf.mxu0
  %v972 = vadd.f32 %v528, %v971
  %v973 = vpop.f32.mrf.mxu0
  %v974 = vadd.f32 %v533, %v973
  %975 = vmatmul.bf16.gmra.mxu0 %v770
  %v976 = vpop.f32.mrf.mxu0
  %v977 = vadd.f32 %v538, %v976
  %v978 = vpop.f32.mrf.mxu0
  %v979 = vadd.f32 %v543, %v978
  %980 = vdwg.mxu0
  %981 = vmatpush.bf16.msra.mxu0 0
  %982 = vmatpush.bf16.msra.mxu0 0
  %983 = vmatpush.bf16.msra.mxu0 0
  %984 = vmatpush.bf16.msra.mxu0 0
  %985 = vmatpush.bf16.msra.mxu0 0
  %986 = vmatpush.bf16.msra.mxu0 %v720
  %987 = vmatpush.bf16.msra.mxu0 %v706
  %988 = vmatpush.bf16.msra.mxu0 %v692
  %989 = vmatmul.bf16.gmra.mxu0 %v767
  %v990 = vpop.f32.mrf.mxu0
  %v991 = vadd.f32 %v528, %v990
  %v992 = vpop.f32.mrf.mxu0
  %v993 = vadd.f32 %v533, %v992
  %994 = vmatmul.bf16.gmra.mxu0 %v770
  %v995 = vpop.f32.mrf.mxu0
  %v996 = vadd.f32 %v538, %v995
  %v997 = vpop.f32.mrf.mxu0
  %v998 = vadd.f32 %v543, %v997
  %999 = vdwg.mxu0
  %1000 = vmatpush.bf16.msra.mxu0 0
  %1001 = vmatpush.bf16.msra.mxu0 0
  %1002 = vmatpush.bf16.msra.mxu0 0
  %1003 = vmatpush.bf16.msra.mxu0 0
  %1004 = vmatpush.bf16.msra.mxu0 0
  %1005 = vmatpush.bf16.msra.mxu0 %v721
  %1006 = vmatpush.bf16.msra.mxu0 %v707
  %1007 = vmatpush.bf16.msra.mxu0 %v693
  %1008 = vmatmul.bf16.gmra.mxu0 %v767
  %v1009 = vpop.f32.mrf.mxu0
  %v1010 = vadd.f32 %v528, %v1009
  %v1011 = vpop.f32.mrf.mxu0
  %v1012 = vadd.f32 %v533, %v1011
  %1013 = vmatmul.bf16.gmra.mxu0 %v770
  %v1014 = vpop.f32.mrf.mxu0
  %v1015 = vadd.f32 %v538, %v1014
  %v1016 = vpop.f32.mrf.mxu0
  %v1017 = vadd.f32 %v543, %v1016
  %1018 = vdwg.mxu0
  %1019 = vmatpush.bf16.msra.mxu0 0
  %1020 = vmatpush.bf16.msra.mxu0 0
  %1021 = vmatpush.bf16.msra.mxu0 0
  %1022 = vmatpush.bf16.msra.mxu0 0
  %1023 = vmatpush.bf16.msra.mxu0 0
  %1024 = vmatpush.bf16.msra.mxu0 %v722
  %1025 = vmatpush.bf16.msra.mxu0 %v708
  %1026 = vmatpush.bf16.msra.mxu0 %v694
  %1027 = vmatmul.bf16.gmra.mxu0 %v767
  %v1028 = vpop.f32.mrf.mxu0
  %v1029 = vadd.f32 %v528, %v1028
  %v1030 = vpop.f32.mrf.mxu0
  %v1031 = vadd.f32 %v533, %v1030
  %1032 = vmatmul.bf16.gmra.mxu0 %v770
  %v1033 = vpop.f32.mrf.mxu0
  %v1034 = vadd.f32 %v538, %v1033
  %v1035 = vpop.f32.mrf.mxu0
  %v1036 = vadd.f32 %v543, %v1035
  %1037 = vdwg.mxu0
  %1038 = vst [vmem:[#allocation2] sm:$0xff] %v782
  %1039 = vst [vmem:[#allocation2 + $0x8] sm:$0xff] %v801
  %1040 = vst [vmem:[#allocation2 + $0x10] sm:$0xff] %v820
  %1041 = vst [vmem:[#allocation2 + $0x18] sm:$0xff] %v839
  %1042 = vst [vmem:[#allocation2 + $0x20] sm:$0xff] %v858
  %1043 = vst [vmem:[#allocation2 + $0x28] sm:$0xff] %v877
  %1044 = vst [vmem:[#allocation2 + $0x30] sm:$0xff] %v896
  %1045 = vst [vmem:[#allocation2 + $0x38] sm:$0xff] %v915
  %1046 = vst [vmem:[#allocation2 + $0x40] sm:$0xff] %v934
  %1047 = vst [vmem:[#allocation2 + $0x48] sm:$0xff] %v953
  %1048 = vst [vmem:[#allocation2 + $0x50] sm:$0xff] %v972
  %1049 = vst [vmem:[#allocation2 + $0x58] sm:$0xff] %v991
  %1050 = vst [vmem:[#allocation2 + $0x60] sm:$0xff] %v1010
  %1051 = vst [vmem:[#allocation2 + $0x68] sm:$0xff] %v1029
  %1052 = vst [vmem:[#allocation2 + $0x70] sm:$0xff] %v784
  %1053 = vst [vmem:[#allocation2 + $0x78] sm:$0xff] %v803
  %1054 = vst [vmem:[#allocation2 + $0x80] sm:$0xff] %v822
  %1055 = vst [vmem:[#allocation2 + $0x88] sm:$0xff] %v841
  %1056 = vst [vmem:[#allocation2 + $0x90] sm:$0xff] %v860
  %1057 = vst [vmem:[#allocation2 + $0x98] sm:$0xff] %v879
  %1058 = vst [vmem:[#allocation2 + $0xa0] sm:$0xff] %v898
  %1059 = vst [vmem:[#allocation2 + $0xa8] sm:$0xff] %v917
  %1060 = vst [vmem:[#allocation2 + $0xb0] sm:$0xff] %v936
  %1061 = vst [vmem:[#allocation2 + $0xb8] sm:$0xff] %v955
  %1062 = vst [vmem:[#allocation2 + $0xc0] sm:$0xff] %v974
  %1063 = vst [vmem:[#allocation2 + $0xc8] sm:$0xff] %v993
  %1064 = vst [vmem:[#allocation2 + $0xd0] sm:$0xff] %v1012
  %1065 = vst [vmem:[#allocation2 + $0xd8] sm:$0xff] %v1031
  %1066 = vst [vmem:[#allocation2 + $0xe0] sm:$0xff] %v787
  %1067 = vst [vmem:[#allocation2 + $0xe8] sm:$0xff] %v806
  %1068 = vst [vmem:[#allocation2 + $0xf0] sm:$0xff] %v825
  %1069 = vst [vmem:[#allocation2 + $0xf8] sm:$0xff] %v844
  %1070 = vst [vmem:[#allocation2 + $0x100] sm:$0xff] %v863
  %1071 = vst [vmem:[#allocation2 + $0x108] sm:$0xff] %v882
  %1072 = vst [vmem:[#allocation2 + $0x110] sm:$0xff] %v901
  %1073 = vst [vmem:[#allocation2 + $0x118] sm:$0xff] %v920
  %1074 = vst [vmem:[#allocation2 + $0x120] sm:$0xff] %v939
  %1075 = vst [vmem:[#allocation2 + $0x128] sm:$0xff] %v958
  %1076 = vst [vmem:[#allocation2 + $0x130] sm:$0xff] %v977
  %1077 = vst [vmem:[#allocation2 + $0x138] sm:$0xff] %v996
  %1078 = vst [vmem:[#allocation2 + $0x140] sm:$0xff] %v1015
  %1079 = vst [vmem:[#allocation2 + $0x148] sm:$0xff] %v1034
  %1080 = vst [vmem:[#allocation2 + $0x150] sm:$0xff] %v789
  %1081 = vst [vmem:[#allocation2 + $0x158] sm:$0xff] %v808
  %1082 = vst [vmem:[#allocation2 + $0x160] sm:$0xff] %v827
  %1083 = vst [vmem:[#allocation2 + $0x168] sm:$0xff] %v846
  %1084 = vst [vmem:[#allocation2 + $0x170] sm:$0xff] %v865
  %1085 = vst [vmem:[#allocation2 + $0x178] sm:$0xff] %v884
  %1086 = vst [vmem:[#allocation2 + $0x180] sm:$0xff] %v903
  %1087 = vst [vmem:[#allocation2 + $0x188] sm:$0xff] %v922
  %1088 = vst [vmem:[#allocation2 + $0x190] sm:$0xff] %v941
  %1089 = vst [vmem:[#allocation2 + $0x198] sm:$0xff] %v960
  %1090 = vst [vmem:[#allocation2 + $0x1a0] sm:$0xff] %v979
  %1091 = vst [vmem:[#allocation2 + $0x1a8] sm:$0xff] %v998
  %1092 = vst [vmem:[#allocation2 + $0x1b0] sm:$0xff] %v1017
  %1093 = vst [vmem:[#allocation2 + $0x1b8] sm:$0xff] %v1036
  %v1094 = vlaneseq
  %v1095 = vand.u32 %v1094, 127
  %v1096 = vadd.s32 %v1095, 128
  %v1097 = vadd.s32 %v1095, 256
  %v1098 = vadd.s32 %v1095, 384
  %v1099 = vadd.s32 %v1095, 512
  %v1100 = vadd.s32 %v1095, 640
  %v1101 = vadd.s32 %v1095, 768
  %v1102 = vadd.s32 %v1095, 896
  %v1103 = vadd.s32 %v1095, 1024
  %v1104 = vadd.s32 %v1095, 1152
  %v1105 = vadd.s32 %v1095, 1280
  %v1106 = vadd.s32 %v1095, 1408
  %v1107 = vadd.s32 %v1095, 1536
  %v1108 = vadd.s32 %v1095, 1664
  %vm1109 = vcmp.lt.s32.totalorder %v1095, 1682
  %vm1110 = vcmp.lt.s32.totalorder %v1096, 1682
  %vm1111 = vcmp.lt.s32.totalorder %v1097, 1682
  %vm1112 = vcmp.lt.s32.totalorder %v1098, 1682
  %vm1113 = vcmp.lt.s32.totalorder %v1099, 1682
  %vm1114 = vcmp.lt.s32.totalorder %v1100, 1682
  %vm1115 = vcmp.lt.s32.totalorder %v1101, 1682
  %vm1116 = vcmp.lt.s32.totalorder %v1102, 1682
  %vm1117 = vcmp.lt.s32.totalorder %v1103, 1682
  %vm1118 = vcmp.lt.s32.totalorder %v1104, 1682
  %vm1119 = vcmp.lt.s32.totalorder %v1105, 1682
  %vm1120 = vcmp.lt.s32.totalorder %v1106, 1682
  %vm1121 = vcmp.lt.s32.totalorder %v1107, 1682
  %vm1122 = vcmp.lt.s32.totalorder %v1108, 1682
  %v1123 = vld [vmem:[#allocation2] sm:$0xff]
  %v1124 = vld [vmem:[#allocation2 + $0x8] sm:$0xff]
  %v1125 = vld [vmem:[#allocation2 + $0x10] sm:$0xff]
  %v1126 = vld [vmem:[#allocation2 + $0x18] sm:$0xff]
  %v1127 = vld [vmem:[#allocation2 + $0x20] sm:$0xff]
  %v1128 = vld [vmem:[#allocation2 + $0x28] sm:$0xff]
  %v1129 = vld [vmem:[#allocation2 + $0x30] sm:$0xff]
  %v1130 = vld [vmem:[#allocation2 + $0x38] sm:$0xff]
  %v1131 = vld [vmem:[#allocation2 + $0x40] sm:$0xff]
  %v1132 = vld [vmem:[#allocation2 + $0x48] sm:$0xff]
  %v1133 = vld [vmem:[#allocation2 + $0x50] sm:$0xff]
  %v1134 = vld [vmem:[#allocation2 + $0x58] sm:$0xff]
  %v1135 = vld [vmem:[#allocation2 + $0x60] sm:$0xff]
  %v1136 = vld [vmem:[#allocation2 + $0x68] sm:$0xff]
  %v1137 = vld [vmem:[#allocation2 + $0x70] sm:$0xff]
  %v1138 = vld [vmem:[#allocation2 + $0x78] sm:$0xff]
  %v1139 = vld [vmem:[#allocation2 + $0x80] sm:$0xff]
  %v1140 = vld [vmem:[#allocation2 + $0x88] sm:$0xff]
  %v1141 = vld [vmem:[#allocation2 + $0x90] sm:$0xff]
  %v1142 = vld [vmem:[#allocation2 + $0x98] sm:$0xff]
  %v1143 = vld [vmem:[#allocation2 + $0xa0] sm:$0xff]
  %v1144 = vld [vmem:[#allocation2 + $0xa8] sm:$0xff]
  %v1145 = vld [vmem:[#allocation2 + $0xb0] sm:$0xff]
  %v1146 = vld [vmem:[#allocation2 + $0xb8] sm:$0xff]
  %v1147 = vld [vmem:[#allocation2 + $0xc0] sm:$0xff]
  %v1148 = vld [vmem:[#allocation2 + $0xc8] sm:$0xff]
  %v1149 = vld [vmem:[#allocation2 + $0xd0] sm:$0xff]
  %v1150 = vld [vmem:[#allocation2 + $0xd8] sm:$0xff]
  %v1151 = vld [vmem:[#allocation2 + $0xe0] sm:$0xff]
  %v1152 = vld [vmem:[#allocation2 + $0xe8] sm:$0xff]
  %v1153 = vld [vmem:[#allocation2 + $0xf0] sm:$0xff]
  %v1154 = vld [vmem:[#allocation2 + $0xf8] sm:$0xff]
  %v1155 = vld [vmem:[#allocation2 + $0x100] sm:$0xff]
  %v1156 = vld [vmem:[#allocation2 + $0x108] sm:$0xff]
  %v1157 = vld [vmem:[#allocation2 + $0x110] sm:$0xff]
  %v1158 = vld [vmem:[#allocation2 + $0x118] sm:$0xff]
  %v1159 = vld [vmem:[#allocation2 + $0x120] sm:$0xff]
  %v1160 = vld [vmem:[#allocation2 + $0x128] sm:$0xff]
  %v1161 = vld [vmem:[#allocation2 + $0x130] sm:$0xff]
  %v1162 = vld [vmem:[#allocation2 + $0x138] sm:$0xff]
  %v1163 = vld [vmem:[#allocation2 + $0x140] sm:$0xff]
  %v1164 = vld [vmem:[#allocation2 + $0x148] sm:$0xff]
  %v1165 = vld [vmem:[#allocation2 + $0x150] sm:$0xff]
  %v1166 = vld [vmem:[#allocation2 + $0x158] sm:$0xff]
  %v1167 = vld [vmem:[#allocation2 + $0x160] sm:$0xff]
  %v1168 = vld [vmem:[#allocation2 + $0x168] sm:$0xff]
  %v1169 = vld [vmem:[#allocation2 + $0x170] sm:$0xff]
  %v1170 = vld [vmem:[#allocation2 + $0x178] sm:$0xff]
  %v1171 = vld [vmem:[#allocation2 + $0x180] sm:$0xff]
  %v1172 = vld [vmem:[#allocation2 + $0x188] sm:$0xff]
  %v1173 = vld [vmem:[#allocation2 + $0x190] sm:$0xff]
  %v1174 = vld [vmem:[#allocation2 + $0x198] sm:$0xff]
  %v1175 = vld [vmem:[#allocation2 + $0x1a0] sm:$0xff]
  %v1176 = vld [vmem:[#allocation2 + $0x1a8] sm:$0xff]
  %v1177 = vld [vmem:[#allocation2 + $0x1b0] sm:$0xff]
  %v1178 = vld [vmem:[#allocation2 + $0x1b8] sm:$0xff]
  %v1179 = vsel %vm1109, %v1123, 0.0
  %v1180 = vsel %vm1110, %v1124, 0.0
  %v1181 = vsel %vm1111, %v1125, 0.0
  %v1182 = vsel %vm1112, %v1126, 0.0
  %v1183 = vsel %vm1113, %v1127, 0.0
  %v1184 = vsel %vm1114, %v1128, 0.0
  %v1185 = vsel %vm1115, %v1129, 0.0
  %v1186 = vsel %vm1116, %v1130, 0.0
  %v1187 = vsel %vm1117, %v1131, 0.0
  %v1188 = vsel %vm1118, %v1132, 0.0
  %v1189 = vsel %vm1119, %v1133, 0.0
  %v1190 = vsel %vm1120, %v1134, 0.0
  %v1191 = vsel %vm1121, %v1135, 0.0
  %v1192 = vsel %vm1122, %v1136, 0.0
  %v1193 = vsel %vm1109, %v1137, 0.0
  %v1194 = vsel %vm1110, %v1138, 0.0
  %v1195 = vsel %vm1111, %v1139, 0.0
  %v1196 = vsel %vm1112, %v1140, 0.0
  %v1197 = vsel %vm1113, %v1141, 0.0
  %v1198 = vsel %vm1114, %v1142, 0.0
  %v1199 = vsel %vm1115, %v1143, 0.0
  %v1200 = vsel %vm1116, %v1144, 0.0
  %v1201 = vsel %vm1117, %v1145, 0.0
  %v1202 = vsel %vm1118, %v1146, 0.0
  %v1203 = vsel %vm1119, %v1147, 0.0
  %v1204 = vsel %vm1120, %v1148, 0.0
  %v1205 = vsel %vm1121, %v1149, 0.0
  %v1206 = vsel %vm1122, %v1150, 0.0
  %v1207 = vsel %vm1109, %v1151, 0.0
  %v1208 = vsel %vm1110, %v1152, 0.0
  %v1209 = vsel %vm1111, %v1153, 0.0
  %v1210 = vsel %vm1112, %v1154, 0.0
  %v1211 = vsel %vm1113, %v1155, 0.0
  %v1212 = vsel %vm1114, %v1156, 0.0
  %v1213 = vsel %vm1115, %v1157, 0.0
  %v1214 = vsel %vm1116, %v1158, 0.0
  %v1215 = vsel %vm1117, %v1159, 0.0
  %v1216 = vsel %vm1118, %v1160, 0.0
  %v1217 = vsel %vm1119, %v1161, 0.0
  %v1218 = vsel %vm1120, %v1162, 0.0
  %v1219 = vsel %vm1121, %v1163, 0.0
  %v1220 = vsel %vm1122, %v1164, 0.0
  %v1221 = vsel %vm1109, %v1165, 0.0
  %v1222 = vsel %vm1110, %v1166, 0.0
  %v1223 = vsel %vm1111, %v1167, 0.0
  %v1224 = vsel %vm1112, %v1168, 0.0
  %v1225 = vsel %vm1113, %v1169, 0.0
  %v1226 = vsel %vm1114, %v1170, 0.0
  %v1227 = vsel %vm1115, %v1171, 0.0
  %v1228 = vsel %vm1116, %v1172, 0.0
  %v1229 = vsel %vm1117, %v1173, 0.0
  %v1230 = vsel %vm1118, %v1174, 0.0
  %v1231 = vsel %vm1119, %v1175, 0.0
  %v1232 = vsel %vm1120, %v1176, 0.0
  %v1233 = vsel %vm1121, %v1177, 0.0
  %v1234 = vsel %vm1122, %v1178, 0.0
  %v1235 = vadd.f32 %v1179, %v1180
  %v1236 = vadd.f32 %v1235, %v1181
  %v1237 = vadd.f32 %v1236, %v1182
  %v1238 = vadd.f32 %v1237, %v1183
  %v1239 = vadd.f32 %v1238, %v1184
  %v1240 = vadd.f32 %v1239, %v1185
  %v1241 = vadd.f32 %v1240, %v1186
  %v1242 = vadd.f32 %v1241, %v1187
  %v1243 = vadd.f32 %v1242, %v1188
  %v1244 = vadd.f32 %v1243, %v1189
  %v1245 = vadd.f32 %v1244, %v1190
  %v1246 = vadd.f32 %v1245, %v1191
  %v1247 = vadd.f32 %v1246, %v1192
  %1248 = vadd.xlane.f32.xlu0 %v1247
  %v1249 = vpop.xlane.xlu0 %1248
  %v1250 = vadd.f32 %v1193, %v1194
  %v1251 = vadd.f32 %v1250, %v1195
  %v1252 = vadd.f32 %v1251, %v1196
  %v1253 = vadd.f32 %v1252, %v1197
  %v1254 = vadd.f32 %v1253, %v1198
  %v1255 = vadd.f32 %v1254, %v1199
  %v1256 = vadd.f32 %v1255, %v1200
  %v1257 = vadd.f32 %v1256, %v1201
  %v1258 = vadd.f32 %v1257, %v1202
  %v1259 = vadd.f32 %v1258, %v1203
  %v1260 = vadd.f32 %v1259, %v1204
  %v1261 = vadd.f32 %v1260, %v1205
  %v1262 = vadd.f32 %v1261, %v1206
  %1263 = vadd.xlane.f32.xlu0 %v1262
  %v1264 = vpop.xlane.xlu0 %1263
  %v1265 = vadd.f32 %v1207, %v1208
  %v1266 = vadd.f32 %v1265, %v1209
  %v1267 = vadd.f32 %v1266, %v1210
  %v1268 = vadd.f32 %v1267, %v1211
  %v1269 = vadd.f32 %v1268, %v1212
  %v1270 = vadd.f32 %v1269, %v1213
  %v1271 = vadd.f32 %v1270, %v1214
  %v1272 = vadd.f32 %v1271, %v1215
  %v1273 = vadd.f32 %v1272, %v1216
  %v1274 = vadd.f32 %v1273, %v1217
  %v1275 = vadd.f32 %v1274, %v1218
  %v1276 = vadd.f32 %v1275, %v1219
  %v1277 = vadd.f32 %v1276, %v1220
  %1278 = vadd.xlane.f32.xlu0 %v1277
  %v1279 = vpop.xlane.xlu0 %1278
  %v1280 = vadd.f32 %v1221, %v1222
  %v1281 = vadd.f32 %v1280, %v1223
  %v1282 = vadd.f32 %v1281, %v1224
  %v1283 = vadd.f32 %v1282, %v1225
  %v1284 = vadd.f32 %v1283, %v1226
  %v1285 = vadd.f32 %v1284, %v1227
  %v1286 = vadd.f32 %v1285, %v1228
  %v1287 = vadd.f32 %v1286, %v1229
  %v1288 = vadd.f32 %v1287, %v1230
  %v1289 = vadd.f32 %v1288, %v1231
  %v1290 = vadd.f32 %v1289, %v1232
  %v1291 = vadd.f32 %v1290, %v1233
  %v1292 = vadd.f32 %v1291, %v1234
  %1293 = vadd.xlane.f32.xlu0 %v1292
  %v1294 = vpop.xlane.xlu0 %1293
  %v1295 = vrcp.pop 1682.0
  %v1296 = vmul.f32 1682.0, %v1295
  %v1297 = vsub.f32 1.0, %v1296
  %v1298 = vmul.f32 %v1295, %v1297
  %v1299 = vadd.f32 %v1295, %v1298
  %vm1300 = vweird.f32 %v1295
  %v1301 = vsel %vm1300, %v1295, %v1299
  %v1302 = vmul.f32 %v1249, %v1301
  %v1303 = vmul.f32 %v1264, %v1301
  %v1304 = vmul.f32 %v1279, %v1301
  %v1305 = vmul.f32 %v1294, %v1301
  %v1306 = vsub.f32 %v1123, %v1302
  %v1307 = vsub.f32 %v1124, %v1302
  %v1308 = vsub.f32 %v1125, %v1302
  %v1309 = vsub.f32 %v1126, %v1302
  %v1310 = vsub.f32 %v1127, %v1302
  %v1311 = vsub.f32 %v1128, %v1302
  %v1312 = vsub.f32 %v1129, %v1302
  %v1313 = vsub.f32 %v1130, %v1302
  %v1314 = vsub.f32 %v1131, %v1302
  %v1315 = vsub.f32 %v1132, %v1302
  %v1316 = vsub.f32 %v1133, %v1302
  %v1317 = vsub.f32 %v1134, %v1302
  %v1318 = vsub.f32 %v1135, %v1302
  %v1319 = vsub.f32 %v1136, %v1302
  %v1320 = vsub.f32 %v1137, %v1303
  %v1321 = vsub.f32 %v1138, %v1303
  %v1322 = vsub.f32 %v1139, %v1303
  %v1323 = vsub.f32 %v1140, %v1303
  %v1324 = vsub.f32 %v1141, %v1303
  %v1325 = vsub.f32 %v1142, %v1303
  %v1326 = vsub.f32 %v1143, %v1303
  %v1327 = vsub.f32 %v1144, %v1303
  %v1328 = vsub.f32 %v1145, %v1303
  %v1329 = vsub.f32 %v1146, %v1303
  %v1330 = vsub.f32 %v1147, %v1303
  %v1331 = vsub.f32 %v1148, %v1303
  %v1332 = vsub.f32 %v1149, %v1303
  %v1333 = vsub.f32 %v1150, %v1303
  %v1334 = vsub.f32 %v1151, %v1304
  %v1335 = vsub.f32 %v1152, %v1304
  %v1336 = vsub.f32 %v1153, %v1304
  %v1337 = vsub.f32 %v1154, %v1304
  %v1338 = vsub.f32 %v1155, %v1304
  %v1339 = vsub.f32 %v1156, %v1304
  %v1340 = vsub.f32 %v1157, %v1304
  %v1341 = vsub.f32 %v1158, %v1304
  %v1342 = vsub.f32 %v1159, %v1304
  %v1343 = vsub.f32 %v1160, %v1304
  %v1344 = vsub.f32 %v1161, %v1304
  %v1345 = vsub.f32 %v1162, %v1304
  %v1346 = vsub.f32 %v1163, %v1304
  %v1347 = vsub.f32 %v1164, %v1304
  %v1348 = vsub.f32 %v1165, %v1305
  %v1349 = vsub.f32 %v1166, %v1305
  %v1350 = vsub.f32 %v1167, %v1305
  %v1351 = vsub.f32 %v1168, %v1305
  %v1352 = vsub.f32 %v1169, %v1305
  %v1353 = vsub.f32 %v1170, %v1305
  %v1354 = vsub.f32 %v1171, %v1305
  %v1355 = vsub.f32 %v1172, %v1305
  %v1356 = vsub.f32 %v1173, %v1305
  %v1357 = vsub.f32 %v1174, %v1305
  %v1358 = vsub.f32 %v1175, %v1305
  %v1359 = vsub.f32 %v1176, %v1305
  %v1360 = vsub.f32 %v1177, %v1305
  %v1361 = vsub.f32 %v1178, %v1305
  %v1362 = vsel %vm1109, %v1306, 0.0
  %v1363 = vsel %vm1110, %v1307, 0.0
  %v1364 = vsel %vm1111, %v1308, 0.0
  %v1365 = vsel %vm1112, %v1309, 0.0
  %v1366 = vsel %vm1113, %v1310, 0.0
  %v1367 = vsel %vm1114, %v1311, 0.0
  %v1368 = vsel %vm1115, %v1312, 0.0
  %v1369 = vsel %vm1116, %v1313, 0.0
  %v1370 = vsel %vm1117, %v1314, 0.0
  %v1371 = vsel %vm1118, %v1315, 0.0
  %v1372 = vsel %vm1119, %v1316, 0.0
  %v1373 = vsel %vm1120, %v1317, 0.0
  %v1374 = vsel %vm1121, %v1318, 0.0
  %v1375 = vsel %vm1122, %v1319, 0.0
  %v1376 = vsel %vm1109, %v1320, 0.0
  %v1377 = vsel %vm1110, %v1321, 0.0
  %v1378 = vsel %vm1111, %v1322, 0.0
  %v1379 = vsel %vm1112, %v1323, 0.0
  %v1380 = vsel %vm1113, %v1324, 0.0
  %v1381 = vsel %vm1114, %v1325, 0.0
  %v1382 = vsel %vm1115, %v1326, 0.0
  %v1383 = vsel %vm1116, %v1327, 0.0
  %v1384 = vsel %vm1117, %v1328, 0.0
  %v1385 = vsel %vm1118, %v1329, 0.0
  %v1386 = vsel %vm1119, %v1330, 0.0
  %v1387 = vsel %vm1120, %v1331, 0.0
  %v1388 = vsel %vm1121, %v1332, 0.0
  %v1389 = vsel %vm1122, %v1333, 0.0
  %v1390 = vsel %vm1109, %v1334, 0.0
  %v1391 = vsel %vm1110, %v1335, 0.0
  %v1392 = vsel %vm1111, %v1336, 0.0
  %v1393 = vsel %vm1112, %v1337, 0.0
  %v1394 = vsel %vm1113, %v1338, 0.0
  %v1395 = vsel %vm1114, %v1339, 0.0
  %v1396 = vsel %vm1115, %v1340, 0.0
  %v1397 = vsel %vm1116, %v1341, 0.0
  %v1398 = vsel %vm1117, %v1342, 0.0
  %v1399 = vsel %vm1118, %v1343, 0.0
  %v1400 = vsel %vm1119, %v1344, 0.0
  %v1401 = vsel %vm1120, %v1345, 0.0
  %v1402 = vsel %vm1121, %v1346, 0.0
  %v1403 = vsel %vm1122, %v1347, 0.0
  %v1404 = vsel %vm1109, %v1348, 0.0
  %v1405 = vsel %vm1110, %v1349, 0.0
  %v1406 = vsel %vm1111, %v1350, 0.0
  %v1407 = vsel %vm1112, %v1351, 0.0
  %v1408 = vsel %vm1113, %v1352, 0.0
  %v1409 = vsel %vm1114, %v1353, 0.0
  %v1410 = vsel %vm1115, %v1354, 0.0
  %v1411 = vsel %vm1116, %v1355, 0.0
  %v1412 = vsel %vm1117, %v1356, 0.0
  %v1413 = vsel %vm1118, %v1357, 0.0
  %v1414 = vsel %vm1119, %v1358, 0.0
  %v1415 = vsel %vm1120, %v1359, 0.0
  %v1416 = vsel %vm1121, %v1360, 0.0
  %v1417 = vsel %vm1122, %v1361, 0.0
  %v1418 = vmul.f32 %v1362, %v1362
  %v1419 = vmul.f32 %v1363, %v1363
  %v1420 = vmul.f32 %v1364, %v1364
  %v1421 = vmul.f32 %v1365, %v1365
  %v1422 = vmul.f32 %v1366, %v1366
  %v1423 = vmul.f32 %v1367, %v1367
  %v1424 = vmul.f32 %v1368, %v1368
  %v1425 = vmul.f32 %v1369, %v1369
  %v1426 = vmul.f32 %v1370, %v1370
  %v1427 = vmul.f32 %v1371, %v1371
  %v1428 = vmul.f32 %v1372, %v1372
  %v1429 = vmul.f32 %v1373, %v1373
  %v1430 = vmul.f32 %v1374, %v1374
  %v1431 = vmul.f32 %v1375, %v1375
  %v1432 = vmul.f32 %v1376, %v1376
  %v1433 = vmul.f32 %v1377, %v1377
  %v1434 = vmul.f32 %v1378, %v1378
  %v1435 = vmul.f32 %v1379, %v1379
  %v1436 = vmul.f32 %v1380, %v1380
  %v1437 = vmul.f32 %v1381, %v1381
  %v1438 = vmul.f32 %v1382, %v1382
  %v1439 = vmul.f32 %v1383, %v1383
  %v1440 = vmul.f32 %v1384, %v1384
  %v1441 = vmul.f32 %v1385, %v1385
  %v1442 = vmul.f32 %v1386, %v1386
  %v1443 = vmul.f32 %v1387, %v1387
  %v1444 = vmul.f32 %v1388, %v1388
  %v1445 = vmul.f32 %v1389, %v1389
  %v1446 = vmul.f32 %v1390, %v1390
  %v1447 = vmul.f32 %v1391, %v1391
  %v1448 = vmul.f32 %v1392, %v1392
  %v1449 = vmul.f32 %v1393, %v1393
  %v1450 = vmul.f32 %v1394, %v1394
  %v1451 = vmul.f32 %v1395, %v1395
  %v1452 = vmul.f32 %v1396, %v1396
  %v1453 = vmul.f32 %v1397, %v1397
  %v1454 = vmul.f32 %v1398, %v1398
  %v1455 = vmul.f32 %v1399, %v1399
  %v1456 = vmul.f32 %v1400, %v1400
  %v1457 = vmul.f32 %v1401, %v1401
  %v1458 = vmul.f32 %v1402, %v1402
  %v1459 = vmul.f32 %v1403, %v1403
  %v1460 = vmul.f32 %v1404, %v1404
  %v1461 = vmul.f32 %v1405, %v1405
  %v1462 = vmul.f32 %v1406, %v1406
  %v1463 = vmul.f32 %v1407, %v1407
  %v1464 = vmul.f32 %v1408, %v1408
  %v1465 = vmul.f32 %v1409, %v1409
  %v1466 = vmul.f32 %v1410, %v1410
  %v1467 = vmul.f32 %v1411, %v1411
  %v1468 = vmul.f32 %v1412, %v1412
  %v1469 = vmul.f32 %v1413, %v1413
  %v1470 = vmul.f32 %v1414, %v1414
  %v1471 = vmul.f32 %v1415, %v1415
  %v1472 = vmul.f32 %v1416, %v1416
  %v1473 = vmul.f32 %v1417, %v1417
  %v1474 = vadd.f32 %v1418, %v1419
  %v1475 = vadd.f32 %v1474, %v1420
  %v1476 = vadd.f32 %v1475, %v1421
  %v1477 = vadd.f32 %v1476, %v1422
  %v1478 = vadd.f32 %v1477, %v1423
  %v1479 = vadd.f32 %v1478, %v1424
  %v1480 = vadd.f32 %v1479, %v1425
  %v1481 = vadd.f32 %v1480, %v1426
  %v1482 = vadd.f32 %v1481, %v1427
  %v1483 = vadd.f32 %v1482, %v1428
  %v1484 = vadd.f32 %v1483, %v1429
  %v1485 = vadd.f32 %v1484, %v1430
  %v1486 = vadd.f32 %v1485, %v1431
  %1487 = vadd.xlane.f32.xlu0 %v1486
  %v1488 = vpop.xlane.xlu0 %1487
  %v1489 = vadd.f32 %v1432, %v1433
  %v1490 = vadd.f32 %v1489, %v1434
  %v1491 = vadd.f32 %v1490, %v1435
  %v1492 = vadd.f32 %v1491, %v1436
  %v1493 = vadd.f32 %v1492, %v1437
  %v1494 = vadd.f32 %v1493, %v1438
  %v1495 = vadd.f32 %v1494, %v1439
  %v1496 = vadd.f32 %v1495, %v1440
  %v1497 = vadd.f32 %v1496, %v1441
  %v1498 = vadd.f32 %v1497, %v1442
  %v1499 = vadd.f32 %v1498, %v1443
  %v1500 = vadd.f32 %v1499, %v1444
  %v1501 = vadd.f32 %v1500, %v1445
  %1502 = vadd.xlane.f32.xlu0 %v1501
  %v1503 = vpop.xlane.xlu0 %1502
  %v1504 = vadd.f32 %v1446, %v1447
  %v1505 = vadd.f32 %v1504, %v1448
  %v1506 = vadd.f32 %v1505, %v1449
  %v1507 = vadd.f32 %v1506, %v1450
  %v1508 = vadd.f32 %v1507, %v1451
  %v1509 = vadd.f32 %v1508, %v1452
  %v1510 = vadd.f32 %v1509, %v1453
  %v1511 = vadd.f32 %v1510, %v1454
  %v1512 = vadd.f32 %v1511, %v1455
  %v1513 = vadd.f32 %v1512, %v1456
  %v1514 = vadd.f32 %v1513, %v1457
  %v1515 = vadd.f32 %v1514, %v1458
  %v1516 = vadd.f32 %v1515, %v1459
  %1517 = vadd.xlane.f32.xlu0 %v1516
  %v1518 = vpop.xlane.xlu0 %1517
  %v1519 = vadd.f32 %v1460, %v1461
  %v1520 = vadd.f32 %v1519, %v1462
  %v1521 = vadd.f32 %v1520, %v1463
  %v1522 = vadd.f32 %v1521, %v1464
  %v1523 = vadd.f32 %v1522, %v1465
  %v1524 = vadd.f32 %v1523, %v1466
  %v1525 = vadd.f32 %v1524, %v1467
  %v1526 = vadd.f32 %v1525, %v1468
  %v1527 = vadd.f32 %v1526, %v1469
  %v1528 = vadd.f32 %v1527, %v1470
  %v1529 = vadd.f32 %v1528, %v1471
  %v1530 = vadd.f32 %v1529, %v1472
  %v1531 = vadd.f32 %v1530, %v1473
  %1532 = vadd.xlane.f32.xlu0 %v1531
  %v1533 = vpop.xlane.xlu0 %1532
  %v1534 = vmul.f32 %v1488, %v1301
  %v1535 = vmul.f32 %v1503, %v1301
  %v1536 = vmul.f32 %v1518, %v1301
  %v1537 = vmul.f32 %v1533, %v1301
  %v1538 = vld [vmem:[%s3] sm:$0xff]
  %v1539 = vld [vmem:[%s3 + $0x8] sm:$0xff]
  %v1540 = vld [vmem:[%s3 + $0x10] sm:$0xff]
  %v1541 = vld [vmem:[%s3 + $0x18] sm:$0xff]
  %v1542 = vadd.f32 %v1534, 1e-05
  %v1543 = vadd.f32 %v1535, 1e-05
  %v1544 = vadd.f32 %v1536, 1e-05
  %v1545 = vadd.f32 %v1537, 1e-05
  %v1546 = vrsqrt.pop %v1542
  %v1547 = vmul.f32 %v1546, %v1542
  %v1548 = vmul.f32 %v1547, %v1546
  %v1549 = vmul.f32 0.5, %v1548
  %v1550 = vsub.f32 1.5, %v1549
  %v1551 = vmul.f32 %v1546, %v1550
  %vm1552 = vweird.f32 %v1542
  %vm1553 = vweird.f32 %v1546
  %vm1554 = vmor %vm1552, %vm1553
  %v1555 = vsel %vm1554, %v1546, %v1551
  %v1556 = vrsqrt.pop %v1543
  %v1557 = vmul.f32 %v1556, %v1543
  %v1558 = vmul.f32 %v1557, %v1556
  %v1559 = vmul.f32 0.5, %v1558
  %v1560 = vsub.f32 1.5, %v1559
  %v1561 = vmul.f32 %v1556, %v1560
  %vm1562 = vweird.f32 %v1543
  %vm1563 = vweird.f32 %v1556
  %vm1564 = vmor %vm1562, %vm1563
  %v1565 = vsel %vm1564, %v1556, %v1561
  %v1566 = vrsqrt.pop %v1544
  %v1567 = vmul.f32 %v1566, %v1544
  %v1568 = vmul.f32 %v1567, %v1566
  %v1569 = vmul.f32 0.5, %v1568
  %v1570 = vsub.f32 1.5, %v1569
  %v1571 = vmul.f32 %v1566, %v1570
  %vm1572 = vweird.f32 %v1544
  %vm1573 = vweird.f32 %v1566
  %vm1574 = vmor %vm1572, %vm1573
  %v1575 = vsel %vm1574, %v1566, %v1571
  %v1576 = vrsqrt.pop %v1545
  %v1577 = vmul.f32 %v1576, %v1545
  %v1578 = vmul.f32 %v1577, %v1576
  %v1579 = vmul.f32 0.5, %v1578
  %v1580 = vsub.f32 1.5, %v1579
  %v1581 = vmul.f32 %v1576, %v1580
  %vm1582 = vweird.f32 %v1545
  %vm1583 = vweird.f32 %v1576
  %vm1584 = vmor %vm1582, %vm1583
  %v1585 = vsel %vm1584, %v1576, %v1581
  %v1586 = vmul.f32 %v1538, %v1555
  %v1587 = vmul.f32 %v1539, %v1565
  %v1588 = vmul.f32 %v1540, %v1575
  %v1589 = vmul.f32 %v1541, %v1585
  %1591 = vset.pattern.permute.xlu0 0
  %1592 = vperm.xlu0 %1591, %v1586
  %v1593 = vpop.permute.xlu0 %1592
  %1596 = vset.pattern.permute.xlu0 0
  %1597 = vperm.xlu0 %1596, %v1587
  %v1598 = vpop.permute.xlu0 %1597
  %1601 = vset.pattern.permute.xlu0 0
  %1602 = vperm.xlu0 %1601, %v1588
  %v1603 = vpop.permute.xlu0 %1602
  %1606 = vset.pattern.permute.xlu0 0
  %1607 = vperm.xlu0 %1606, %v1589
  %v1608 = vpop.permute.xlu0 %1607
  %v1610 = vmul.f32 %v1362, %v1593
  %v1611 = vmul.f32 %v1363, %v1593
  %v1612 = vmul.f32 %v1364, %v1593
  %v1613 = vmul.f32 %v1365, %v1593
  %v1614 = vmul.f32 %v1366, %v1593
  %v1615 = vmul.f32 %v1367, %v1593
  %v1616 = vmul.f32 %v1368, %v1593
  %v1617 = vmul.f32 %v1369, %v1593
  %v1618 = vmul.f32 %v1370, %v1593
  %v1619 = vmul.f32 %v1371, %v1593
  %v1620 = vmul.f32 %v1372, %v1593
  %v1621 = vmul.f32 %v1373, %v1593
  %v1622 = vmul.f32 %v1374, %v1593
  %v1623 = vmul.f32 %v1375, %v1593
  %v1624 = vmul.f32 %v1376, %v1598
  %v1625 = vmul.f32 %v1377, %v1598
  %v1626 = vmul.f32 %v1378, %v1598
  %v1627 = vmul.f32 %v1379, %v1598
  %v1628 = vmul.f32 %v1380, %v1598
  %v1629 = vmul.f32 %v1381, %v1598
  %v1630 = vmul.f32 %v1382, %v1598
  %v1631 = vmul.f32 %v1383, %v1598
  %v1632 = vmul.f32 %v1384, %v1598
  %v1633 = vmul.f32 %v1385, %v1598
  %v1634 = vmul.f32 %v1386, %v1598
  %v1635 = vmul.f32 %v1387, %v1598
  %v1636 = vmul.f32 %v1388, %v1598
  %v1637 = vmul.f32 %v1389, %v1598
  %v1638 = vmul.f32 %v1390, %v1603
  %v1639 = vmul.f32 %v1391, %v1603
  %v1640 = vmul.f32 %v1392, %v1603
  %v1641 = vmul.f32 %v1393, %v1603
  %v1642 = vmul.f32 %v1394, %v1603
  %v1643 = vmul.f32 %v1395, %v1603
  %v1644 = vmul.f32 %v1396, %v1603
  %v1645 = vmul.f32 %v1397, %v1603
  %v1646 = vmul.f32 %v1398, %v1603
  %v1647 = vmul.f32 %v1399, %v1603
  %v1648 = vmul.f32 %v1400, %v1603
  %v1649 = vmul.f32 %v1401, %v1603
  %v1650 = vmul.f32 %v1402, %v1603
  %v1651 = vmul.f32 %v1403, %v1603
  %v1652 = vmul.f32 %v1404, %v1608
  %v1653 = vmul.f32 %v1405, %v1608
  %v1654 = vmul.f32 %v1406, %v1608
  %v1655 = vmul.f32 %v1407, %v1608
  %v1656 = vmul.f32 %v1408, %v1608
  %v1657 = vmul.f32 %v1409, %v1608
  %v1658 = vmul.f32 %v1410, %v1608
  %v1659 = vmul.f32 %v1411, %v1608
  %v1660 = vmul.f32 %v1412, %v1608
  %v1661 = vmul.f32 %v1413, %v1608
  %v1662 = vmul.f32 %v1414, %v1608
  %v1663 = vmul.f32 %v1415, %v1608
  %v1664 = vmul.f32 %v1416, %v1608
  %v1665 = vmul.f32 %v1417, %v1608
  %v1666 = vld [vmem:[%s4] sm:$0xff]
  %v1667 = vld [vmem:[%s4 + $0x8] sm:$0xff]
  %v1668 = vld [vmem:[%s4 + $0x10] sm:$0xff]
  %v1669 = vld [vmem:[%s4 + $0x18] sm:$0xff]
  %1671 = vset.pattern.permute.xlu0 0
  %1672 = vperm.xlu0 %1671, %v1666
  %v1673 = vpop.permute.xlu0 %1672
  %1676 = vset.pattern.permute.xlu0 0
  %1677 = vperm.xlu0 %1676, %v1667
  %v1678 = vpop.permute.xlu0 %1677
  %1681 = vset.pattern.permute.xlu0 0
  %1682 = vperm.xlu0 %1681, %v1668
  %v1683 = vpop.permute.xlu0 %1682
  %1686 = vset.pattern.permute.xlu0 0
  %1687 = vperm.xlu0 %1686, %v1669
  %v1688 = vpop.permute.xlu0 %1687
  %v1690 = vadd.f32 %v1610, %v1673
  %v1691 = vadd.f32 %v1611, %v1673
  %v1692 = vadd.f32 %v1612, %v1673
  %v1693 = vadd.f32 %v1613, %v1673
  %v1694 = vadd.f32 %v1614, %v1673
  %v1695 = vadd.f32 %v1615, %v1673
  %v1696 = vadd.f32 %v1616, %v1673
  %v1697 = vadd.f32 %v1617, %v1673
  %v1698 = vadd.f32 %v1618, %v1673
  %v1699 = vadd.f32 %v1619, %v1673
  %v1700 = vadd.f32 %v1620, %v1673
  %v1701 = vadd.f32 %v1621, %v1673
  %v1702 = vadd.f32 %v1622, %v1673
  %v1703 = vadd.f32 %v1623, %v1673
  %v1704 = vadd.f32 %v1624, %v1678
  %v1705 = vadd.f32 %v1625, %v1678
  %v1706 = vadd.f32 %v1626, %v1678
  %v1707 = vadd.f32 %v1627, %v1678
  %v1708 = vadd.f32 %v1628, %v1678
  %v1709 = vadd.f32 %v1629, %v1678
  %v1710 = vadd.f32 %v1630, %v1678
  %v1711 = vadd.f32 %v1631, %v1678
  %v1712 = vadd.f32 %v1632, %v1678
  %v1713 = vadd.f32 %v1633, %v1678
  %v1714 = vadd.f32 %v1634, %v1678
  %v1715 = vadd.f32 %v1635, %v1678
  %v1716 = vadd.f32 %v1636, %v1678
  %v1717 = vadd.f32 %v1637, %v1678
  %v1718 = vadd.f32 %v1638, %v1683
  %v1719 = vadd.f32 %v1639, %v1683
  %v1720 = vadd.f32 %v1640, %v1683
  %v1721 = vadd.f32 %v1641, %v1683
  %v1722 = vadd.f32 %v1642, %v1683
  %v1723 = vadd.f32 %v1643, %v1683
  %v1724 = vadd.f32 %v1644, %v1683
  %v1725 = vadd.f32 %v1645, %v1683
  %v1726 = vadd.f32 %v1646, %v1683
  %v1727 = vadd.f32 %v1647, %v1683
  %v1728 = vadd.f32 %v1648, %v1683
  %v1729 = vadd.f32 %v1649, %v1683
  %v1730 = vadd.f32 %v1650, %v1683
  %v1731 = vadd.f32 %v1651, %v1683
  %v1732 = vadd.f32 %v1652, %v1688
  %v1733 = vadd.f32 %v1653, %v1688
  %v1734 = vadd.f32 %v1654, %v1688
  %v1735 = vadd.f32 %v1655, %v1688
  %v1736 = vadd.f32 %v1656, %v1688
  %v1737 = vadd.f32 %v1657, %v1688
  %v1738 = vadd.f32 %v1658, %v1688
  %v1739 = vadd.f32 %v1659, %v1688
  %v1740 = vadd.f32 %v1660, %v1688
  %v1741 = vadd.f32 %v1661, %v1688
  %v1742 = vadd.f32 %v1662, %v1688
  %v1743 = vadd.f32 %v1663, %v1688
  %v1744 = vadd.f32 %v1664, %v1688
  %v1745 = vadd.f32 %v1665, %v1688
  %v1746 = vmax.f32 %v1690, 0.0
  %v1747 = vmax.f32 %v1691, 0.0
  %v1748 = vmax.f32 %v1692, 0.0
  %v1749 = vmax.f32 %v1693, 0.0
  %v1750 = vmax.f32 %v1694, 0.0
  %v1751 = vmax.f32 %v1695, 0.0
  %v1752 = vmax.f32 %v1696, 0.0
  %v1753 = vmax.f32 %v1697, 0.0
  %v1754 = vmax.f32 %v1698, 0.0
  %v1755 = vmax.f32 %v1699, 0.0
  %v1756 = vmax.f32 %v1700, 0.0
  %v1757 = vmax.f32 %v1701, 0.0
  %v1758 = vmax.f32 %v1702, 0.0
  %v1759 = vmax.f32 %v1703, 0.0
  %v1760 = vmax.f32 %v1704, 0.0
  %v1761 = vmax.f32 %v1705, 0.0
  %v1762 = vmax.f32 %v1706, 0.0
  %v1763 = vmax.f32 %v1707, 0.0
  %v1764 = vmax.f32 %v1708, 0.0
  %v1765 = vmax.f32 %v1709, 0.0
  %v1766 = vmax.f32 %v1710, 0.0
  %v1767 = vmax.f32 %v1711, 0.0
  %v1768 = vmax.f32 %v1712, 0.0
  %v1769 = vmax.f32 %v1713, 0.0
  %v1770 = vmax.f32 %v1714, 0.0
  %v1771 = vmax.f32 %v1715, 0.0
  %v1772 = vmax.f32 %v1716, 0.0
  %v1773 = vmax.f32 %v1717, 0.0
  %v1774 = vmax.f32 %v1718, 0.0
  %v1775 = vmax.f32 %v1719, 0.0
  %v1776 = vmax.f32 %v1720, 0.0
  %v1777 = vmax.f32 %v1721, 0.0
  %v1778 = vmax.f32 %v1722, 0.0
  %v1779 = vmax.f32 %v1723, 0.0
  %v1780 = vmax.f32 %v1724, 0.0
  %v1781 = vmax.f32 %v1725, 0.0
  %v1782 = vmax.f32 %v1726, 0.0
  %v1783 = vmax.f32 %v1727, 0.0
  %v1784 = vmax.f32 %v1728, 0.0
  %v1785 = vmax.f32 %v1729, 0.0
  %v1786 = vmax.f32 %v1730, 0.0
  %v1787 = vmax.f32 %v1731, 0.0
  %v1788 = vmax.f32 %v1732, 0.0
  %v1789 = vmax.f32 %v1733, 0.0
  %v1790 = vmax.f32 %v1734, 0.0
  %v1791 = vmax.f32 %v1735, 0.0
  %v1792 = vmax.f32 %v1736, 0.0
  %v1793 = vmax.f32 %v1737, 0.0
  %v1794 = vmax.f32 %v1738, 0.0
  %v1795 = vmax.f32 %v1739, 0.0
  %v1796 = vmax.f32 %v1740, 0.0
  %v1797 = vmax.f32 %v1741, 0.0
  %v1798 = vmax.f32 %v1742, 0.0
  %v1799 = vmax.f32 %v1743, 0.0
  %v1800 = vmax.f32 %v1744, 0.0
  %v1801 = vmax.f32 %v1745, 0.0
  %1802 = vst [vmem:[%s8] sm:$0xff] %v1746
  %1803 = vst [vmem:[%s8 + $0x8] sm:$0xff] %v1747
  %1804 = vst [vmem:[%s8 + $0x10] sm:$0xff] %v1748
  %1805 = vst [vmem:[%s8 + $0x18] sm:$0xff] %v1749
  %1806 = vst [vmem:[%s8 + $0x20] sm:$0xff] %v1750
  %1807 = vst [vmem:[%s8 + $0x28] sm:$0xff] %v1751
  %1808 = vst [vmem:[%s8 + $0x30] sm:$0xff] %v1752
  %1809 = vst [vmem:[%s8 + $0x38] sm:$0xff] %v1753
  %1810 = vst [vmem:[%s8 + $0x40] sm:$0xff] %v1754
  %1811 = vst [vmem:[%s8 + $0x48] sm:$0xff] %v1755
  %1812 = vst [vmem:[%s8 + $0x50] sm:$0xff] %v1756
  %1813 = vst [vmem:[%s8 + $0x58] sm:$0xff] %v1757
  %1814 = vst [vmem:[%s8 + $0x60] sm:$0xff] %v1758
  %1815 = vst [vmem:[%s8 + $0x68] sm:$0xff] %v1759
  %1816 = vst [vmem:[%s8 + $0x70] sm:$0xff] %v1760
  %1817 = vst [vmem:[%s8 + $0x78] sm:$0xff] %v1761
  %1818 = vst [vmem:[%s8 + $0x80] sm:$0xff] %v1762
  %1819 = vst [vmem:[%s8 + $0x88] sm:$0xff] %v1763
  %1820 = vst [vmem:[%s8 + $0x90] sm:$0xff] %v1764
  %1821 = vst [vmem:[%s8 + $0x98] sm:$0xff] %v1765
  %1822 = vst [vmem:[%s8 + $0xa0] sm:$0xff] %v1766
  %1823 = vst [vmem:[%s8 + $0xa8] sm:$0xff] %v1767
  %1824 = vst [vmem:[%s8 + $0xb0] sm:$0xff] %v1768
  %1825 = vst [vmem:[%s8 + $0xb8] sm:$0xff] %v1769
  %1826 = vst [vmem:[%s8 + $0xc0] sm:$0xff] %v1770
  %1827 = vst [vmem:[%s8 + $0xc8] sm:$0xff] %v1771
  %1828 = vst [vmem:[%s8 + $0xd0] sm:$0xff] %v1772
  %1829 = vst [vmem:[%s8 + $0xd8] sm:$0xff] %v1773
  %1830 = vst [vmem:[%s8 + $0xe0] sm:$0xff] %v1774
  %1831 = vst [vmem:[%s8 + $0xe8] sm:$0xff] %v1775
  %1832 = vst [vmem:[%s8 + $0xf0] sm:$0xff] %v1776
  %1833 = vst [vmem:[%s8 + $0xf8] sm:$0xff] %v1777
  %1834 = vst [vmem:[%s8 + $0x100] sm:$0xff] %v1778
  %1835 = vst [vmem:[%s8 + $0x108] sm:$0xff] %v1779
  %1836 = vst [vmem:[%s8 + $0x110] sm:$0xff] %v1780
  %1837 = vst [vmem:[%s8 + $0x118] sm:$0xff] %v1781
  %1838 = vst [vmem:[%s8 + $0x120] sm:$0xff] %v1782
  %1839 = vst [vmem:[%s8 + $0x128] sm:$0xff] %v1783
  %1840 = vst [vmem:[%s8 + $0x130] sm:$0xff] %v1784
  %1841 = vst [vmem:[%s8 + $0x138] sm:$0xff] %v1785
  %1842 = vst [vmem:[%s8 + $0x140] sm:$0xff] %v1786
  %1843 = vst [vmem:[%s8 + $0x148] sm:$0xff] %v1787
  %1844 = vst [vmem:[%s8 + $0x150] sm:$0xff] %v1788
  %1845 = vst [vmem:[%s8 + $0x158] sm:$0xff] %v1789
  %1846 = vst [vmem:[%s8 + $0x160] sm:$0xff] %v1790
  %1847 = vst [vmem:[%s8 + $0x168] sm:$0xff] %v1791
  %1848 = vst [vmem:[%s8 + $0x170] sm:$0xff] %v1792
  %1849 = vst [vmem:[%s8 + $0x178] sm:$0xff] %v1793
  %1850 = vst [vmem:[%s8 + $0x180] sm:$0xff] %v1794
  %1851 = vst [vmem:[%s8 + $0x188] sm:$0xff] %v1795
  %1852 = vst [vmem:[%s8 + $0x190] sm:$0xff] %v1796
  %1853 = vst [vmem:[%s8 + $0x198] sm:$0xff] %v1797
  %1854 = vst [vmem:[%s8 + $0x1a0] sm:$0xff] %v1798
  %1855 = vst [vmem:[%s8 + $0x1a8] sm:$0xff] %v1799
  %1856 = vst [vmem:[%s8 + $0x1b0] sm:$0xff] %v1800
  %1857 = vst [vmem:[%s8 + $0x1b8] sm:$0xff] %v1801
  // Predicated region
  $region34: #{mark_forward.5} parent=0 // pred_check
    _
  $region35: #{mark_forward.5} parent=0 // pred_check_branch
    %1859 = sbr.rel (0) target = $region37
  $region36: #{mark_forward.5} parent=0 // pred_region
    _
  $region37: #{mark_forward.5} parent=0 // pred_fallthru
    _
  // Predicated region
  $region38: #{mark_forward.5} parent=0 // pred_check
    _
  $region39: #{mark_forward.5} parent=0 // pred_check_branch
    %1861 = sbr.rel (0) target = $region41
  $region40: #{mark_forward.5} parent=0 // pred_region
    _
  $region41: #{mark_forward.5} parent=0 // pred_fallthru
    _
  // Predicated region
  $region42: #{mark_forward.5} parent=0 // pred_check
    _
  $region43: #{mark_forward.5} parent=0 // pred_check_branch
    %1863 = sbr.rel (0) target = $region45
  $region44: #{mark_forward.5} parent=0 // pred_region
    _
  $region45: #{mark_forward.5} parent=0 // pred_fallthru
    _
  // Predicated region
  $region46: #{mark_forward.5} parent=0 // pred_check
    _
  $region47: #{mark_forward.5} parent=0 // pred_check_branch
    %1865 = sbr.rel (0) target = $region49
  $region48: #{mark_forward.5} parent=0 // pred_region
    _
  $region49: #{mark_forward.5} parent=0 // pred_fallthru
    _

// kernel: mark_forward.6
$region0: #{mark_forward.6}
  #allocation0 [shape = 'u32[]', space=smem, size = 0x4, offset = 0x4, fixed_abs, tag = 'smem constant byte address 0x4 - core index']
  #allocation1 [shape = 'u32[72,128]{1,0:T(1,128)}', space=vmem, size = 0x9000, scoped, tag = 'internal scratch']
  #allocation2 [shape = 'f32[32,384]{1,0:T(8,128)}', space=vmem, size = 0xc000, scoped, tag = 'scratch operand']
  %s0 = inlined_call_operand.vmem [shape: bf16[288,384], index: 0, kind: input, shape index: {}]
  %s1 = inlined_call_operand.vmem [shape: bf16[32,288], index: 1, kind: input, shape index: {}]
  %s2 = inlined_call_operand.vmem [shape: f32[32,1], index: 2, kind: input, shape index: {}]
  %s3 = inlined_call_operand.vmem [shape: f32[32,1], index: 3, kind: input, shape index: {}]
  %s4 = inlined_call_operand.vmem [shape: f32[32,1], index: 4, kind: input, shape index: {}]
  %s5 = inlined_call_operand.vmem [shape: f32[32,384], index: 5, kind: output, shape index: {}]
  %s6 = sld [smem:[#allocation0]]
  $region30: #{mark_forward.6} parent=0
    _
  %s8 = ssub.s32 1, %s6
  %s9 = scalar_select 0, %s8, %s6
  // Predicated region
  $region2: #{mark_forward.6} parent=0 // pred_check
    _
  $region3: #{mark_forward.6} parent=0 // pred_check_branch
    %11 = sbr.rel (0) target = $region5
  $region4: #{mark_forward.6} parent=0 // pred_region
    _
  $region5: #{mark_forward.6} parent=0 // pred_fallthru
    _
  // Predicated region
  $region6: #{mark_forward.6} parent=0 // pred_check
    _
  $region7: #{mark_forward.6} parent=0 // pred_check_branch
    %13 = sbr.rel (0) target = $region9
  $region8: #{mark_forward.6} parent=0 // pred_region
    _
  $region9: #{mark_forward.6} parent=0 // pred_fallthru
    _
  // Predicated region
  $region10: #{mark_forward.6} parent=0 // pred_check
    _
  $region11: #{mark_forward.6} parent=0 // pred_check_branch
    %15 = sbr.rel (0) target = $region13
  $region12: #{mark_forward.6} parent=0 // pred_region
    _
  $region13: #{mark_forward.6} parent=0 // pred_fallthru
    _
  // Predicated region
  $region14: #{mark_forward.6} parent=0 // pred_check
    _
  $region15: #{mark_forward.6} parent=0 // pred_check_branch
    %17 = sbr.rel (0) target = $region17
  $region16: #{mark_forward.6} parent=0 // pred_region
    _
  $region17: #{mark_forward.6} parent=0 // pred_fallthru
    _
  // Predicated region
  $region18: #{mark_forward.6} parent=0 // pred_check
    _
  $region19: #{mark_forward.6} parent=0 // pred_check_branch
    %19 = sbr.rel (0) target = $region21
  $region20: #{mark_forward.6} parent=0 // pred_region
    _
  $region21: #{mark_forward.6} parent=0 // pred_fallthru
    _
  %v21 = vld [vmem:[%s1] sm:$0xff]
  %v22 = vld [vmem:[%s1 + $0x8] sm:$0xf]
  %v23 = vld [vmem:[%s1 + $0xc] sm:$0xff]
  %v24 = vld [vmem:[%s1 + $0x14] sm:$0xf]
  %v25 = vld [vmem:[%s1 + $0x18] sm:$0xff]
  %v26 = vld [vmem:[%s1 + $0x20] sm:$0xf]
  %v27 = vld [vmem:[%s1 + $0x24] sm:$0xff]
  %v28 = vld [vmem:[%s1 + $0x2c] sm:$0xf]
  %v29 = vld [vmem:[%s0] sm:$0xff]
  %v30 = vld [vmem:[%s0 + $0x8] sm:$0xf]
  %v31 = vld [vmem:[%s0 + $0xc] sm:$0xff]
  %v32 = vld [vmem:[%s0 + $0x14] sm:$0xf]
  %v33 = vld [vmem:[%s0 + $0x18] sm:$0xff]
  %v34 = vld [vmem:[%s0 + $0x20] sm:$0xf]
  %v35 = vld [vmem:[%s0 + $0x24] sm:$0xff]
  %v36 = vld [vmem:[%s0 + $0x2c] sm:$0xf]
  %v37 = vld [vmem:[%s0 + $0x30] sm:$0xff]
  %v38 = vld [vmem:[%s0 + $0x38] sm:$0xf]
  %v39 = vld [vmem:[%s0 + $0x3c] sm:$0xff]
  %v40 = vld [vmem:[%s0 + $0x44] sm:$0xf]
  %v41 = vld [vmem:[%s0 + $0x48] sm:$0xff]
  %v42 = vld [vmem:[%s0 + $0x50] sm:$0xf]
  %v43 = vld [vmem:[%s0 + $0x54] sm:$0xff]
  %v44 = vld [vmem:[%s0 + $0x5c] sm:$0xf]
  %v45 = vld [vmem:[%s0 + $0x60] sm:$0xff]
  %v46 = vld [vmem:[%s0 + $0x68] sm:$0xf]
  %v47 = vld [vmem:[%s0 + $0x6c] sm:$0xff]
  %v48 = vld [vmem:[%s0 + $0x74] sm:$0xf]
  %v49 = vld [vmem:[%s0 + $0x78] sm:$0xff]
  %v50 = vld [vmem:[%s0 + $0x80] sm:$0xf]
  %v51 = vld [vmem:[%s0 + $0x84] sm:$0xff]
  %v52 = vld [vmem:[%s0 + $0x8c] sm:$0xf]
  %v53 = vld [vmem:[%s0 + $0x90] sm:$0xff]
  %v54 = vld [vmem:[%s0 + $0x98] sm:$0xf]
  %v55 = vld [vmem:[%s0 + $0x9c] sm:$0xff]
  %v56 = vld [vmem:[%s0 + $0xa4] sm:$0xf]
  %v57 = vld [vmem:[%s0 + $0xa8] sm:$0xff]
  %v58 = vld [vmem:[%s0 + $0xb0] sm:$0xf]
  %v59 = vld [vmem:[%s0 + $0xb4] sm:$0xff]
  %v60 = vld [vmem:[%s0 + $0xbc] sm:$0xf]
  %v61 = vld [vmem:[%s0 + $0xc0] sm:$0xff]
  %v62 = vld [vmem:[%s0 + $0xc8] sm:$0xf]
  %v63 = vld [vmem:[%s0 + $0xcc] sm:$0xff]
  %v64 = vld [vmem:[%s0 + $0xd4] sm:$0xf]
  %v65 = vld [vmem:[%s0 + $0xd8] sm:$0xff]
  %v66 = vld [vmem:[%s0 + $0xe0] sm:$0xf]
  %v67 = vld [vmem:[%s0 + $0xe4] sm:$0xff]
  %v68 = vld [vmem:[%s0 + $0xec] sm:$0xf]
  %v69 = vld [vmem:[%s0 + $0xf0] sm:$0xff]
  %v70 = vld [vmem:[%s0 + $0xf8] sm:$0xf]
  %v71 = vld [vmem:[%s0 + $0xfc] sm:$0xff]
  %v72 = vld [vmem:[%s0 + $0x104] sm:$0xf]
  %v73 = vld [vmem:[%s0 + $0x108] sm:$0xff]
  %v74 = vld [vmem:[%s0 + $0x110] sm:$0xf]
  %v75 = vld [vmem:[%s0 + $0x114] sm:$0xff]
  %v76 = vld [vmem:[%s0 + $0x11c] sm:$0xf]
  %v77 = vld [vmem:[%s0 + $0x120] sm:$0xff]
  %v78 = vld [vmem:[%s0 + $0x128] sm:$0xf]
  %v79 = vld [vmem:[%s0 + $0x12c] sm:$0xff]
  %v80 = vld [vmem:[%s0 + $0x134] sm:$0xf]
  %v81 = vld [vmem:[%s0 + $0x138] sm:$0xff]
  %v82 = vld [vmem:[%s0 + $0x140] sm:$0xf]
  %v83 = vld [vmem:[%s0 + $0x144] sm:$0xff]
  %v84 = vld [vmem:[%s0 + $0x14c] sm:$0xf]
  %v85 = vld [vmem:[%s0 + $0x150] sm:$0xff]
  %v86 = vld [vmem:[%s0 + $0x158] sm:$0xf]
  %v87 = vld [vmem:[%s0 + $0x15c] sm:$0xff]
  %v88 = vld [vmem:[%s0 + $0x164] sm:$0xf]
  %v89 = vld [vmem:[%s0 + $0x168] sm:$0xff]
  %v90 = vld [vmem:[%s0 + $0x170] sm:$0xf]
  %v91 = vld [vmem:[%s0 + $0x174] sm:$0xff]
  %v92 = vld [vmem:[%s0 + $0x17c] sm:$0xf]
  %v93 = vld [vmem:[%s0 + $0x180] sm:$0xff]
  %v94 = vld [vmem:[%s0 + $0x188] sm:$0xf]
  %v95 = vld [vmem:[%s0 + $0x18c] sm:$0xff]
  %v96 = vld [vmem:[%s0 + $0x194] sm:$0xf]
  %v97 = vld [vmem:[%s0 + $0x198] sm:$0xff]
  %v98 = vld [vmem:[%s0 + $0x1a0] sm:$0xf]
  %v99 = vld [vmem:[%s0 + $0x1a4] sm:$0xff]
  %v100 = vld [vmem:[%s0 + $0x1ac] sm:$0xf]
  %v101 = vld [vmem:[%s2] sm:$0xff]
  %v102 = vld [vmem:[%s2 + $0x8] sm:$0xff]
  %v103 = vld [vmem:[%s2 + $0x10] sm:$0xff]
  %v104 = vld [vmem:[%s2 + $0x18] sm:$0xff]
  %106 = vset.pattern.permute.xlu0 0
  %107 = vperm.xlu0 %106, %v101
  %v108 = vpop.permute.xlu0 %107
  %111 = vset.pattern.permute.xlu0 0
  %112 = vperm.xlu0 %111, %v102
  %v113 = vpop.permute.xlu0 %112
  %116 = vset.pattern.permute.xlu0 0
  %117 = vperm.xlu0 %116, %v103
  %v118 = vpop.permute.xlu0 %117
  %121 = vset.pattern.permute.xlu0 0
  %122 = vperm.xlu0 %121, %v104
  %v123 = vpop.permute.xlu0 %122
  %v133 = vunpack.c.l.b16 %v21
  %v134 = vunpack.c.h.b16 %v21
  %v135 = vunpack.c.l.b16 %v22
  %v136 = vunpack.c.l.b16 %v23
  %v137 = vunpack.c.h.b16 %v23
  %v138 = vunpack.c.l.b16 %v24
  %v139 = vunpack.c.l.b16 %v25
  %v140 = vunpack.c.h.b16 %v25
  %v141 = vunpack.c.l.b16 %v26
  %v142 = vunpack.c.l.b16 %v27
  %v143 = vunpack.c.h.b16 %v27
  %v144 = vunpack.c.l.b16 %v28
  %v145 = vpack.c.b16 %v136, %v133
  %v146 = vpack.c.b16 %v137, %v134
  %v147 = vpack.c.b16 %v138, %v135
  %v148 = vpack.c.b16 %v142, %v139
  %v149 = vpack.c.b16 %v143, %v140
  %v150 = vpack.c.b16 %v144, %v141
  %v227 = vunpack.c.l.b16 %v29
  %v228 = vunpack.c.h.b16 %v29
  %v229 = vunpack.c.l.b16 %v30
  %v230 = vunpack.c.l.b16 %v31
  %v231 = vunpack.c.h.b16 %v31
  %v232 = vunpack.c.l.b16 %v32
  %v233 = vunpack.c.l.b16 %v33
  %v234 = vunpack.c.h.b16 %v33
  %v235 = vunpack.c.l.b16 %v34
  %v236 = vunpack.c.l.b16 %v35
  %v237 = vunpack.c.h.b16 %v35
  %v238 = vunpack.c.l.b16 %v36
  %v239 = vunpack.c.l.b16 %v37
  %v240 = vunpack.c.h.b16 %v37
  %v241 = vunpack.c.l.b16 %v38
  %v242 = vunpack.c.l.b16 %v39
  %v243 = vunpack.c.h.b16 %v39
  %v244 = vunpack.c.l.b16 %v40
  %v245 = vunpack.c.l.b16 %v41
  %v246 = vunpack.c.h.b16 %v41
  %v247 = vunpack.c.l.b16 %v42
  %v248 = vunpack.c.l.b16 %v43
  %v249 = vunpack.c.h.b16 %v43
  %v250 = vunpack.c.l.b16 %v44
  %v251 = vunpack.c.l.b16 %v45
  %v252 = vunpack.c.h.b16 %v45
  %v253 = vunpack.c.l.b16 %v46
  %v254 = vunpack.c.l.b16 %v47
  %v255 = vunpack.c.h.b16 %v47
  %v256 = vunpack.c.l.b16 %v48
  %v257 = vunpack.c.l.b16 %v49
  %v258 = vunpack.c.h.b16 %v49
  %v259 = vunpack.c.l.b16 %v50
  %v260 = vunpack.c.l.b16 %v51
  %v261 = vunpack.c.h.b16 %v51
  %v262 = vunpack.c.l.b16 %v52
  %v263 = vunpack.c.l.b16 %v53
  %v264 = vunpack.c.h.b16 %v53
  %v265 = vunpack.c.l.b16 %v54
  %v266 = vunpack.c.l.b16 %v55
  %v267 = vunpack.c.h.b16 %v55
  %v268 = vunpack.c.l.b16 %v56
  %v269 = vunpack.c.l.b16 %v57
  %v270 = vunpack.c.h.b16 %v57
  %v271 = vunpack.c.l.b16 %v58
  %v272 = vunpack.c.l.b16 %v59
  %v273 = vunpack.c.h.b16 %v59
  %v274 = vunpack.c.l.b16 %v60
  %v275 = vunpack.c.l.b16 %v61
  %v276 = vunpack.c.h.b16 %v61
  %v277 = vunpack.c.l.b16 %v62
  %v278 = vunpack.c.l.b16 %v63
  %v279 = vunpack.c.h.b16 %v63
  %v280 = vunpack.c.l.b16 %v64
  %v281 = vunpack.c.l.b16 %v65
  %v282 = vunpack.c.h.b16 %v65
  %v283 = vunpack.c.l.b16 %v66
  %v284 = vunpack.c.l.b16 %v67
  %v285 = vunpack.c.h.b16 %v67
  %v286 = vunpack.c.l.b16 %v68
  %v287 = vunpack.c.l.b16 %v69
  %v288 = vunpack.c.h.b16 %v69
  %v289 = vunpack.c.l.b16 %v70
  %v290 = vunpack.c.l.b16 %v71
  %v291 = vunpack.c.h.b16 %v71
  %v292 = vunpack.c.l.b16 %v72
  %v293 = vunpack.c.l.b16 %v73
  %v294 = vunpack.c.h.b16 %v73
  %v295 = vunpack.c.l.b16 %v74
  %v296 = vunpack.c.l.b16 %v75
  %v297 = vunpack.c.h.b16 %v75
  %v298 = vunpack.c.l.b16 %v76
  %v299 = vunpack.c.l.b16 %v77
  %v300 = vunpack.c.h.b16 %v77
  %v301 = vunpack.c.l.b16 %v78
  %v302 = vunpack.c.l.b16 %v79
  %v303 = vunpack.c.h.b16 %v79
  %v304 = vunpack.c.l.b16 %v80
  %v305 = vunpack.c.l.b16 %v81
  %v306 = vunpack.c.h.b16 %v81
  %v307 = vunpack.c.l.b16 %v82
  %v308 = vunpack.c.l.b16 %v83
  %v309 = vunpack.c.h.b16 %v83
  %v310 = vunpack.c.l.b16 %v84
  %v311 = vunpack.c.l.b16 %v85
  %v312 = vunpack.c.h.b16 %v85
  %v313 = vunpack.c.l.b16 %v86
  %v314 = vunpack.c.l.b16 %v87
  %v315 = vunpack.c.h.b16 %v87
  %v316 = vunpack.c.l.b16 %v88
  %v317 = vunpack.c.l.b16 %v89
  %v318 = vunpack.c.h.b16 %v89
  %v319 = vunpack.c.l.b16 %v90
  %v320 = vunpack.c.l.b16 %v91
  %v321 = vunpack.c.h.b16 %v91
  %v322 = vunpack.c.l.b16 %v92
  %v323 = vunpack.c.l.b16 %v93
  %v324 = vunpack.c.h.b16 %v93
  %v325 = vunpack.c.l.b16 %v94
  %v326 = vunpack.c.l.b16 %v95
  %v327 = vunpack.c.h.b16 %v95
  %v328 = vunpack.c.l.b16 %v96
  %v329 = vunpack.c.l.b16 %v97
  %v330 = vunpack.c.h.b16 %v97
  %v331 = vunpack.c.l.b16 %v98
  %v332 = vunpack.c.l.b16 %v99
  %v333 = vunpack.c.h.b16 %v99
  %v334 = vunpack.c.l.b16 %v100
  %v335 = vpack.c.b16 %v230, %v227
  %v336 = vpack.c.b16 %v231, %v228
  %v337 = vpack.c.b16 %v232, %v229
  %v338 = vpack.c.b16 %v236, %v233
  %v339 = vpack.c.b16 %v237, %v234
  %v340 = vpack.c.b16 %v238, %v235
  %v341 = vpack.c.b16 %v242, %v239
  %v342 = vpack.c.b16 %v243, %v240
  %v343 = vpack.c.b16 %v244, %v241
  %v344 = vpack.c.b16 %v248, %v245
  %v345 = vpack.c.b16 %v249, %v246
  %v346 = vpack.c.b16 %v250, %v247
  %v347 = vpack.c.b16 %v254, %v251
  %v348 = vpack.c.b16 %v255, %v252
  %v349 = vpack.c.b16 %v256, %v253
  %v350 = vpack.c.b16 %v260, %v257
  %v351 = vpack.c.b16 %v261, %v258
  %v352 = vpack.c.b16 %v262, %v259
  %v353 = vpack.c.b16 %v266, %v263
  %v354 = vpack.c.b16 %v267, %v264
  %v355 = vpack.c.b16 %v268, %v265
  %v356 = vpack.c.b16 %v272, %v269
  %v357 = vpack.c.b16 %v273, %v270
  %v358 = vpack.c.b16 %v274, %v271
  %v359 = vpack.c.b16 %v278, %v275
  %v360 = vpack.c.b16 %v279, %v276
  %v361 = vpack.c.b16 %v280, %v277
  %v362 = vpack.c.b16 %v284, %v281
  %v363 = vpack.c.b16 %v285, %v282
  %v364 = vpack.c.b16 %v286, %v283
  %v365 = vpack.c.b16 %v290, %v287
  %v366 = vpack.c.b16 %v291, %v288
  %v367 = vpack.c.b16 %v292, %v289
  %v368 = vpack.c.b16 %v296, %v293
  %v369 = vpack.c.b16 %v297, %v294
  %v370 = vpack.c.b16 %v298, %v295
  %v371 = vpack.c.b16 %v302, %v299
  %v372 = vpack.c.b16 %v303, %v300
  %v373 = vpack.c.b16 %v304, %v301
  %v374 = vpack.c.b16 %v308, %v305
  %v375 = vpack.c.b16 %v309, %v306
  %v376 = vpack.c.b16 %v310, %v307
  %v377 = vpack.c.b16 %v314, %v311
  %v378 = vpack.c.b16 %v315, %v312
  %v379 = vpack.c.b16 %v316, %v313
  %v380 = vpack.c.b16 %v320, %v317
  %v381 = vpack.c.b16 %v321, %v318
  %v382 = vpack.c.b16 %v322, %v319
  %v383 = vpack.c.b16 %v326, %v323
  %v384 = vpack.c.b16 %v327, %v324
  %v385 = vpack.c.b16 %v328, %v325
  %v386 = vpack.c.b16 %v332, %v329
  %v387 = vpack.c.b16 %v333, %v330
  %v388 = vpack.c.b16 %v334, %v331
  %vm443 = vcmask 261120
  %v445 = vsel %vm443, %v147, 0
  %v448 = vsel %vm443, %v150, 0
  %450 = vmatpush.bf16.msra.mxu0 %v356
  %451 = vmatpush.bf16.msra.mxu0 %v353
  %452 = vmatpush.bf16.msra.mxu0 %v350
  %453 = vmatpush.bf16.msra.mxu0 %v347
  %454 = vmatpush.bf16.msra.mxu0 %v344
  %455 = vmatpush.bf16.msra.mxu0 %v341
  %456 = vmatpush.bf16.msra.mxu0 %v338
  %457 = vmatpush.bf16.msra.mxu0 %v335
  %458 = vmatmul.bf16.gmra.mxu0 %v145
  %v459 = vpop.f32.mrf.mxu0
  %v460 = vadd.f32 %v108, %v459
  %v461 = vpop.f32.mrf.mxu0
  %v462 = vadd.f32 %v113, %v461
  %463 = vmatmul.bf16.gmra.mxu0 %v148
  %v464 = vpop.f32.mrf.mxu0
  %v465 = vadd.f32 %v118, %v464
  %v466 = vpop.f32.mrf.mxu0
  %v467 = vadd.f32 %v123, %v466
  %468 = vdwg.mxu0
  %469 = vmatpush.bf16.msra.mxu0 %v380
  %470 = vmatpush.bf16.msra.mxu0 %v377
  %471 = vmatpush.bf16.msra.mxu0 %v374
  %472 = vmatpush.bf16.msra.mxu0 %v371
  %473 = vmatpush.bf16.msra.mxu0 %v368
  %474 = vmatpush.bf16.msra.mxu0 %v365
  %475 = vmatpush.bf16.msra.mxu0 %v362
  %476 = vmatpush.bf16.msra.mxu0 %v359
  %477 = vmatmul.bf16.gmra.mxu0 %v146
  %v478 = vpop.f32.mrf.mxu0
  %v479 = vadd.f32 %v460, %v478
  %v480 = vpop.f32.mrf.mxu0
  %v481 = vadd.f32 %v462, %v480
  %482 = vmatmul.bf16.gmra.mxu0 %v149
  %v483 = vpop.f32.mrf.mxu0
  %v484 = vadd.f32 %v465, %v483
  %v485 = vpop.f32.mrf.mxu0
  %v486 = vadd.f32 %v467, %v485
  %487 = vdwg.mxu0
  %488 = vmatpush.bf16.msra.mxu0 0
  %489 = vmatpush.bf16.msra.mxu0 0
  %490 = vmatpush.bf16.msra.mxu0 0
  %491 = vmatpush.bf16.msra.mxu0 0
  %492 = vmatpush.bf16.msra.mxu0 0
  %493 = vmatpush.bf16.msra.mxu0 0
  %494 = vmatpush.bf16.msra.mxu0 %v386
  %495 = vmatpush.bf16.msra.mxu0 %v383
  %496 = vmatmul.bf16.gmra.mxu0 %v445
  %v497 = vpop.f32.mrf.mxu0
  %v498 = vadd.f32 %v479, %v497
  %v499 = vpop.f32.mrf.mxu0
  %v500 = vadd.f32 %v481, %v499
  %501 = vmatmul.bf16.gmra.mxu0 %v448
  %v502 = vpop.f32.mrf.mxu0
  %v503 = vadd.f32 %v484, %v502
  %v504 = vpop.f32.mrf.mxu0
  %v505 = vadd.f32 %v486, %v504
  %506 = vdwg.mxu0
  %507 = vmatpush.bf16.msra.mxu0 %v357
  %508 = vmatpush.bf16.msra.mxu0 %v354
  %509 = vmatpush.bf16.msra.mxu0 %v351
  %510 = vmatpush.bf16.msra.mxu0 %v348
  %511 = vmatpush.bf16.msra.mxu0 %v345
  %512 = vmatpush.bf16.msra.mxu0 %v342
  %513 = vmatpush.bf16.msra.mxu0 %v339
  %514 = vmatpush.bf16.msra.mxu0 %v336
  %515 = vmatmul.bf16.gmra.mxu0 %v145
  %v516 = vpop.f32.mrf.mxu0
  %v517 = vadd.f32 %v108, %v516
  %v518 = vpop.f32.mrf.mxu0
  %v519 = vadd.f32 %v113, %v518
  %520 = vmatmul.bf16.gmra.mxu0 %v148
  %v521 = vpop.f32.mrf.mxu0
  %v522 = vadd.f32 %v118, %v521
  %v523 = vpop.f32.mrf.mxu0
  %v524 = vadd.f32 %v123, %v523
  %525 = vdwg.mxu0
  %526 = vmatpush.bf16.msra.mxu0 %v381
  %527 = vmatpush.bf16.msra.mxu0 %v378
  %528 = vmatpush.bf16.msra.mxu0 %v375
  %529 = vmatpush.bf16.msra.mxu0 %v372
  %530 = vmatpush.bf16.msra.mxu0 %v369
  %531 = vmatpush.bf16.msra.mxu0 %v366
  %532 = vmatpush.bf16.msra.mxu0 %v363
  %533 = vmatpush.bf16.msra.mxu0 %v360
  %534 = vmatmul.bf16.gmra.mxu0 %v146
  %v535 = vpop.f32.mrf.mxu0
  %v536 = vadd.f32 %v517, %v535
  %v537 = vpop.f32.mrf.mxu0
  %v538 = vadd.f32 %v519, %v537
  %539 = vmatmul.bf16.gmra.mxu0 %v149
  %v540 = vpop.f32.mrf.mxu0
  %v541 = vadd.f32 %v522, %v540
  %v542 = vpop.f32.mrf.mxu0
  %v543 = vadd.f32 %v524, %v542
  %544 = vdwg.mxu0
  %545 = vmatpush.bf16.msra.mxu0 0
  %546 = vmatpush.bf16.msra.mxu0 0
  %547 = vmatpush.bf16.msra.mxu0 0
  %548 = vmatpush.bf16.msra.mxu0 0
  %549 = vmatpush.bf16.msra.mxu0 0
  %550 = vmatpush.bf16.msra.mxu0 0
  %551 = vmatpush.bf16.msra.mxu0 %v387
  %552 = vmatpush.bf16.msra.mxu0 %v384
  %553 = vmatmul.bf16.gmra.mxu0 %v445
  %v554 = vpop.f32.mrf.mxu0
  %v555 = vadd.f32 %v536, %v554
  %v556 = vpop.f32.mrf.mxu0
  %v557 = vadd.f32 %v538, %v556
  %558 = vmatmul.bf16.gmra.mxu0 %v448
  %v559 = vpop.f32.mrf.mxu0
  %v560 = vadd.f32 %v541, %v559
  %v561 = vpop.f32.mrf.mxu0
  %v562 = vadd.f32 %v543, %v561
  %563 = vdwg.mxu0
  %564 = vmatpush.bf16.msra.mxu0 %v358
  %565 = vmatpush.bf16.msra.mxu0 %v355
  %566 = vmatpush.bf16.msra.mxu0 %v352
  %567 = vmatpush.bf16.msra.mxu0 %v349
  %568 = vmatpush.bf16.msra.mxu0 %v346
  %569 = vmatpush.bf16.msra.mxu0 %v343
  %570 = vmatpush.bf16.msra.mxu0 %v340
  %571 = vmatpush.bf16.msra.mxu0 %v337
  %572 = vmatmul.bf16.gmra.mxu0 %v145
  %v573 = vpop.f32.mrf.mxu0
  %v574 = vadd.f32 %v108, %v573
  %v575 = vpop.f32.mrf.mxu0
  %v576 = vadd.f32 %v113, %v575
  %577 = vmatmul.bf16.gmra.mxu0 %v148
  %v578 = vpop.f32.mrf.mxu0
  %v579 = vadd.f32 %v118, %v578
  %v580 = vpop.f32.mrf.mxu0
  %v581 = vadd.f32 %v123, %v580
  %582 = vdwg.mxu0
  %583 = vmatpush.bf16.msra.mxu0 %v382
  %584 = vmatpush.bf16.msra.mxu0 %v379
  %585 = vmatpush.bf16.msra.mxu0 %v376
  %586 = vmatpush.bf16.msra.mxu0 %v373
  %587 = vmatpush.bf16.msra.mxu0 %v370
  %588 = vmatpush.bf16.msra.mxu0 %v367
  %589 = vmatpush.bf16.msra.mxu0 %v364
  %590 = vmatpush.bf16.msra.mxu0 %v361
  %591 = vmatmul.bf16.gmra.mxu0 %v146
  %v592 = vpop.f32.mrf.mxu0
  %v593 = vadd.f32 %v574, %v592
  %v594 = vpop.f32.mrf.mxu0
  %v595 = vadd.f32 %v576, %v594
  %596 = vmatmul.bf16.gmra.mxu0 %v149
  %v597 = vpop.f32.mrf.mxu0
  %v598 = vadd.f32 %v579, %v597
  %v599 = vpop.f32.mrf.mxu0
  %v600 = vadd.f32 %v581, %v599
  %601 = vdwg.mxu0
  %602 = vmatpush.bf16.msra.mxu0 0
  %603 = vmatpush.bf16.msra.mxu0 0
  %604 = vmatpush.bf16.msra.mxu0 0
  %605 = vmatpush.bf16.msra.mxu0 0
  %606 = vmatpush.bf16.msra.mxu0 0
  %607 = vmatpush.bf16.msra.mxu0 0
  %608 = vmatpush.bf16.msra.mxu0 %v388
  %609 = vmatpush.bf16.msra.mxu0 %v385
  %610 = vmatmul.bf16.gmra.mxu0 %v445
  %v611 = vpop.f32.mrf.mxu0
  %v612 = vadd.f32 %v593, %v611
  %v613 = vpop.f32.mrf.mxu0
  %v614 = vadd.f32 %v595, %v613
  %615 = vmatmul.bf16.gmra.mxu0 %v448
  %v616 = vpop.f32.mrf.mxu0
  %v617 = vadd.f32 %v598, %v616
  %v618 = vpop.f32.mrf.mxu0
  %v619 = vadd.f32 %v600, %v618
  %620 = vdwg.mxu0
  %621 = vst [vmem:[#allocation2] sm:$0xff] %v498
  %622 = vst [vmem:[#allocation2 + $0x8] sm:$0xff] %v555
  %623 = vst [vmem:[#allocation2 + $0x10] sm:$0xff] %v612
  %624 = vst [vmem:[#allocation2 + $0x18] sm:$0xff] %v500
  %625 = vst [vmem:[#allocation2 + $0x20] sm:$0xff] %v557
  %626 = vst [vmem:[#allocation2 + $0x28] sm:$0xff] %v614
  %627 = vst [vmem:[#allocation2 + $0x30] sm:$0xff] %v503
  %628 = vst [vmem:[#allocation2 + $0x38] sm:$0xff] %v560
  %629 = vst [vmem:[#allocation2 + $0x40] sm:$0xff] %v617
  %630 = vst [vmem:[#allocation2 + $0x48] sm:$0xff] %v505
  %631 = vst [vmem:[#allocation2 + $0x50] sm:$0xff] %v562
  %632 = vst [vmem:[#allocation2 + $0x58] sm:$0xff] %v619
  %v633 = vlaneseq
  %v634 = vand.u32 %v633, 127
  %v635 = vadd.s32 %v634, 128
  %v636 = vadd.s32 %v634, 256
  %vm637 = vcmp.lt.s32.totalorder %v634, 288
  %vm638 = vcmp.lt.s32.totalorder %v635, 288
  %vm639 = vcmp.lt.s32.totalorder %v636, 288
  %v640 = vld [vmem:[#allocation2] sm:$0xff]
  %v641 = vld [vmem:[#allocation2 + $0x8] sm:$0xff]
  %v642 = vld [vmem:[#allocation2 + $0x10] sm:$0xff]
  %v643 = vld [vmem:[#allocation2 + $0x18] sm:$0xff]
  %v644 = vld [vmem:[#allocation2 + $0x20] sm:$0xff]
  %v645 = vld [vmem:[#allocation2 + $0x28] sm:$0xff]
  %v646 = vld [vmem:[#allocation2 + $0x30] sm:$0xff]
  %v647 = vld [vmem:[#allocation2 + $0x38] sm:$0xff]
  %v648 = vld [vmem:[#allocation2 + $0x40] sm:$0xff]
  %v649 = vld [vmem:[#allocation2 + $0x48] sm:$0xff]
  %v650 = vld [vmem:[#allocation2 + $0x50] sm:$0xff]
  %v651 = vld [vmem:[#allocation2 + $0x58] sm:$0xff]
  %v652 = vsel %vm637, %v640, 0.0
  %v653 = vsel %vm638, %v641, 0.0
  %v654 = vsel %vm639, %v642, 0.0
  %v655 = vsel %vm637, %v643, 0.0
  %v656 = vsel %vm638, %v644, 0.0
  %v657 = vsel %vm639, %v645, 0.0
  %v658 = vsel %vm637, %v646, 0.0
  %v659 = vsel %vm638, %v647, 0.0
  %v660 = vsel %vm639, %v648, 0.0
  %v661 = vsel %vm637, %v649, 0.0
  %v662 = vsel %vm638, %v650, 0.0
  %v663 = vsel %vm639, %v651, 0.0
  %v664 = vadd.f32 %v652, %v653
  %v665 = vadd.f32 %v664, %v654
  %666 = vadd.xlane.f32.xlu0 %v665
  %v667 = vpop.xlane.xlu0 %666
  %v668 = vadd.f32 %v655, %v656
  %v669 = vadd.f32 %v668, %v657
  %670 = vadd.xlane.f32.xlu0 %v669
  %v671 = vpop.xlane.xlu0 %670
  %v672 = vadd.f32 %v658, %v659
  %v673 = vadd.f32 %v672, %v660
  %674 = vadd.xlane.f32.xlu0 %v673
  %v675 = vpop.xlane.xlu0 %674
  %v676 = vadd.f32 %v661, %v662
  %v677 = vadd.f32 %v676, %v663
  %678 = vadd.xlane.f32.xlu0 %v677
  %v679 = vpop.xlane.xlu0 %678
  %v680 = vrcp.pop 288.0
  %v681 = vmul.f32 288.0, %v680
  %v682 = vsub.f32 1.0, %v681
  %v683 = vmul.f32 %v680, %v682
  %v684 = vadd.f32 %v680, %v683
  %vm685 = vweird.f32 %v680
  %v686 = vsel %vm685, %v680, %v684
  %v687 = vmul.f32 %v667, %v686
  %v688 = vmul.f32 %v671, %v686
  %v689 = vmul.f32 %v675, %v686
  %v690 = vmul.f32 %v679, %v686
  %v691 = vsub.f32 %v640, %v687
  %v692 = vsub.f32 %v641, %v687
  %v693 = vsub.f32 %v642, %v687
  %v694 = vsub.f32 %v643, %v688
  %v695 = vsub.f32 %v644, %v688
  %v696 = vsub.f32 %v645, %v688
  %v697 = vsub.f32 %v646, %v689
  %v698 = vsub.f32 %v647, %v689
  %v699 = vsub.f32 %v648, %v689
  %v700 = vsub.f32 %v649, %v690
  %v701 = vsub.f32 %v650, %v690
  %v702 = vsub.f32 %v651, %v690
  %v703 = vsel %vm637, %v691, 0.0
  %v704 = vsel %vm638, %v692, 0.0
  %v705 = vsel %vm639, %v693, 0.0
  %v706 = vsel %vm637, %v694, 0.0
  %v707 = vsel %vm638, %v695, 0.0
  %v708 = vsel %vm639, %v696, 0.0
  %v709 = vsel %vm637, %v697, 0.0
  %v710 = vsel %vm638, %v698, 0.0
  %v711 = vsel %vm639, %v699, 0.0
  %v712 = vsel %vm637, %v700, 0.0
  %v713 = vsel %vm638, %v701, 0.0
  %v714 = vsel %vm639, %v702, 0.0
  %v715 = vmul.f32 %v703, %v703
  %v716 = vmul.f32 %v704, %v704
  %v717 = vmul.f32 %v705, %v705
  %v718 = vmul.f32 %v706, %v706
  %v719 = vmul.f32 %v707, %v707
  %v720 = vmul.f32 %v708, %v708
  %v721 = vmul.f32 %v709, %v709
  %v722 = vmul.f32 %v710, %v710
  %v723 = vmul.f32 %v711, %v711
  %v724 = vmul.f32 %v712, %v712
  %v725 = vmul.f32 %v713, %v713
  %v726 = vmul.f32 %v714, %v714
  %v727 = vadd.f32 %v715, %v716
  %v728 = vadd.f32 %v727, %v717
  %729 = vadd.xlane.f32.xlu0 %v728
  %v730 = vpop.xlane.xlu0 %729
  %v731 = vadd.f32 %v718, %v719
  %v732 = vadd.f32 %v731, %v720
  %733 = vadd.xlane.f32.xlu0 %v732
  %v734 = vpop.xlane.xlu0 %733
  %v735 = vadd.f32 %v721, %v722
  %v736 = vadd.f32 %v735, %v723
  %737 = vadd.xlane.f32.xlu0 %v736
  %v738 = vpop.xlane.xlu0 %737
  %v739 = vadd.f32 %v724, %v725
  %v740 = vadd.f32 %v739, %v726
  %741 = vadd.xlane.f32.xlu0 %v740
  %v742 = vpop.xlane.xlu0 %741
  %v743 = vmul.f32 %v730, %v686
  %v744 = vmul.f32 %v734, %v686
  %v745 = vmul.f32 %v738, %v686
  %v746 = vmul.f32 %v742, %v686
  %v747 = vld [vmem:[%s3] sm:$0xff]
  %v748 = vld [vmem:[%s3 + $0x8] sm:$0xff]
  %v749 = vld [vmem:[%s3 + $0x10] sm:$0xff]
  %v750 = vld [vmem:[%s3 + $0x18] sm:$0xff]
  %v751 = vadd.f32 %v743, 1e-05
  %v752 = vadd.f32 %v744, 1e-05
  %v753 = vadd.f32 %v745, 1e-05
  %v754 = vadd.f32 %v746, 1e-05
  %v755 = vrsqrt.pop %v751
  %v756 = vmul.f32 %v755, %v751
  %v757 = vmul.f32 %v756, %v755
  %v758 = vmul.f32 0.5, %v757
  %v759 = vsub.f32 1.5, %v758
  %v760 = vmul.f32 %v755, %v759
  %vm761 = vweird.f32 %v751
  %vm762 = vweird.f32 %v755
  %vm763 = vmor %vm761, %vm762
  %v764 = vsel %vm763, %v755, %v760
  %v765 = vrsqrt.pop %v752
  %v766 = vmul.f32 %v765, %v752
  %v767 = vmul.f32 %v766, %v765
  %v768 = vmul.f32 0.5, %v767
  %v769 = vsub.f32 1.5, %v768
  %v770 = vmul.f32 %v765, %v769
  %vm771 = vweird.f32 %v752
  %vm772 = vweird.f32 %v765
  %vm773 = vmor %vm771, %vm772
  %v774 = vsel %vm773, %v765, %v770
  %v775 = vrsqrt.pop %v753
  %v776 = vmul.f32 %v775, %v753
  %v777 = vmul.f32 %v776, %v775
  %v778 = vmul.f32 0.5, %v777
  %v779 = vsub.f32 1.5, %v778
  %v780 = vmul.f32 %v775, %v779
  %vm781 = vweird.f32 %v753
  %vm782 = vweird.f32 %v775
  %vm783 = vmor %vm781, %vm782
  %v784 = vsel %vm783, %v775, %v780
  %v785 = vrsqrt.pop %v754
  %v786 = vmul.f32 %v785, %v754
  %v787 = vmul.f32 %v786, %v785
  %v788 = vmul.f32 0.5, %v787
  %v789 = vsub.f32 1.5, %v788
  %v790 = vmul.f32 %v785, %v789
  %vm791 = vweird.f32 %v754
  %vm792 = vweird.f32 %v785
  %vm793 = vmor %vm791, %vm792
  %v794 = vsel %vm793, %v785, %v790
  %v795 = vmul.f32 %v747, %v764
  %v796 = vmul.f32 %v748, %v774
  %v797 = vmul.f32 %v749, %v784
  %v798 = vmul.f32 %v750, %v794
  %800 = vset.pattern.permute.xlu0 0
  %801 = vperm.xlu0 %800, %v795
  %v802 = vpop.permute.xlu0 %801
  %805 = vset.pattern.permute.xlu0 0
  %806 = vperm.xlu0 %805, %v796
  %v807 = vpop.permute.xlu0 %806
  %810 = vset.pattern.permute.xlu0 0
  %811 = vperm.xlu0 %810, %v797
  %v812 = vpop.permute.xlu0 %811
  %815 = vset.pattern.permute.xlu0 0
  %816 = vperm.xlu0 %815, %v798
  %v817 = vpop.permute.xlu0 %816
  %v819 = vmul.f32 %v703, %v802
  %v820 = vmul.f32 %v704, %v802
  %v821 = vmul.f32 %v705, %v802
  %v822 = vmul.f32 %v706, %v807
  %v823 = vmul.f32 %v707, %v807
  %v824 = vmul.f32 %v708, %v807
  %v825 = vmul.f32 %v709, %v812
  %v826 = vmul.f32 %v710, %v812
  %v827 = vmul.f32 %v711, %v812
  %v828 = vmul.f32 %v712, %v817
  %v829 = vmul.f32 %v713, %v817
  %v830 = vmul.f32 %v714, %v817
  %v831 = vld [vmem:[%s4] sm:$0xff]
  %v832 = vld [vmem:[%s4 + $0x8] sm:$0xff]
  %v833 = vld [vmem:[%s4 + $0x10] sm:$0xff]
  %v834 = vld [vmem:[%s4 + $0x18] sm:$0xff]
  %836 = vset.pattern.permute.xlu0 0
  %837 = vperm.xlu0 %836, %v831
  %v838 = vpop.permute.xlu0 %837
  %841 = vset.pattern.permute.xlu0 0
  %842 = vperm.xlu0 %841, %v832
  %v843 = vpop.permute.xlu0 %842
  %846 = vset.pattern.permute.xlu0 0
  %847 = vperm.xlu0 %846, %v833
  %v848 = vpop.permute.xlu0 %847
  %851 = vset.pattern.permute.xlu0 0
  %852 = vperm.xlu0 %851, %v834
  %v853 = vpop.permute.xlu0 %852
  %v855 = vadd.f32 %v819, %v838
  %v856 = vadd.f32 %v820, %v838
  %v857 = vadd.f32 %v821, %v838
  %v858 = vadd.f32 %v822, %v843
  %v859 = vadd.f32 %v823, %v843
  %v860 = vadd.f32 %v824, %v843
  %v861 = vadd.f32 %v825, %v848
  %v862 = vadd.f32 %v826, %v848
  %v863 = vadd.f32 %v827, %v848
  %v864 = vadd.f32 %v828, %v853
  %v865 = vadd.f32 %v829, %v853
  %v866 = vadd.f32 %v830, %v853
  %v867 = vmax.f32 %v855, 0.0
  %v868 = vmax.f32 %v856, 0.0
  %v869 = vmax.f32 %v857, 0.0
  %v870 = vmax.f32 %v858, 0.0
  %v871 = vmax.f32 %v859, 0.0
  %v872 = vmax.f32 %v860, 0.0
  %v873 = vmax.f32 %v861, 0.0
  %v874 = vmax.f32 %v862, 0.0
  %v875 = vmax.f32 %v863, 0.0
  %v876 = vmax.f32 %v864, 0.0
  %v877 = vmax.f32 %v865, 0.0
  %v878 = vmax.f32 %v866, 0.0
  %879 = vst [vmem:[%s5] sm:$0xff] %v867
  %880 = vst [vmem:[%s5 + $0x8] sm:$0xff] %v868
  %881 = vst [vmem:[%s5 + $0x10] sm:$0xff] %v869
  %882 = vst [vmem:[%s5 + $0x18] sm:$0xff] %v870
  %883 = vst [vmem:[%s5 + $0x20] sm:$0xff] %v871
  %884 = vst [vmem:[%s5 + $0x28] sm:$0xff] %v872
  %885 = vst [vmem:[%s5 + $0x30] sm:$0xff] %v873
  %886 = vst [vmem:[%s5 + $0x38] sm:$0xff] %v874
  %887 = vst [vmem:[%s5 + $0x40] sm:$0xff] %v875
  %888 = vst [vmem:[%s5 + $0x48] sm:$0xff] %v876
  %889 = vst [vmem:[%s5 + $0x50] sm:$0xff] %v877
  %890 = vst [vmem:[%s5 + $0x58] sm:$0xff] %v878
  // Predicated region
  $region22: #{mark_forward.6} parent=0 // pred_check
    _
  $region23: #{mark_forward.6} parent=0 // pred_check_branch
    %892 = sbr.rel (0) target = $region25
  $region24: #{mark_forward.6} parent=0 // pred_region
    _
  $region25: #{mark_forward.6} parent=0 // pred_fallthru
    _
  // Predicated region
  $region26: #{mark_forward.6} parent=0 // pred_check
    _
  $region27: #{mark_forward.6} parent=0 // pred_check_branch
    %894 = sbr.rel (0) target = $region29
  $region28: #{mark_forward.6} parent=0 // pred_region
    _
  $region29: #{mark_forward.6} parent=0 // pred_fallthru
    _

// kernel: mark_forward.7
$region0: #{mark_forward.7}
  #allocation0 [shape = 'u32[]', space=smem, size = 0x4, offset = 0x4, fixed_abs, tag = 'smem constant byte address 0x4 - core index']
  #allocation1 [shape = 'u32[72,128]{1,0:T(1,128)}', space=vmem, size = 0x9000, scoped, tag = 'internal scratch']
  %s0 = inlined_call_operand.vmem [shape: bf16[2,1152], index: 0, kind: input, shape index: {}]
  %s1 = inlined_call_operand.vmem [shape: bf16[1152,32], index: 1, kind: input, shape index: {}]
  %s2 = inlined_call_operand.vmem [shape: f32[1,32], index: 2, kind: input, shape index: {}]
  %s3 = inlined_call_operand.vmem [shape: bf16[32,24], index: 3, kind: input, shape index: {}]
  %s4 = inlined_call_operand.vmem [shape: f32[1,24], index: 4, kind: input, shape index: {}]
  %s5 = inlined_call_operand.vmem [shape: f32[2,24], index: 5, kind: output, shape index: {}]
  %s6 = sld [smem:[#allocation0]]
  $region30: #{mark_forward.7} parent=0
    _
  %s8 = ssub.s32 1, %s6
  %s9 = scalar_select 0, %s8, %s6
  // Predicated region
  $region2: #{mark_forward.7} parent=0 // pred_check
    _
  $region3: #{mark_forward.7} parent=0 // pred_check_branch
    %11 = sbr.rel (0) target = $region5
  $region4: #{mark_forward.7} parent=0 // pred_region
    _
  $region5: #{mark_forward.7} parent=0 // pred_fallthru
    _
  // Predicated region
  $region6: #{mark_forward.7} parent=0 // pred_check
    _
  $region7: #{mark_forward.7} parent=0 // pred_check_branch
    %13 = sbr.rel (0) target = $region9
  $region8: #{mark_forward.7} parent=0 // pred_region
    _
  $region9: #{mark_forward.7} parent=0 // pred_fallthru
    _
  // Predicated region
  $region10: #{mark_forward.7} parent=0 // pred_check
    _
  $region11: #{mark_forward.7} parent=0 // pred_check_branch
    %15 = sbr.rel (0) target = $region13
  $region12: #{mark_forward.7} parent=0 // pred_region
    _
  $region13: #{mark_forward.7} parent=0 // pred_fallthru
    _
  // Predicated region
  $region14: #{mark_forward.7} parent=0 // pred_check
    _
  $region15: #{mark_forward.7} parent=0 // pred_check_branch
    %17 = sbr.rel (0) target = $region17
  $region16: #{mark_forward.7} parent=0 // pred_region
    _
  $region17: #{mark_forward.7} parent=0 // pred_fallthru
    _
  // Predicated region
  $region18: #{mark_forward.7} parent=0 // pred_check
    _
  $region19: #{mark_forward.7} parent=0 // pred_check_branch
    %19 = sbr.rel (0) target = $region21
  $region20: #{mark_forward.7} parent=0 // pred_region
    _
  $region21: #{mark_forward.7} parent=0 // pred_fallthru
    _
  %v21 = vld [vmem:[%s0] sm:$0xff]
  %v22 = vld [vmem:[%s0 + $0x8] sm:$0x1]
  %v23 = vld [vmem:[%s1] sm:$0xf]
  %v24 = vld [vmem:[%s1 + $0x4] sm:$0xf]
  %v25 = vld [vmem:[%s1 + $0x8] sm:$0xf]
  %v26 = vld [vmem:[%s1 + $0xc] sm:$0xf]
  %v27 = vld [vmem:[%s1 + $0x10] sm:$0xf]
  %v28 = vld [vmem:[%s1 + $0x14] sm:$0xf]
  %v29 = vld [vmem:[%s1 + $0x18] sm:$0xf]
  %v30 = vld [vmem:[%s1 + $0x1c] sm:$0xf]
  %v31 = vld [vmem:[%s1 + $0x20] sm:$0xf]
  %v32 = vld [vmem:[%s1 + $0x24] sm:$0xf]
  %v33 = vld [vmem:[%s1 + $0x28] sm:$0xf]
  %v34 = vld [vmem:[%s1 + $0x2c] sm:$0xf]
  %v35 = vld [vmem:[%s1 + $0x30] sm:$0xf]
  %v36 = vld [vmem:[%s1 + $0x34] sm:$0xf]
  %v37 = vld [vmem:[%s1 + $0x38] sm:$0xf]
  %v38 = vld [vmem:[%s1 + $0x3c] sm:$0xf]
  %v39 = vld [vmem:[%s1 + $0x40] sm:$0xf]
  %v40 = vld [vmem:[%s1 + $0x44] sm:$0xf]
  %v41 = vld [vmem:[%s1 + $0x48] sm:$0xf]
  %v42 = vld [vmem:[%s1 + $0x4c] sm:$0xf]
  %v43 = vld [vmem:[%s1 + $0x50] sm:$0xf]
  %v44 = vld [vmem:[%s1 + $0x54] sm:$0xf]
  %v45 = vld [vmem:[%s1 + $0x58] sm:$0xf]
  %v46 = vld [vmem:[%s1 + $0x5c] sm:$0xf]
  %v47 = vld [vmem:[%s1 + $0x60] sm:$0xf]
  %v48 = vld [vmem:[%s1 + $0x64] sm:$0xf]
  %v49 = vld [vmem:[%s1 + $0x68] sm:$0xf]
  %v50 = vld [vmem:[%s1 + $0x6c] sm:$0xf]
  %v51 = vld [vmem:[%s1 + $0x70] sm:$0xf]
  %v52 = vld [vmem:[%s1 + $0x74] sm:$0xf]
  %v53 = vld [vmem:[%s1 + $0x78] sm:$0xf]
  %v54 = vld [vmem:[%s1 + $0x7c] sm:$0xf]
  %v55 = vld [vmem:[%s1 + $0x80] sm:$0xf]
  %v56 = vld [vmem:[%s1 + $0x84] sm:$0xf]
  %v57 = vld [vmem:[%s1 + $0x88] sm:$0xf]
  %v58 = vld [vmem:[%s1 + $0x8c] sm:$0xf]
  %v59 = vld [vmem:[%s1 + $0x90] sm:$0xf]
  %v60 = vld [vmem:[%s1 + $0x94] sm:$0xf]
  %v61 = vld [vmem:[%s1 + $0x98] sm:$0xf]
  %v62 = vld [vmem:[%s1 + $0x9c] sm:$0xf]
  %v63 = vld [vmem:[%s1 + $0xa0] sm:$0xf]
  %v64 = vld [vmem:[%s1 + $0xa4] sm:$0xf]
  %v65 = vld [vmem:[%s1 + $0xa8] sm:$0xf]
  %v66 = vld [vmem:[%s1 + $0xac] sm:$0xf]
  %v67 = vld [vmem:[%s1 + $0xb0] sm:$0xf]
  %v68 = vld [vmem:[%s1 + $0xb4] sm:$0xf]
  %v69 = vld [vmem:[%s1 + $0xb8] sm:$0xf]
  %v70 = vld [vmem:[%s1 + $0xbc] sm:$0xf]
  %v71 = vld [vmem:[%s1 + $0xc0] sm:$0xf]
  %v72 = vld [vmem:[%s1 + $0xc4] sm:$0xf]
  %v73 = vld [vmem:[%s1 + $0xc8] sm:$0xf]
  %v74 = vld [vmem:[%s1 + $0xcc] sm:$0xf]
  %v75 = vld [vmem:[%s1 + $0xd0] sm:$0xf]
  %v76 = vld [vmem:[%s1 + $0xd4] sm:$0xf]
  %v77 = vld [vmem:[%s1 + $0xd8] sm:$0xf]
  %v78 = vld [vmem:[%s1 + $0xdc] sm:$0xf]
  %v79 = vld [vmem:[%s1 + $0xe0] sm:$0xf]
  %v80 = vld [vmem:[%s1 + $0xe4] sm:$0xf]
  %v81 = vld [vmem:[%s1 + $0xe8] sm:$0xf]
  %v82 = vld [vmem:[%s1 + $0xec] sm:$0xf]
  %v83 = vld [vmem:[%s1 + $0xf0] sm:$0xf]
  %v84 = vld [vmem:[%s1 + $0xf4] sm:$0xf]
  %v85 = vld [vmem:[%s1 + $0xf8] sm:$0xf]
  %v86 = vld [vmem:[%s1 + $0xfc] sm:$0xf]
  %v87 = vld [vmem:[%s1 + $0x100] sm:$0xf]
  %v88 = vld [vmem:[%s1 + $0x104] sm:$0xf]
  %v89 = vld [vmem:[%s1 + $0x108] sm:$0xf]
  %v90 = vld [vmem:[%s1 + $0x10c] sm:$0xf]
  %v91 = vld [vmem:[%s1 + $0x110] sm:$0xf]
  %v92 = vld [vmem:[%s1 + $0x114] sm:$0xf]
  %v93 = vld [vmem:[%s1 + $0x118] sm:$0xf]
  %v94 = vld [vmem:[%s1 + $0x11c] sm:$0xf]
  %v95 = vld [vmem:[%s1 + $0x120] sm:$0xf]
  %v96 = vld [vmem:[%s1 + $0x124] sm:$0xf]
  %v97 = vld [vmem:[%s1 + $0x128] sm:$0xf]
  %v98 = vld [vmem:[%s1 + $0x12c] sm:$0xf]
  %v99 = vld [vmem:[%s1 + $0x130] sm:$0xf]
  %v100 = vld [vmem:[%s1 + $0x134] sm:$0xf]
  %v101 = vld [vmem:[%s1 + $0x138] sm:$0xf]
  %v102 = vld [vmem:[%s1 + $0x13c] sm:$0xf]
  %v103 = vld [vmem:[%s1 + $0x140] sm:$0xf]
  %v104 = vld [vmem:[%s1 + $0x144] sm:$0xf]
  %v105 = vld [vmem:[%s1 + $0x148] sm:$0xf]
  %v106 = vld [vmem:[%s1 + $0x14c] sm:$0xf]
  %v107 = vld [vmem:[%s1 + $0x150] sm:$0xf]
  %v108 = vld [vmem:[%s1 + $0x154] sm:$0xf]
  %v109 = vld [vmem:[%s1 + $0x158] sm:$0xf]
  %v110 = vld [vmem:[%s1 + $0x15c] sm:$0xf]
  %v111 = vld [vmem:[%s1 + $0x160] sm:$0xf]
  %v112 = vld [vmem:[%s1 + $0x164] sm:$0xf]
  %v113 = vld [vmem:[%s1 + $0x168] sm:$0xf]
  %v114 = vld [vmem:[%s1 + $0x16c] sm:$0xf]
  %v115 = vld [vmem:[%s1 + $0x170] sm:$0xf]
  %v116 = vld [vmem:[%s1 + $0x174] sm:$0xf]
  %v117 = vld [vmem:[%s1 + $0x178] sm:$0xf]
  %v118 = vld [vmem:[%s1 + $0x17c] sm:$0xf]
  %v119 = vld [vmem:[%s1 + $0x180] sm:$0xf]
  %v120 = vld [vmem:[%s1 + $0x184] sm:$0xf]
  %v121 = vld [vmem:[%s1 + $0x188] sm:$0xf]
  %v122 = vld [vmem:[%s1 + $0x18c] sm:$0xf]
  %v123 = vld [vmem:[%s1 + $0x190] sm:$0xf]
  %v124 = vld [vmem:[%s1 + $0x194] sm:$0xf]
  %v125 = vld [vmem:[%s1 + $0x198] sm:$0xf]
  %v126 = vld [vmem:[%s1 + $0x19c] sm:$0xf]
  %v127 = vld [vmem:[%s1 + $0x1a0] sm:$0xf]
  %v128 = vld [vmem:[%s1 + $0x1a4] sm:$0xf]
  %v129 = vld [vmem:[%s1 + $0x1a8] sm:$0xf]
  %v130 = vld [vmem:[%s1 + $0x1ac] sm:$0xf]
  %v131 = vld [vmem:[%s1 + $0x1b0] sm:$0xf]
  %v132 = vld [vmem:[%s1 + $0x1b4] sm:$0xf]
  %v133 = vld [vmem:[%s1 + $0x1b8] sm:$0xf]
  %v134 = vld [vmem:[%s1 + $0x1bc] sm:$0xf]
  %v135 = vld [vmem:[%s1 + $0x1c0] sm:$0xf]
  %v136 = vld [vmem:[%s1 + $0x1c4] sm:$0xf]
  %v137 = vld [vmem:[%s1 + $0x1c8] sm:$0xf]
  %v138 = vld [vmem:[%s1 + $0x1cc] sm:$0xf]
  %v139 = vld [vmem:[%s1 + $0x1d0] sm:$0xf]
  %v140 = vld [vmem:[%s1 + $0x1d4] sm:$0xf]
  %v141 = vld [vmem:[%s1 + $0x1d8] sm:$0xf]
  %v142 = vld [vmem:[%s1 + $0x1dc] sm:$0xf]
  %v143 = vld [vmem:[%s1 + $0x1e0] sm:$0xf]
  %v144 = vld [vmem:[%s1 + $0x1e4] sm:$0xf]
  %v145 = vld [vmem:[%s1 + $0x1e8] sm:$0xf]
  %v146 = vld [vmem:[%s1 + $0x1ec] sm:$0xf]
  %v147 = vld [vmem:[%s1 + $0x1f0] sm:$0xf]
  %v148 = vld [vmem:[%s1 + $0x1f4] sm:$0xf]
  %v149 = vld [vmem:[%s1 + $0x1f8] sm:$0xf]
  %v150 = vld [vmem:[%s1 + $0x1fc] sm:$0xf]
  %v151 = vld [vmem:[%s1 + $0x200] sm:$0xf]
  %v152 = vld [vmem:[%s1 + $0x204] sm:$0xf]
  %v153 = vld [vmem:[%s1 + $0x208] sm:$0xf]
  %v154 = vld [vmem:[%s1 + $0x20c] sm:$0xf]
  %v155 = vld [vmem:[%s1 + $0x210] sm:$0xf]
  %v156 = vld [vmem:[%s1 + $0x214] sm:$0xf]
  %v157 = vld [vmem:[%s1 + $0x218] sm:$0xf]
  %v158 = vld [vmem:[%s1 + $0x21c] sm:$0xf]
  %v159 = vld [vmem:[%s1 + $0x220] sm:$0xf]
  %v160 = vld [vmem:[%s1 + $0x224] sm:$0xf]
  %v161 = vld [vmem:[%s1 + $0x228] sm:$0xf]
  %v162 = vld [vmem:[%s1 + $0x22c] sm:$0xf]
  %v163 = vld [vmem:[%s1 + $0x230] sm:$0xf]
  %v164 = vld [vmem:[%s1 + $0x234] sm:$0xf]
  %v165 = vld [vmem:[%s1 + $0x238] sm:$0xf]
  %v166 = vld [vmem:[%s1 + $0x23c] sm:$0xf]
  %v167 = vld [vmem:[%s2] sm:$0x1]
  %v169 = vperm.slane %v167, 0
  %172 = vst [vmem:[#allocation1] ss:$9 sm:$0xff] %v21
  %v173 = vld [vmem:[#allocation1] sm:$0xff]
  %v174 = vld [vmem:[#allocation1 + $0x9] sm:$0xff]
  %v175 = vld [vmem:[#allocation1 + $0x12] sm:$0xff]
  %v176 = vld [vmem:[#allocation1 + $0x1b] sm:$0xff]
  %v177 = vld [vmem:[#allocation1 + $0x24] sm:$0xff]
  %v178 = vld [vmem:[#allocation1 + $0x2d] sm:$0xff]
  %v179 = vld [vmem:[#allocation1 + $0x36] sm:$0xff]
  %v180 = vld [vmem:[#allocation1 + $0x3f] sm:$0xff]
  %182 = vst [vmem:[#allocation1] ss:$9 sm:$0xff] %v22
  %v183 = vld [vmem:[#allocation1] sm:$0xff]
  %v337 = vunpack.c.l.b16 %v23
  %v338 = vunpack.c.l.b16 %v24
  %v339 = vunpack.c.l.b16 %v25
  %v340 = vunpack.c.l.b16 %v26
  %v341 = vunpack.c.l.b16 %v27
  %v342 = vunpack.c.l.b16 %v28
  %v343 = vunpack.c.l.b16 %v29
  %v344 = vunpack.c.l.b16 %v30
  %v345 = vunpack.c.l.b16 %v31
  %v346 = vunpack.c.l.b16 %v32
  %v347 = vunpack.c.l.b16 %v33
  %v348 = vunpack.c.l.b16 %v34
  %v349 = vunpack.c.l.b16 %v35
  %v350 = vunpack.c.l.b16 %v36
  %v351 = vunpack.c.l.b16 %v37
  %v352 = vunpack.c.l.b16 %v38
  %v353 = vunpack.c.l.b16 %v39
  %v354 = vunpack.c.l.b16 %v40
  %v355 = vunpack.c.l.b16 %v41
  %v356 = vunpack.c.l.b16 %v42
  %v357 = vunpack.c.l.b16 %v43
  %v358 = vunpack.c.l.b16 %v44
  %v359 = vunpack.c.l.b16 %v45
  %v360 = vunpack.c.l.b16 %v46
  %v361 = vunpack.c.l.b16 %v47
  %v362 = vunpack.c.l.b16 %v48
  %v363 = vunpack.c.l.b16 %v49
  %v364 = vunpack.c.l.b16 %v50
  %v365 = vunpack.c.l.b16 %v51
  %v366 = vunpack.c.l.b16 %v52
  %v367 = vunpack.c.l.b16 %v53
  %v368 = vunpack.c.l.b16 %v54
  %v369 = vunpack.c.l.b16 %v55
  %v370 = vunpack.c.l.b16 %v56
  %v371 = vunpack.c.l.b16 %v57
  %v372 = vunpack.c.l.b16 %v58
  %v373 = vunpack.c.l.b16 %v59
  %v374 = vunpack.c.l.b16 %v60
  %v375 = vunpack.c.l.b16 %v61
  %v376 = vunpack.c.l.b16 %v62
  %v377 = vunpack.c.l.b16 %v63
  %v378 = vunpack.c.l.b16 %v64
  %v379 = vunpack.c.l.b16 %v65
  %v380 = vunpack.c.l.b16 %v66
  %v381 = vunpack.c.l.b16 %v67
  %v382 = vunpack.c.l.b16 %v68
  %v383 = vunpack.c.l.b16 %v69
  %v384 = vunpack.c.l.b16 %v70
  %v385 = vunpack.c.l.b16 %v71
  %v386 = vunpack.c.l.b16 %v72
  %v387 = vunpack.c.l.b16 %v73
  %v388 = vunpack.c.l.b16 %v74
  %v389 = vunpack.c.l.b16 %v75
  %v390 = vunpack.c.l.b16 %v76
  %v391 = vunpack.c.l.b16 %v77
  %v392 = vunpack.c.l.b16 %v78
  %v393 = vunpack.c.l.b16 %v79
  %v394 = vunpack.c.l.b16 %v80
  %v395 = vunpack.c.l.b16 %v81
  %v396 = vunpack.c.l.b16 %v82
  %v397 = vunpack.c.l.b16 %v83
  %v398 = vunpack.c.l.b16 %v84
  %v399 = vunpack.c.l.b16 %v85
  %v400 = vunpack.c.l.b16 %v86
  %v401 = vunpack.c.l.b16 %v87
  %v402 = vunpack.c.l.b16 %v88
  %v403 = vunpack.c.l.b16 %v89
  %v404 = vunpack.c.l.b16 %v90
  %v405 = vunpack.c.l.b16 %v91
  %v406 = vunpack.c.l.b16 %v92
  %v407 = vunpack.c.l.b16 %v93
  %v408 = vunpack.c.l.b16 %v94
  %v409 = vunpack.c.l.b16 %v95
  %v410 = vunpack.c.l.b16 %v96
  %v411 = vunpack.c.l.b16 %v97
  %v412 = vunpack.c.l.b16 %v98
  %v413 = vunpack.c.l.b16 %v99
  %v414 = vunpack.c.l.b16 %v100
  %v415 = vunpack.c.l.b16 %v101
  %v416 = vunpack.c.l.b16 %v102
  %v417 = vunpack.c.l.b16 %v103
  %v418 = vunpack.c.l.b16 %v104
  %v419 = vunpack.c.l.b16 %v105
  %v420 = vunpack.c.l.b16 %v106
  %v421 = vunpack.c.l.b16 %v107
  %v422 = vunpack.c.l.b16 %v108
  %v423 = vunpack.c.l.b16 %v109
  %v424 = vunpack.c.l.b16 %v110
  %v425 = vunpack.c.l.b16 %v111
  %v426 = vunpack.c.l.b16 %v112
  %v427 = vunpack.c.l.b16 %v113
  %v428 = vunpack.c.l.b16 %v114
  %v429 = vunpack.c.l.b16 %v115
  %v430 = vunpack.c.l.b16 %v116
  %v431 = vunpack.c.l.b16 %v117
  %v432 = vunpack.c.l.b16 %v118
  %v433 = vunpack.c.l.b16 %v119
  %v434 = vunpack.c.l.b16 %v120
  %v435 = vunpack.c.l.b16 %v121
  %v436 = vunpack.c.l.b16 %v122
  %v437 = vunpack.c.l.b16 %v123
  %v438 = vunpack.c.l.b16 %v124
  %v439 = vunpack.c.l.b16 %v125
  %v440 = vunpack.c.l.b16 %v126
  %v441 = vunpack.c.l.b16 %v127
  %v442 = vunpack.c.l.b16 %v128
  %v443 = vunpack.c.l.b16 %v129
  %v444 = vunpack.c.l.b16 %v130
  %v445 = vunpack.c.l.b16 %v131
  %v446 = vunpack.c.l.b16 %v132
  %v447 = vunpack.c.l.b16 %v133
  %v448 = vunpack.c.l.b16 %v134
  %v449 = vunpack.c.l.b16 %v135
  %v450 = vunpack.c.l.b16 %v136
  %v451 = vunpack.c.l.b16 %v137
  %v452 = vunpack.c.l.b16 %v138
  %v453 = vunpack.c.l.b16 %v139
  %v454 = vunpack.c.l.b16 %v140
  %v455 = vunpack.c.l.b16 %v141
  %v456 = vunpack.c.l.b16 %v142
  %v457 = vunpack.c.l.b16 %v143
  %v458 = vunpack.c.l.b16 %v144
  %v459 = vunpack.c.l.b16 %v145
  %v460 = vunpack.c.l.b16 %v146
  %v461 = vunpack.c.l.b16 %v147
  %v462 = vunpack.c.l.b16 %v148
  %v463 = vunpack.c.l.b16 %v149
  %v464 = vunpack.c.l.b16 %v150
  %v465 = vunpack.c.l.b16 %v151
  %v466 = vunpack.c.l.b16 %v152
  %v467 = vunpack.c.l.b16 %v153
  %v468 = vunpack.c.l.b16 %v154
  %v469 = vunpack.c.l.b16 %v155
  %v470 = vunpack.c.l.b16 %v156
  %v471 = vunpack.c.l.b16 %v157
  %v472 = vunpack.c.l.b16 %v158
  %v473 = vunpack.c.l.b16 %v159
  %v474 = vunpack.c.l.b16 %v160
  %v475 = vunpack.c.l.b16 %v161
  %v476 = vunpack.c.l.b16 %v162
  %v477 = vunpack.c.l.b16 %v163
  %v478 = vunpack.c.l.b16 %v164
  %v479 = vunpack.c.l.b16 %v165
  %v480 = vunpack.c.l.b16 %v166
  %v481 = vpack.c.b16 %v338, %v337
  %v482 = vpack.c.b16 %v340, %v339
  %v483 = vpack.c.b16 %v342, %v341
  %v484 = vpack.c.b16 %v344, %v343
  %v485 = vpack.c.b16 %v346, %v345
  %v486 = vpack.c.b16 %v348, %v347
  %v487 = vpack.c.b16 %v350, %v349
  %v488 = vpack.c.b16 %v352, %v351
  %v489 = vpack.c.b16 %v354, %v353
  %v490 = vpack.c.b16 %v356, %v355
  %v491 = vpack.c.b16 %v358, %v357
  %v492 = vpack.c.b16 %v360, %v359
  %v493 = vpack.c.b16 %v362, %v361
  %v494 = vpack.c.b16 %v364, %v363
  %v495 = vpack.c.b16 %v366, %v365
  %v496 = vpack.c.b16 %v368, %v367
  %v497 = vpack.c.b16 %v370, %v369
  %v498 = vpack.c.b16 %v372, %v371
  %v499 = vpack.c.b16 %v374, %v373
  %v500 = vpack.c.b16 %v376, %v375
  %v501 = vpack.c.b16 %v378, %v377
  %v502 = vpack.c.b16 %v380, %v379
  %v503 = vpack.c.b16 %v382, %v381
  %v504 = vpack.c.b16 %v384, %v383
  %v505 = vpack.c.b16 %v386, %v385
  %v506 = vpack.c.b16 %v388, %v387
  %v507 = vpack.c.b16 %v390, %v389
  %v508 = vpack.c.b16 %v392, %v391
  %v509 = vpack.c.b16 %v394, %v393
  %v510 = vpack.c.b16 %v396, %v395
  %v511 = vpack.c.b16 %v398, %v397
  %v512 = vpack.c.b16 %v400, %v399
  %v513 = vpack.c.b16 %v402, %v401
  %v514 = vpack.c.b16 %v404, %v403
  %v515 = vpack.c.b16 %v406, %v405
  %v516 = vpack.c.b16 %v408, %v407
  %v517 = vpack.c.b16 %v410, %v409
  %v518 = vpack.c.b16 %v412, %v411
  %v519 = vpack.c.b16 %v414, %v413
  %v520 = vpack.c.b16 %v416, %v415
  %v521 = vpack.c.b16 %v418, %v417
  %v522 = vpack.c.b16 %v420, %v419
  %v523 = vpack.c.b16 %v422, %v421
  %v524 = vpack.c.b16 %v424, %v423
  %v525 = vpack.c.b16 %v426, %v425
  %v526 = vpack.c.b16 %v428, %v427
  %v527 = vpack.c.b16 %v430, %v429
  %v528 = vpack.c.b16 %v432, %v431
  %v529 = vpack.c.b16 %v434, %v433
  %v530 = vpack.c.b16 %v436, %v435
  %v531 = vpack.c.b16 %v438, %v437
  %v532 = vpack.c.b16 %v440, %v439
  %v533 = vpack.c.b16 %v442, %v441
  %v534 = vpack.c.b16 %v444, %v443
  %v535 = vpack.c.b16 %v446, %v445
  %v536 = vpack.c.b16 %v448, %v447
  %v537 = vpack.c.b16 %v450, %v449
  %v538 = vpack.c.b16 %v452, %v451
  %v539 = vpack.c.b16 %v454, %v453
  %v540 = vpack.c.b16 %v456, %v455
  %v541 = vpack.c.b16 %v458, %v457
  %v542 = vpack.c.b16 %v460, %v459
  %v543 = vpack.c.b16 %v462, %v461
  %v544 = vpack.c.b16 %v464, %v463
  %v545 = vpack.c.b16 %v466, %v465
  %v546 = vpack.c.b16 %v468, %v467
  %v547 = vpack.c.b16 %v470, %v469
  %v548 = vpack.c.b16 %v472, %v471
  %v549 = vpack.c.b16 %v474, %v473
  %v550 = vpack.c.b16 %v476, %v475
  %v551 = vpack.c.b16 %v478, %v477
  %v552 = vpack.c.b16 %v480, %v479
  %625 = vmatpush.bf16.msra.mxu0 %v488
  %626 = vmatpush.bf16.msra.mxu0 %v487
  %627 = vmatpush.bf16.msra.mxu0 %v486
  %628 = vmatpush.bf16.msra.mxu0 %v485
  %629 = vmatpush.bf16.msra.mxu0 %v484
  %630 = vmatpush.bf16.msra.mxu0 %v483
  %631 = vmatpush.bf16.msra.mxu0 %v482
  %632 = vmatpush.bf16.msra.mxu0 %v481
  %633 = vmatmul.bf16.gmra.mxu0 %v173
  %v634 = vpop.f32.mrf.mxu0
  %v635 = vadd.f32 %v169, %v634
  %v636 = vpop.f32.mrf.mxu0
  %637 = vdwg.mxu0
  %638 = vmatpush.bf16.msra.mxu0 %v496
  %639 = vmatpush.bf16.msra.mxu0 %v495
  %640 = vmatpush.bf16.msra.mxu0 %v494
  %641 = vmatpush.bf16.msra.mxu0 %v493
  %642 = vmatpush.bf16.msra.mxu0 %v492
  %643 = vmatpush.bf16.msra.mxu0 %v491
  %644 = vmatpush.bf16.msra.mxu0 %v490
  %645 = vmatpush.bf16.msra.mxu0 %v489
  %646 = vmatmul.bf16.gmra.mxu0 %v174
  %v647 = vpop.f32.mrf.mxu0
  %v648 = vadd.f32 %v635, %v647
  %v649 = vpop.f32.mrf.mxu0
  %650 = vdwg.mxu0
  %651 = vmatpush.bf16.msra.mxu0 %v504
  %652 = vmatpush.bf16.msra.mxu0 %v503
  %653 = vmatpush.bf16.msra.mxu0 %v502
  %654 = vmatpush.bf16.msra.mxu0 %v501
  %655 = vmatpush.bf16.msra.mxu0 %v500
  %656 = vmatpush.bf16.msra.mxu0 %v499
  %657 = vmatpush.bf16.msra.mxu0 %v498
  %658 = vmatpush.bf16.msra.mxu0 %v497
  %659 = vmatmul.bf16.gmra.mxu0 %v175
  %v660 = vpop.f32.mrf.mxu0
  %v661 = vadd.f32 %v648, %v660
  %v662 = vpop.f32.mrf.mxu0
  %663 = vdwg.mxu0
  %664 = vmatpush.bf16.msra.mxu0 %v512
  %665 = vmatpush.bf16.msra.mxu0 %v511
  %666 = vmatpush.bf16.msra.mxu0 %v510
  %667 = vmatpush.bf16.msra.mxu0 %v509
  %668 = vmatpush.bf16.msra.mxu0 %v508
  %669 = vmatpush.bf16.msra.mxu0 %v507
  %670 = vmatpush.bf16.msra.mxu0 %v506
  %671 = vmatpush.bf16.msra.mxu0 %v505
  %672 = vmatmul.bf16.gmra.mxu0 %v176
  %v673 = vpop.f32.mrf.mxu0
  %v674 = vadd.f32 %v661, %v673
  %v675 = vpop.f32.mrf.mxu0
  %676 = vdwg.mxu0
  %677 = vmatpush.bf16.msra.mxu0 %v520
  %678 = vmatpush.bf16.msra.mxu0 %v519
  %679 = vmatpush.bf16.msra.mxu0 %v518
  %680 = vmatpush.bf16.msra.mxu0 %v517
  %681 = vmatpush.bf16.msra.mxu0 %v516
  %682 = vmatpush.bf16.msra.mxu0 %v515
  %683 = vmatpush.bf16.msra.mxu0 %v514
  %684 = vmatpush.bf16.msra.mxu0 %v513
  %685 = vmatmul.bf16.gmra.mxu0 %v177
  %v686 = vpop.f32.mrf.mxu0
  %v687 = vadd.f32 %v674, %v686
  %v688 = vpop.f32.mrf.mxu0
  %689 = vdwg.mxu0
  %690 = vmatpush.bf16.msra.mxu0 %v528
  %691 = vmatpush.bf16.msra.mxu0 %v527
  %692 = vmatpush.bf16.msra.mxu0 %v526
  %693 = vmatpush.bf16.msra.mxu0 %v525
  %694 = vmatpush.bf16.msra.mxu0 %v524
  %695 = vmatpush.bf16.msra.mxu0 %v523
  %696 = vmatpush.bf16.msra.mxu0 %v522
  %697 = vmatpush.bf16.msra.mxu0 %v521
  %698 = vmatmul.bf16.gmra.mxu0 %v178
  %v699 = vpop.f32.mrf.mxu0
  %v700 = vadd.f32 %v687, %v699
  %v701 = vpop.f32.mrf.mxu0
  %702 = vdwg.mxu0
  %703 = vmatpush.bf16.msra.mxu0 %v536
  %704 = vmatpush.bf16.msra.mxu0 %v535
  %705 = vmatpush.bf16.msra.mxu0 %v534
  %706 = vmatpush.bf16.msra.mxu0 %v533
  %707 = vmatpush.bf16.msra.mxu0 %v532
  %708 = vmatpush.bf16.msra.mxu0 %v531
  %709 = vmatpush.bf16.msra.mxu0 %v530
  %710 = vmatpush.bf16.msra.mxu0 %v529
  %711 = vmatmul.bf16.gmra.mxu0 %v179
  %v712 = vpop.f32.mrf.mxu0
  %v713 = vadd.f32 %v700, %v712
  %v714 = vpop.f32.mrf.mxu0
  %715 = vdwg.mxu0
  %716 = vmatpush.bf16.msra.mxu0 %v544
  %717 = vmatpush.bf16.msra.mxu0 %v543
  %718 = vmatpush.bf16.msra.mxu0 %v542
  %719 = vmatpush.bf16.msra.mxu0 %v541
  %720 = vmatpush.bf16.msra.mxu0 %v540
  %721 = vmatpush.bf16.msra.mxu0 %v539
  %722 = vmatpush.bf16.msra.mxu0 %v538
  %723 = vmatpush.bf16.msra.mxu0 %v537
  %724 = vmatmul.bf16.gmra.mxu0 %v180
  %v725 = vpop.f32.mrf.mxu0
  %v726 = vadd.f32 %v713, %v725
  %v727 = vpop.f32.mrf.mxu0
  %728 = vdwg.mxu0
  %729 = vmatpush.bf16.msra.mxu0 %v552
  %730 = vmatpush.bf16.msra.mxu0 %v551
  %731 = vmatpush.bf16.msra.mxu0 %v550
  %732 = vmatpush.bf16.msra.mxu0 %v549
  %733 = vmatpush.bf16.msra.mxu0 %v548
  %734 = vmatpush.bf16.msra.mxu0 %v547
  %735 = vmatpush.bf16.msra.mxu0 %v546
  %736 = vmatpush.bf16.msra.mxu0 %v545
  %737 = vmatmul.bf16.gmra.mxu0 %v183
  %v738 = vpop.f32.mrf.mxu0
  %v739 = vadd.f32 %v726, %v738
  %v740 = vpop.f32.mrf.mxu0
  %741 = vdwg.mxu0
  %v742 = vmax.f32 %v739, 0.0
  %v743 = vpack.c.bf16 %v742, %v742
  %v744 = vld [vmem:[%s3] sm:$0xf]
  %v745 = vld [vmem:[%s3 + $0x4] sm:$0xf]
  %v746 = vld [vmem:[%s3 + $0x8] sm:$0xf]
  %v747 = vld [vmem:[%s3 + $0xc] sm:$0xf]
  %v748 = vld [vmem:[%s4] sm:$0x1]
  %v750 = vperm.slane %v748, 0
  %v756 = vunpack.c.l.b16 %v744
  %v757 = vunpack.c.l.b16 %v745
  %v758 = vunpack.c.l.b16 %v746
  %v759 = vunpack.c.l.b16 %v747
  %v760 = vpack.c.b16 %v757, %v756
  %v761 = vpack.c.b16 %v759, %v758
  %vm764 = vcmask 261120
  %v766 = vsel %vm764, %v743, 0
  %768 = vmatpush.bf16.msra.mxu0 0
  %769 = vmatpush.bf16.msra.mxu0 0
  %770 = vmatpush.bf16.msra.mxu0 0
  %771 = vmatpush.bf16.msra.mxu0 0
  %772 = vmatpush.bf16.msra.mxu0 0
  %773 = vmatpush.bf16.msra.mxu0 0
  %774 = vmatpush.bf16.msra.mxu0 %v761
  %775 = vmatpush.bf16.msra.mxu0 %v760
  %776 = vmatmul.bf16.gmra.mxu0 %v766
  %v777 = vpop.f32.mrf.mxu0
  %v778 = vadd.f32 %v750, %v777
  %v779 = vpop.f32.mrf.mxu0
  %780 = vdwg.mxu0
  %v781 = vmax.f32 %v778, 0.0
  %vm782 = vcmask 189440
  %783 = vst.msk [vmem:[%s5] sm:$0x3] %vm782, %v781
  // Predicated region
  $region22: #{mark_forward.7} parent=0 // pred_check
    _
  $region23: #{mark_forward.7} parent=0 // pred_check_branch
    %785 = sbr.rel (0) target = $region25
  $region24: #{mark_forward.7} parent=0 // pred_region
    _
  $region25: #{mark_forward.7} parent=0 // pred_fallthru
    _
  // Predicated region
  $region26: #{mark_forward.7} parent=0 // pred_check
    _
  $region27: #{mark_forward.7} parent=0 // pred_check_branch
    %787 = sbr.rel (0) target = $region29
  $region28: #{mark_forward.7} parent=0 // pred_region
    _
  $region29: #{mark_forward.7} parent=0 // pred_fallthru
    _

// kernel: mark_forward.8
$region0: #{mark_forward.8}
  #allocation0 [shape = 'u32[]', space=smem, size = 0x4, offset = 0x4, fixed_abs, tag = 'smem constant byte address 0x4 - core index']
  #allocation1 [shape = 'u32[72,128]{1,0:T(1,128)}', space=vmem, size = 0x9000, scoped, tag = 'internal scratch']
  %s0 = inlined_call_operand.vmem [shape: bf16[80,512], index: 0, kind: input, shape index: {}]
  %s1 = inlined_call_operand.vmem [shape: bf16[16,80], index: 1, kind: input, shape index: {}]
  %s2 = inlined_call_operand.vmem [shape: f32[16,1], index: 2, kind: input, shape index: {}]
  %s3 = inlined_call_operand.vmem [shape: f32[16,512], index: 3, kind: output, shape index: {}]
  %s4 = sld [smem:[#allocation0]]
  $region22: #{mark_forward.8} parent=0
    _
  %s6 = ssub.s32 1, %s4
  %s7 = scalar_select 0, %s6, %s4
  // Predicated region
  $region2: #{mark_forward.8} parent=0 // pred_check
    _
  $region3: #{mark_forward.8} parent=0 // pred_check_branch
    %9 = sbr.rel (0) target = $region5
  $region4: #{mark_forward.8} parent=0 // pred_region
    _
  $region5: #{mark_forward.8} parent=0 // pred_fallthru
    _
  // Predicated region
  $region6: #{mark_forward.8} parent=0 // pred_check
    _
  $region7: #{mark_forward.8} parent=0 // pred_check_branch
    %11 = sbr.rel (0) target = $region9
  $region8: #{mark_forward.8} parent=0 // pred_region
    _
  $region9: #{mark_forward.8} parent=0 // pred_fallthru
    _
  // Predicated region
  $region10: #{mark_forward.8} parent=0 // pred_check
    _
  $region11: #{mark_forward.8} parent=0 // pred_check_branch
    %13 = sbr.rel (0) target = $region13
  $region12: #{mark_forward.8} parent=0 // pred_region
    _
  $region13: #{mark_forward.8} parent=0 // pred_fallthru
    _
  %v15 = vld [vmem:[%s1] sm:$0xf]
  %v16 = vld [vmem:[%s1 + $0x4] sm:$0xf]
  %v17 = vld [vmem:[%s0] sm:$0xff]
  %v18 = vld [vmem:[%s0 + $0x8] sm:$0xff]
  %v19 = vld [vmem:[%s0 + $0x10] sm:$0xff]
  %v20 = vld [vmem:[%s0 + $0x18] sm:$0xff]
  %v21 = vld [vmem:[%s0 + $0x20] sm:$0xff]
  %v22 = vld [vmem:[%s0 + $0x28] sm:$0xff]
  %v23 = vld [vmem:[%s0 + $0x30] sm:$0xff]
  %v24 = vld [vmem:[%s0 + $0x38] sm:$0xff]
  %v25 = vld [vmem:[%s0 + $0x40] sm:$0xff]
  %v26 = vld [vmem:[%s0 + $0x48] sm:$0xff]
  %v27 = vld [vmem:[%s0 + $0x50] sm:$0xff]
  %v28 = vld [vmem:[%s0 + $0x58] sm:$0xff]
  %v29 = vld [vmem:[%s0 + $0x60] sm:$0xff]
  %v30 = vld [vmem:[%s0 + $0x68] sm:$0xff]
  %v31 = vld [vmem:[%s0 + $0x70] sm:$0xff]
  %v32 = vld [vmem:[%s0 + $0x78] sm:$0xff]
  %v33 = vld [vmem:[%s0 + $0x80] sm:$0xff]
  %v34 = vld [vmem:[%s0 + $0x88] sm:$0xff]
  %v35 = vld [vmem:[%s0 + $0x90] sm:$0xff]
  %v36 = vld [vmem:[%s0 + $0x98] sm:$0xff]
  %v37 = vld [vmem:[%s2] sm:$0xff]
  %v38 = vld [vmem:[%s2 + $0x8] sm:$0xff]
  %40 = vset.pattern.permute.xlu0 0
  %41 = vperm.xlu0 %40, %v37
  %v42 = vpop.permute.xlu0 %41
  %45 = vset.pattern.permute.xlu0 0
  %46 = vperm.xlu0 %45, %v38
  %v47 = vpop.permute.xlu0 %46
  %v51 = vunpack.c.l.b16 %v15
  %v52 = vunpack.c.l.b16 %v16
  %v53 = vpack.c.b16 %v52, %v51
  %v74 = vunpack.c.l.b16 %v17
  %v75 = vunpack.c.h.b16 %v17
  %v76 = vunpack.c.l.b16 %v18
  %v77 = vunpack.c.h.b16 %v18
  %v78 = vunpack.c.l.b16 %v19
  %v79 = vunpack.c.h.b16 %v19
  %v80 = vunpack.c.l.b16 %v20
  %v81 = vunpack.c.h.b16 %v20
  %v82 = vunpack.c.l.b16 %v21
  %v83 = vunpack.c.h.b16 %v21
  %v84 = vunpack.c.l.b16 %v22
  %v85 = vunpack.c.h.b16 %v22
  %v86 = vunpack.c.l.b16 %v23
  %v87 = vunpack.c.h.b16 %v23
  %v88 = vunpack.c.l.b16 %v24
  %v89 = vunpack.c.h.b16 %v24
  %v90 = vunpack.c.l.b16 %v25
  %v91 = vunpack.c.h.b16 %v25
  %v92 = vunpack.c.l.b16 %v26
  %v93 = vunpack.c.h.b16 %v26
  %v94 = vunpack.c.l.b16 %v27
  %v95 = vunpack.c.h.b16 %v27
  %v96 = vunpack.c.l.b16 %v28
  %v97 = vunpack.c.h.b16 %v28
  %v98 = vunpack.c.l.b16 %v29
  %v99 = vunpack.c.h.b16 %v29
  %v100 = vunpack.c.l.b16 %v30
  %v101 = vunpack.c.h.b16 %v30
  %v102 = vunpack.c.l.b16 %v31
  %v103 = vunpack.c.h.b16 %v31
  %v104 = vunpack.c.l.b16 %v32
  %v105 = vunpack.c.h.b16 %v32
  %v106 = vunpack.c.l.b16 %v33
  %v107 = vunpack.c.h.b16 %v33
  %v108 = vunpack.c.l.b16 %v34
  %v109 = vunpack.c.h.b16 %v34
  %v110 = vunpack.c.l.b16 %v35
  %v111 = vunpack.c.h.b16 %v35
  %v112 = vunpack.c.l.b16 %v36
  %v113 = vunpack.c.h.b16 %v36
  %v114 = vpack.c.b16 %v78, %v74
  %v115 = vpack.c.b16 %v79, %v75
  %v116 = vpack.c.b16 %v80, %v76
  %v117 = vpack.c.b16 %v81, %v77
  %v118 = vpack.c.b16 %v86, %v82
  %v119 = vpack.c.b16 %v87, %v83
  %v120 = vpack.c.b16 %v88, %v84
  %v121 = vpack.c.b16 %v89, %v85
  %v122 = vpack.c.b16 %v94, %v90
  %v123 = vpack.c.b16 %v95, %v91
  %v124 = vpack.c.b16 %v96, %v92
  %v125 = vpack.c.b16 %v97, %v93
  %v126 = vpack.c.b16 %v102, %v98
  %v127 = vpack.c.b16 %v103, %v99
  %v128 = vpack.c.b16 %v104, %v100
  %v129 = vpack.c.b16 %v105, %v101
  %v130 = vpack.c.b16 %v110, %v106
  %v131 = vpack.c.b16 %v111, %v107
  %v132 = vpack.c.b16 %v112, %v108
  %v133 = vpack.c.b16 %v113, %v109
  %vm154 = vcmask 654336
  %v156 = vsel %vm154, %v53, 0
  %158 = vmatpush.bf16.msra.mxu0 0
  %159 = vmatpush.bf16.msra.mxu0 0
  %160 = vmatpush.bf16.msra.mxu0 0
  %161 = vmatpush.bf16.msra.mxu0 %v130
  %162 = vmatpush.bf16.msra.mxu0 %v126
  %163 = vmatpush.bf16.msra.mxu0 %v122
  %164 = vmatpush.bf16.msra.mxu0 %v118
  %165 = vmatpush.bf16.msra.mxu0 %v114
  %166 = vmatmul.bf16.gmra.mxu0 %v156
  %v167 = vpop.f32.mrf.mxu0
  %v168 = vadd.f32 %v42, %v167
  %v169 = vpop.f32.mrf.mxu0
  %v170 = vadd.f32 %v47, %v169
  %171 = vdwg.mxu0
  %172 = vmatpush.bf16.msra.mxu0 0
  %173 = vmatpush.bf16.msra.mxu0 0
  %174 = vmatpush.bf16.msra.mxu0 0
  %175 = vmatpush.bf16.msra.mxu0 %v131
  %176 = vmatpush.bf16.msra.mxu0 %v127
  %177 = vmatpush.bf16.msra.mxu0 %v123
  %178 = vmatpush.bf16.msra.mxu0 %v119
  %179 = vmatpush.bf16.msra.mxu0 %v115
  %180 = vmatmul.bf16.gmra.mxu0 %v156
  %v181 = vpop.f32.mrf.mxu0
  %v182 = vadd.f32 %v42, %v181
  %v183 = vpop.f32.mrf.mxu0
  %v184 = vadd.f32 %v47, %v183
  %185 = vdwg.mxu0
  %186 = vmatpush.bf16.msra.mxu0 0
  %187 = vmatpush.bf16.msra.mxu0 0
  %188 = vmatpush.bf16.msra.mxu0 0
  %189 = vmatpush.bf16.msra.mxu0 %v132
  %190 = vmatpush.bf16.msra.mxu0 %v128
  %191 = vmatpush.bf16.msra.mxu0 %v124
  %192 = vmatpush.bf16.msra.mxu0 %v120
  %193 = vmatpush.bf16.msra.mxu0 %v116
  %194 = vmatmul.bf16.gmra.mxu0 %v156
  %v195 = vpop.f32.mrf.mxu0
  %v196 = vadd.f32 %v42, %v195
  %v197 = vpop.f32.mrf.mxu0
  %v198 = vadd.f32 %v47, %v197
  %199 = vdwg.mxu0
  %200 = vmatpush.bf16.msra.mxu0 0
  %201 = vmatpush.bf16.msra.mxu0 0
  %202 = vmatpush.bf16.msra.mxu0 0
  %203 = vmatpush.bf16.msra.mxu0 %v133
  %204 = vmatpush.bf16.msra.mxu0 %v129
  %205 = vmatpush.bf16.msra.mxu0 %v125
  %206 = vmatpush.bf16.msra.mxu0 %v121
  %207 = vmatpush.bf16.msra.mxu0 %v117
  %208 = vmatmul.bf16.gmra.mxu0 %v156
  %v209 = vpop.f32.mrf.mxu0
  %v210 = vadd.f32 %v42, %v209
  %v211 = vpop.f32.mrf.mxu0
  %v212 = vadd.f32 %v47, %v211
  %213 = vdwg.mxu0
  %v214 = vmax.f32 %v168, 0.0
  %v215 = vmax.f32 %v182, 0.0
  %v216 = vmax.f32 %v196, 0.0
  %v217 = vmax.f32 %v210, 0.0
  %v218 = vmax.f32 %v170, 0.0
  %v219 = vmax.f32 %v184, 0.0
  %v220 = vmax.f32 %v198, 0.0
  %v221 = vmax.f32 %v212, 0.0
  %222 = vst [vmem:[%s3] sm:$0xff] %v214
  %223 = vst [vmem:[%s3 + $0x8] sm:$0xff] %v215
  %224 = vst [vmem:[%s3 + $0x10] sm:$0xff] %v216
  %225 = vst [vmem:[%s3 + $0x18] sm:$0xff] %v217
  %226 = vst [vmem:[%s3 + $0x20] sm:$0xff] %v218
  %227 = vst [vmem:[%s3 + $0x28] sm:$0xff] %v219
  %228 = vst [vmem:[%s3 + $0x30] sm:$0xff] %v220
  %229 = vst [vmem:[%s3 + $0x38] sm:$0xff] %v221
  // Predicated region
  $region14: #{mark_forward.8} parent=0 // pred_check
    _
  $region15: #{mark_forward.8} parent=0 // pred_check_branch
    %231 = sbr.rel (0) target = $region17
  $region16: #{mark_forward.8} parent=0 // pred_region
    _
  $region17: #{mark_forward.8} parent=0 // pred_fallthru
    _
  // Predicated region
  $region18: #{mark_forward.8} parent=0 // pred_check
    _
  $region19: #{mark_forward.8} parent=0 // pred_check_branch
    %233 = sbr.rel (0) target = $region21
  $region20: #{mark_forward.8} parent=0 // pred_region
    _
  $region21: #{mark_forward.8} parent=0 // pred_fallthru
    _

// kernel: mark_forward.9
$region0: #{mark_forward.9}
  #allocation0 [shape = 'u32[]', space=smem, size = 0x4, offset = 0x4, fixed_abs, tag = 'smem constant byte address 0x4 - core index']
  #allocation1 [shape = 'u32[72,128]{1,0:T(1,128)}', space=vmem, size = 0x9000, scoped, tag = 'internal scratch']
  %s0 = inlined_call_operand.vmem [shape: bf16[2,1024], index: 0, kind: input, shape index: {}]
  %s1 = inlined_call_operand.vmem [shape: bf16[1024,32], index: 1, kind: input, shape index: {}]
  %s2 = inlined_call_operand.vmem [shape: f32[1,32], index: 2, kind: input, shape index: {}]
  %s3 = inlined_call_operand.vmem [shape: bf16[32,5], index: 3, kind: input, shape index: {}]
  %s4 = inlined_call_operand.vmem [shape: f32[1,5], index: 4, kind: input, shape index: {}]
  %s5 = inlined_call_operand.hbm [shape: f32[2,5], index: 5, kind: output, shape index: {}]
  %s6 = sld [smem:[#allocation0]]
  $region30: #{mark_forward.9} parent=0
    _
  %s8 = ssub.s32 1, %s6
  %s9 = scalar_select 0, %s8, %s6
  $region1: #{mark_forward.9} parent=0
    #allocation2 [shape = 'u8[1024]{0}', space=vmem, size = 0x400, scoped, tag = 'output window, operand 0, single buffered']
    #allocation3 [shape = 's32[1]{0}', space=sflag, size = 0x4, scoped, tag = 'scoped memory for mark_forward.9']
    %10 = vsyncpa [#allocation3], 0
    // Predicated region
    $region2: #{mark_forward.9} parent=1 // pred_check
      _
    $region3: #{mark_forward.9} parent=1 // pred_check_branch
      %12 = sbr.rel (0) target = $region5
    $region4: #{mark_forward.9} parent=1 // pred_region
      _
    $region5: #{mark_forward.9} parent=1 // pred_fallthru
      _
    // Predicated region
    $region6: #{mark_forward.9} parent=1 // pred_check
      _
    $region7: #{mark_forward.9} parent=1 // pred_check_branch
      %14 = sbr.rel (0) target = $region9
    $region8: #{mark_forward.9} parent=1 // pred_region
      _
    $region9: #{mark_forward.9} parent=1 // pred_fallthru
      _
    // Predicated region
    $region10: #{mark_forward.9} parent=1 // pred_check
      _
    $region11: #{mark_forward.9} parent=1 // pred_check_branch
      %16 = sbr.rel (0) target = $region13
    $region12: #{mark_forward.9} parent=1 // pred_region
      _
    $region13: #{mark_forward.9} parent=1 // pred_fallthru
      _
    // Predicated region
    $region14: #{mark_forward.9} parent=1 // pred_check
      _
    $region15: #{mark_forward.9} parent=1 // pred_check_branch
      %18 = sbr.rel (0) target = $region17
    $region16: #{mark_forward.9} parent=1 // pred_region
      _
    $region17: #{mark_forward.9} parent=1 // pred_fallthru
      _
    // Predicated region
    $region18: #{mark_forward.9} parent=1 // pred_check
      _
    $region19: #{mark_forward.9} parent=1 // pred_check_branch
      %20 = sbr.rel (0) target = $region21
    $region20: #{mark_forward.9} parent=1 // pred_region
      _
    $region21: #{mark_forward.9} parent=1 // pred_fallthru
      _
    %v22 = vld [vmem:[%s0] sm:$0xff]
    %v23 = vld [vmem:[%s1] sm:$0xf]
    %v24 = vld [vmem:[%s1 + $0x4] sm:$0xf]
    %v25 = vld [vmem:[%s1 + $0x8] sm:$0xf]
    %v26 = vld [vmem:[%s1 + $0xc] sm:$0xf]
    %v27 = vld [vmem:[%s1 + $0x10] sm:$0xf]
    %v28 = vld [vmem:[%s1 + $0x14] sm:$0xf]
    %v29 = vld [vmem:[%s1 + $0x18] sm:$0xf]
    %v30 = vld [vmem:[%s1 + $0x1c] sm:$0xf]
    %v31 = vld [vmem:[%s1 + $0x20] sm:$0xf]
    %v32 = vld [vmem:[%s1 + $0x24] sm:$0xf]
    %v33 = vld [vmem:[%s1 + $0x28] sm:$0xf]
    %v34 = vld [vmem:[%s1 + $0x2c] sm:$0xf]
    %v35 = vld [vmem:[%s1 + $0x30] sm:$0xf]
    %v36 = vld [vmem:[%s1 + $0x34] sm:$0xf]
    %v37 = vld [vmem:[%s1 + $0x38] sm:$0xf]
    %v38 = vld [vmem:[%s1 + $0x3c] sm:$0xf]
    %v39 = vld [vmem:[%s1 + $0x40] sm:$0xf]
    %v40 = vld [vmem:[%s1 + $0x44] sm:$0xf]
    %v41 = vld [vmem:[%s1 + $0x48] sm:$0xf]
    %v42 = vld [vmem:[%s1 + $0x4c] sm:$0xf]
    %v43 = vld [vmem:[%s1 + $0x50] sm:$0xf]
    %v44 = vld [vmem:[%s1 + $0x54] sm:$0xf]
    %v45 = vld [vmem:[%s1 + $0x58] sm:$0xf]
    %v46 = vld [vmem:[%s1 + $0x5c] sm:$0xf]
    %v47 = vld [vmem:[%s1 + $0x60] sm:$0xf]
    %v48 = vld [vmem:[%s1 + $0x64] sm:$0xf]
    %v49 = vld [vmem:[%s1 + $0x68] sm:$0xf]
    %v50 = vld [vmem:[%s1 + $0x6c] sm:$0xf]
    %v51 = vld [vmem:[%s1 + $0x70] sm:$0xf]
    %v52 = vld [vmem:[%s1 + $0x74] sm:$0xf]
    %v53 = vld [vmem:[%s1 + $0x78] sm:$0xf]
    %v54 = vld [vmem:[%s1 + $0x7c] sm:$0xf]
    %v55 = vld [vmem:[%s1 + $0x80] sm:$0xf]
    %v56 = vld [vmem:[%s1 + $0x84] sm:$0xf]
    %v57 = vld [vmem:[%s1 + $0x88] sm:$0xf]
    %v58 = vld [vmem:[%s1 + $0x8c] sm:$0xf]
    %v59 = vld [vmem:[%s1 + $0x90] sm:$0xf]
    %v60 = vld [vmem:[%s1 + $0x94] sm:$0xf]
    %v61 = vld [vmem:[%s1 + $0x98] sm:$0xf]
    %v62 = vld [vmem:[%s1 + $0x9c] sm:$0xf]
    %v63 = vld [vmem:[%s1 + $0xa0] sm:$0xf]
    %v64 = vld [vmem:[%s1 + $0xa4] sm:$0xf]
    %v65 = vld [vmem:[%s1 + $0xa8] sm:$0xf]
    %v66 = vld [vmem:[%s1 + $0xac] sm:$0xf]
    %v67 = vld [vmem:[%s1 + $0xb0] sm:$0xf]
    %v68 = vld [vmem:[%s1 + $0xb4] sm:$0xf]
    %v69 = vld [vmem:[%s1 + $0xb8] sm:$0xf]
    %v70 = vld [vmem:[%s1 + $0xbc] sm:$0xf]
    %v71 = vld [vmem:[%s1 + $0xc0] sm:$0xf]
    %v72 = vld [vmem:[%s1 + $0xc4] sm:$0xf]
    %v73 = vld [vmem:[%s1 + $0xc8] sm:$0xf]
    %v74 = vld [vmem:[%s1 + $0xcc] sm:$0xf]
    %v75 = vld [vmem:[%s1 + $0xd0] sm:$0xf]
    %v76 = vld [vmem:[%s1 + $0xd4] sm:$0xf]
    %v77 = vld [vmem:[%s1 + $0xd8] sm:$0xf]
    %v78 = vld [vmem:[%s1 + $0xdc] sm:$0xf]
    %v79 = vld [vmem:[%s1 + $0xe0] sm:$0xf]
    %v80 = vld [vmem:[%s1 + $0xe4] sm:$0xf]
    %v81 = vld [vmem:[%s1 + $0xe8] sm:$0xf]
    %v82 = vld [vmem:[%s1 + $0xec] sm:$0xf]
    %v83 = vld [vmem:[%s1 + $0xf0] sm:$0xf]
    %v84 = vld [vmem:[%s1 + $0xf4] sm:$0xf]
    %v85 = vld [vmem:[%s1 + $0xf8] sm:$0xf]
    %v86 = vld [vmem:[%s1 + $0xfc] sm:$0xf]
    %v87 = vld [vmem:[%s1 + $0x100] sm:$0xf]
    %v88 = vld [vmem:[%s1 + $0x104] sm:$0xf]
    %v89 = vld [vmem:[%s1 + $0x108] sm:$0xf]
    %v90 = vld [vmem:[%s1 + $0x10c] sm:$0xf]
    %v91 = vld [vmem:[%s1 + $0x110] sm:$0xf]
    %v92 = vld [vmem:[%s1 + $0x114] sm:$0xf]
    %v93 = vld [vmem:[%s1 + $0x118] sm:$0xf]
    %v94 = vld [vmem:[%s1 + $0x11c] sm:$0xf]
    %v95 = vld [vmem:[%s1 + $0x120] sm:$0xf]
    %v96 = vld [vmem:[%s1 + $0x124] sm:$0xf]
    %v97 = vld [vmem:[%s1 + $0x128] sm:$0xf]
    %v98 = vld [vmem:[%s1 + $0x12c] sm:$0xf]
    %v99 = vld [vmem:[%s1 + $0x130] sm:$0xf]
    %v100 = vld [vmem:[%s1 + $0x134] sm:$0xf]
    %v101 = vld [vmem:[%s1 + $0x138] sm:$0xf]
    %v102 = vld [vmem:[%s1 + $0x13c] sm:$0xf]
    %v103 = vld [vmem:[%s1 + $0x140] sm:$0xf]
    %v104 = vld [vmem:[%s1 + $0x144] sm:$0xf]
    %v105 = vld [vmem:[%s1 + $0x148] sm:$0xf]
    %v106 = vld [vmem:[%s1 + $0x14c] sm:$0xf]
    %v107 = vld [vmem:[%s1 + $0x150] sm:$0xf]
    %v108 = vld [vmem:[%s1 + $0x154] sm:$0xf]
    %v109 = vld [vmem:[%s1 + $0x158] sm:$0xf]
    %v110 = vld [vmem:[%s1 + $0x15c] sm:$0xf]
    %v111 = vld [vmem:[%s1 + $0x160] sm:$0xf]
    %v112 = vld [vmem:[%s1 + $0x164] sm:$0xf]
    %v113 = vld [vmem:[%s1 + $0x168] sm:$0xf]
    %v114 = vld [vmem:[%s1 + $0x16c] sm:$0xf]
    %v115 = vld [vmem:[%s1 + $0x170] sm:$0xf]
    %v116 = vld [vmem:[%s1 + $0x174] sm:$0xf]
    %v117 = vld [vmem:[%s1 + $0x178] sm:$0xf]
    %v118 = vld [vmem:[%s1 + $0x17c] sm:$0xf]
    %v119 = vld [vmem:[%s1 + $0x180] sm:$0xf]
    %v120 = vld [vmem:[%s1 + $0x184] sm:$0xf]
    %v121 = vld [vmem:[%s1 + $0x188] sm:$0xf]
    %v122 = vld [vmem:[%s1 + $0x18c] sm:$0xf]
    %v123 = vld [vmem:[%s1 + $0x190] sm:$0xf]
    %v124 = vld [vmem:[%s1 + $0x194] sm:$0xf]
    %v125 = vld [vmem:[%s1 + $0x198] sm:$0xf]
    %v126 = vld [vmem:[%s1 + $0x19c] sm:$0xf]
    %v127 = vld [vmem:[%s1 + $0x1a0] sm:$0xf]
    %v128 = vld [vmem:[%s1 + $0x1a4] sm:$0xf]
    %v129 = vld [vmem:[%s1 + $0x1a8] sm:$0xf]
    %v130 = vld [vmem:[%s1 + $0x1ac] sm:$0xf]
    %v131 = vld [vmem:[%s1 + $0x1b0] sm:$0xf]
    %v132 = vld [vmem:[%s1 + $0x1b4] sm:$0xf]
    %v133 = vld [vmem:[%s1 + $0x1b8] sm:$0xf]
    %v134 = vld [vmem:[%s1 + $0x1bc] sm:$0xf]
    %v135 = vld [vmem:[%s1 + $0x1c0] sm:$0xf]
    %v136 = vld [vmem:[%s1 + $0x1c4] sm:$0xf]
    %v137 = vld [vmem:[%s1 + $0x1c8] sm:$0xf]
    %v138 = vld [vmem:[%s1 + $0x1cc] sm:$0xf]
    %v139 = vld [vmem:[%s1 + $0x1d0] sm:$0xf]
    %v140 = vld [vmem:[%s1 + $0x1d4] sm:$0xf]
    %v141 = vld [vmem:[%s1 + $0x1d8] sm:$0xf]
    %v142 = vld [vmem:[%s1 + $0x1dc] sm:$0xf]
    %v143 = vld [vmem:[%s1 + $0x1e0] sm:$0xf]
    %v144 = vld [vmem:[%s1 + $0x1e4] sm:$0xf]
    %v145 = vld [vmem:[%s1 + $0x1e8] sm:$0xf]
    %v146 = vld [vmem:[%s1 + $0x1ec] sm:$0xf]
    %v147 = vld [vmem:[%s1 + $0x1f0] sm:$0xf]
    %v148 = vld [vmem:[%s1 + $0x1f4] sm:$0xf]
    %v149 = vld [vmem:[%s1 + $0x1f8] sm:$0xf]
    %v150 = vld [vmem:[%s1 + $0x1fc] sm:$0xf]
    %v151 = vld [vmem:[%s2] sm:$0x1]
    %v153 = vperm.slane %v151, 0
    %156 = vst [vmem:[#allocation1] ss:$9 sm:$0xff] %v22
    %v157 = vld [vmem:[#allocation1] sm:$0xff]
    %v158 = vld [vmem:[#allocation1 + $0x9] sm:$0xff]
    %v159 = vld [vmem:[#allocation1 + $0x12] sm:$0xff]
    %v160 = vld [vmem:[#allocation1 + $0x1b] sm:$0xff]
    %v161 = vld [vmem:[#allocation1 + $0x24] sm:$0xff]
    %v162 = vld [vmem:[#allocation1 + $0x2d] sm:$0xff]
    %v163 = vld [vmem:[#allocation1 + $0x36] sm:$0xff]
    %v164 = vld [vmem:[#allocation1 + $0x3f] sm:$0xff]
    %v301 = vunpack.c.l.b16 %v23
    %v302 = vunpack.c.l.b16 %v24
    %v303 = vunpack.c.l.b16 %v25
    %v304 = vunpack.c.l.b16 %v26
    %v305 = vunpack.c.l.b16 %v27
    %v306 = vunpack.c.l.b16 %v28
    %v307 = vunpack.c.l.b16 %v29
    %v308 = vunpack.c.l.b16 %v30
    %v309 = vunpack.c.l.b16 %v31
    %v310 = vunpack.c.l.b16 %v32
    %v311 = vunpack.c.l.b16 %v33
    %v312 = vunpack.c.l.b16 %v34
    %v313 = vunpack.c.l.b16 %v35
    %v314 = vunpack.c.l.b16 %v36
    %v315 = vunpack.c.l.b16 %v37
    %v316 = vunpack.c.l.b16 %v38
    %v317 = vunpack.c.l.b16 %v39
    %v318 = vunpack.c.l.b16 %v40
    %v319 = vunpack.c.l.b16 %v41
    %v320 = vunpack.c.l.b16 %v42
    %v321 = vunpack.c.l.b16 %v43
    %v322 = vunpack.c.l.b16 %v44
    %v323 = vunpack.c.l.b16 %v45
    %v324 = vunpack.c.l.b16 %v46
    %v325 = vunpack.c.l.b16 %v47
    %v326 = vunpack.c.l.b16 %v48
    %v327 = vunpack.c.l.b16 %v49
    %v328 = vunpack.c.l.b16 %v50
    %v329 = vunpack.c.l.b16 %v51
    %v330 = vunpack.c.l.b16 %v52
    %v331 = vunpack.c.l.b16 %v53
    %v332 = vunpack.c.l.b16 %v54
    %v333 = vunpack.c.l.b16 %v55
    %v334 = vunpack.c.l.b16 %v56
    %v335 = vunpack.c.l.b16 %v57
    %v336 = vunpack.c.l.b16 %v58
    %v337 = vunpack.c.l.b16 %v59
    %v338 = vunpack.c.l.b16 %v60
    %v339 = vunpack.c.l.b16 %v61
    %v340 = vunpack.c.l.b16 %v62
    %v341 = vunpack.c.l.b16 %v63
    %v342 = vunpack.c.l.b16 %v64
    %v343 = vunpack.c.l.b16 %v65
    %v344 = vunpack.c.l.b16 %v66
    %v345 = vunpack.c.l.b16 %v67
    %v346 = vunpack.c.l.b16 %v68
    %v347 = vunpack.c.l.b16 %v69
    %v348 = vunpack.c.l.b16 %v70
    %v349 = vunpack.c.l.b16 %v71
    %v350 = vunpack.c.l.b16 %v72
    %v351 = vunpack.c.l.b16 %v73
    %v352 = vunpack.c.l.b16 %v74
    %v353 = vunpack.c.l.b16 %v75
    %v354 = vunpack.c.l.b16 %v76
    %v355 = vunpack.c.l.b16 %v77
    %v356 = vunpack.c.l.b16 %v78
    %v357 = vunpack.c.l.b16 %v79
    %v358 = vunpack.c.l.b16 %v80
    %v359 = vunpack.c.l.b16 %v81
    %v360 = vunpack.c.l.b16 %v82
    %v361 = vunpack.c.l.b16 %v83
    %v362 = vunpack.c.l.b16 %v84
    %v363 = vunpack.c.l.b16 %v85
    %v364 = vunpack.c.l.b16 %v86
    %v365 = vunpack.c.l.b16 %v87
    %v366 = vunpack.c.l.b16 %v88
    %v367 = vunpack.c.l.b16 %v89
    %v368 = vunpack.c.l.b16 %v90
    %v369 = vunpack.c.l.b16 %v91
    %v370 = vunpack.c.l.b16 %v92
    %v371 = vunpack.c.l.b16 %v93
    %v372 = vunpack.c.l.b16 %v94
    %v373 = vunpack.c.l.b16 %v95
    %v374 = vunpack.c.l.b16 %v96
    %v375 = vunpack.c.l.b16 %v97
    %v376 = vunpack.c.l.b16 %v98
    %v377 = vunpack.c.l.b16 %v99
    %v378 = vunpack.c.l.b16 %v100
    %v379 = vunpack.c.l.b16 %v101
    %v380 = vunpack.c.l.b16 %v102
    %v381 = vunpack.c.l.b16 %v103
    %v382 = vunpack.c.l.b16 %v104
    %v383 = vunpack.c.l.b16 %v105
    %v384 = vunpack.c.l.b16 %v106
    %v385 = vunpack.c.l.b16 %v107
    %v386 = vunpack.c.l.b16 %v108
    %v387 = vunpack.c.l.b16 %v109
    %v388 = vunpack.c.l.b16 %v110
    %v389 = vunpack.c.l.b16 %v111
    %v390 = vunpack.c.l.b16 %v112
    %v391 = vunpack.c.l.b16 %v113
    %v392 = vunpack.c.l.b16 %v114
    %v393 = vunpack.c.l.b16 %v115
    %v394 = vunpack.c.l.b16 %v116
    %v395 = vunpack.c.l.b16 %v117
    %v396 = vunpack.c.l.b16 %v118
    %v397 = vunpack.c.l.b16 %v119
    %v398 = vunpack.c.l.b16 %v120
    %v399 = vunpack.c.l.b16 %v121
    %v400 = vunpack.c.l.b16 %v122
    %v401 = vunpack.c.l.b16 %v123
    %v402 = vunpack.c.l.b16 %v124
    %v403 = vunpack.c.l.b16 %v125
    %v404 = vunpack.c.l.b16 %v126
    %v405 = vunpack.c.l.b16 %v127
    %v406 = vunpack.c.l.b16 %v128
    %v407 = vunpack.c.l.b16 %v129
    %v408 = vunpack.c.l.b16 %v130
    %v409 = vunpack.c.l.b16 %v131
    %v410 = vunpack.c.l.b16 %v132
    %v411 = vunpack.c.l.b16 %v133
    %v412 = vunpack.c.l.b16 %v134
    %v413 = vunpack.c.l.b16 %v135
    %v414 = vunpack.c.l.b16 %v136
    %v415 = vunpack.c.l.b16 %v137
    %v416 = vunpack.c.l.b16 %v138
    %v417 = vunpack.c.l.b16 %v139
    %v418 = vunpack.c.l.b16 %v140
    %v419 = vunpack.c.l.b16 %v141
    %v420 = vunpack.c.l.b16 %v142
    %v421 = vunpack.c.l.b16 %v143
    %v422 = vunpack.c.l.b16 %v144
    %v423 = vunpack.c.l.b16 %v145
    %v424 = vunpack.c.l.b16 %v146
    %v425 = vunpack.c.l.b16 %v147
    %v426 = vunpack.c.l.b16 %v148
    %v427 = vunpack.c.l.b16 %v149
    %v428 = vunpack.c.l.b16 %v150
    %v429 = vpack.c.b16 %v302, %v301
    %v430 = vpack.c.b16 %v304, %v303
    %v431 = vpack.c.b16 %v306, %v305
    %v432 = vpack.c.b16 %v308, %v307
    %v433 = vpack.c.b16 %v310, %v309
    %v434 = vpack.c.b16 %v312, %v311
    %v435 = vpack.c.b16 %v314, %v313
    %v436 = vpack.c.b16 %v316, %v315
    %v437 = vpack.c.b16 %v318, %v317
    %v438 = vpack.c.b16 %v320, %v319
    %v439 = vpack.c.b16 %v322, %v321
    %v440 = vpack.c.b16 %v324, %v323
    %v441 = vpack.c.b16 %v326, %v325
    %v442 = vpack.c.b16 %v328, %v327
    %v443 = vpack.c.b16 %v330, %v329
    %v444 = vpack.c.b16 %v332, %v331
    %v445 = vpack.c.b16 %v334, %v333
    %v446 = vpack.c.b16 %v336, %v335
    %v447 = vpack.c.b16 %v338, %v337
    %v448 = vpack.c.b16 %v340, %v339
    %v449 = vpack.c.b16 %v342, %v341
    %v450 = vpack.c.b16 %v344, %v343
    %v451 = vpack.c.b16 %v346, %v345
    %v452 = vpack.c.b16 %v348, %v347
    %v453 = vpack.c.b16 %v350, %v349
    %v454 = vpack.c.b16 %v352, %v351
    %v455 = vpack.c.b16 %v354, %v353
    %v456 = vpack.c.b16 %v356, %v355
    %v457 = vpack.c.b16 %v358, %v357
    %v458 = vpack.c.b16 %v360, %v359
    %v459 = vpack.c.b16 %v362, %v361
    %v460 = vpack.c.b16 %v364, %v363
    %v461 = vpack.c.b16 %v366, %v365
    %v462 = vpack.c.b16 %v368, %v367
    %v463 = vpack.c.b16 %v370, %v369
    %v464 = vpack.c.b16 %v372, %v371
    %v465 = vpack.c.b16 %v374, %v373
    %v466 = vpack.c.b16 %v376, %v375
    %v467 = vpack.c.b16 %v378, %v377
    %v468 = vpack.c.b16 %v380, %v379
    %v469 = vpack.c.b16 %v382, %v381
    %v470 = vpack.c.b16 %v384, %v383
    %v471 = vpack.c.b16 %v386, %v385
    %v472 = vpack.c.b16 %v388, %v387
    %v473 = vpack.c.b16 %v390, %v389
    %v474 = vpack.c.b16 %v392, %v391
    %v475 = vpack.c.b16 %v394, %v393
    %v476 = vpack.c.b16 %v396, %v395
    %v477 = vpack.c.b16 %v398, %v397
    %v478 = vpack.c.b16 %v400, %v399
    %v479 = vpack.c.b16 %v402, %v401
    %v480 = vpack.c.b16 %v404, %v403
    %v481 = vpack.c.b16 %v406, %v405
    %v482 = vpack.c.b16 %v408, %v407
    %v483 = vpack.c.b16 %v410, %v409
    %v484 = vpack.c.b16 %v412, %v411
    %v485 = vpack.c.b16 %v414, %v413
    %v486 = vpack.c.b16 %v416, %v415
    %v487 = vpack.c.b16 %v418, %v417
    %v488 = vpack.c.b16 %v420, %v419
    %v489 = vpack.c.b16 %v422, %v421
    %v490 = vpack.c.b16 %v424, %v423
    %v491 = vpack.c.b16 %v426, %v425
    %v492 = vpack.c.b16 %v428, %v427
    %557 = vmatpush.bf16.msra.mxu0 %v436
    %558 = vmatpush.bf16.msra.mxu0 %v435
    %559 = vmatpush.bf16.msra.mxu0 %v434
    %560 = vmatpush.bf16.msra.mxu0 %v433
    %561 = vmatpush.bf16.msra.mxu0 %v432
    %562 = vmatpush.bf16.msra.mxu0 %v431
    %563 = vmatpush.bf16.msra.mxu0 %v430
    %564 = vmatpush.bf16.msra.mxu0 %v429
    %565 = vmatmul.bf16.gmra.mxu0 %v157
    %v566 = vpop.f32.mrf.mxu0
    %v567 = vadd.f32 %v153, %v566
    %v568 = vpop.f32.mrf.mxu0
    %569 = vdwg.mxu0
    %570 = vmatpush.bf16.msra.mxu0 %v444
    %571 = vmatpush.bf16.msra.mxu0 %v443
    %572 = vmatpush.bf16.msra.mxu0 %v442
    %573 = vmatpush.bf16.msra.mxu0 %v441
    %574 = vmatpush.bf16.msra.mxu0 %v440
    %575 = vmatpush.bf16.msra.mxu0 %v439
    %576 = vmatpush.bf16.msra.mxu0 %v438
    %577 = vmatpush.bf16.msra.mxu0 %v437
    %578 = vmatmul.bf16.gmra.mxu0 %v158
    %v579 = vpop.f32.mrf.mxu0
    %v580 = vadd.f32 %v567, %v579
    %v581 = vpop.f32.mrf.mxu0
    %582 = vdwg.mxu0
    %583 = vmatpush.bf16.msra.mxu0 %v452
    %584 = vmatpush.bf16.msra.mxu0 %v451
    %585 = vmatpush.bf16.msra.mxu0 %v450
    %586 = vmatpush.bf16.msra.mxu0 %v449
    %587 = vmatpush.bf16.msra.mxu0 %v448
    %588 = vmatpush.bf16.msra.mxu0 %v447
    %589 = vmatpush.bf16.msra.mxu0 %v446
    %590 = vmatpush.bf16.msra.mxu0 %v445
    %591 = vmatmul.bf16.gmra.mxu0 %v159
    %v592 = vpop.f32.mrf.mxu0
    %v593 = vadd.f32 %v580, %v592
    %v594 = vpop.f32.mrf.mxu0
    %595 = vdwg.mxu0
    %596 = vmatpush.bf16.msra.mxu0 %v460
    %597 = vmatpush.bf16.msra.mxu0 %v459
    %598 = vmatpush.bf16.msra.mxu0 %v458
    %599 = vmatpush.bf16.msra.mxu0 %v457
    %600 = vmatpush.bf16.msra.mxu0 %v456
    %601 = vmatpush.bf16.msra.mxu0 %v455
    %602 = vmatpush.bf16.msra.mxu0 %v454
    %603 = vmatpush.bf16.msra.mxu0 %v453
    %604 = vmatmul.bf16.gmra.mxu0 %v160
    %v605 = vpop.f32.mrf.mxu0
    %v606 = vadd.f32 %v593, %v605
    %v607 = vpop.f32.mrf.mxu0
    %608 = vdwg.mxu0
    %609 = vmatpush.bf16.msra.mxu0 %v468
    %610 = vmatpush.bf16.msra.mxu0 %v467
    %611 = vmatpush.bf16.msra.mxu0 %v466
    %612 = vmatpush.bf16.msra.mxu0 %v465
    %613 = vmatpush.bf16.msra.mxu0 %v464
    %614 = vmatpush.bf16.msra.mxu0 %v463
    %615 = vmatpush.bf16.msra.mxu0 %v462
    %616 = vmatpush.bf16.msra.mxu0 %v461
    %617 = vmatmul.bf16.gmra.mxu0 %v161
    %v618 = vpop.f32.mrf.mxu0
    %v619 = vadd.f32 %v606, %v618
    %v620 = vpop.f32.mrf.mxu0
    %621 = vdwg.mxu0
    %622 = vmatpush.bf16.msra.mxu0 %v476
    %623 = vmatpush.bf16.msra.mxu0 %v475
    %624 = vmatpush.bf16.msra.mxu0 %v474
    %625 = vmatpush.bf16.msra.mxu0 %v473
    %626 = vmatpush.bf16.msra.mxu0 %v472
    %627 = vmatpush.bf16.msra.mxu0 %v471
    %628 = vmatpush.bf16.msra.mxu0 %v470
    %629 = vmatpush.bf16.msra.mxu0 %v469
    %630 = vmatmul.bf16.gmra.mxu0 %v162
    %v631 = vpop.f32.mrf.mxu0
    %v632 = vadd.f32 %v619, %v631
    %v633 = vpop.f32.mrf.mxu0
    %634 = vdwg.mxu0
    %635 = vmatpush.bf16.msra.mxu0 %v484
    %636 = vmatpush.bf16.msra.mxu0 %v483
    %637 = vmatpush.bf16.msra.mxu0 %v482
    %638 = vmatpush.bf16.msra.mxu0 %v481
    %639 = vmatpush.bf16.msra.mxu0 %v480
    %640 = vmatpush.bf16.msra.mxu0 %v479
    %641 = vmatpush.bf16.msra.mxu0 %v478
    %642 = vmatpush.bf16.msra.mxu0 %v477
    %643 = vmatmul.bf16.gmra.mxu0 %v163
    %v644 = vpop.f32.mrf.mxu0
    %v645 = vadd.f32 %v632, %v644
    %v646 = vpop.f32.mrf.mxu0
    %647 = vdwg.mxu0
    %648 = vmatpush.bf16.msra.mxu0 %v492
    %649 = vmatpush.bf16.msra.mxu0 %v491
    %650 = vmatpush.bf16.msra.mxu0 %v490
    %651 = vmatpush.bf16.msra.mxu0 %v489
    %652 = vmatpush.bf16.msra.mxu0 %v488
    %653 = vmatpush.bf16.msra.mxu0 %v487
    %654 = vmatpush.bf16.msra.mxu0 %v486
    %655 = vmatpush.bf16.msra.mxu0 %v485
    %656 = vmatmul.bf16.gmra.mxu0 %v164
    %v657 = vpop.f32.mrf.mxu0
    %v658 = vadd.f32 %v645, %v657
    %v659 = vpop.f32.mrf.mxu0
    %660 = vdwg.mxu0
    %v661 = vmax.f32 %v658, 0.0
    %v662 = vpack.c.bf16 %v661, %v661
    %v663 = vld [vmem:[%s3] sm:$0xf]
    %v664 = vld [vmem:[%s3 + $0x4] sm:$0xf]
    %v665 = vld [vmem:[%s3 + $0x8] sm:$0xf]
    %v666 = vld [vmem:[%s3 + $0xc] sm:$0xf]
    %v667 = vld [vmem:[%s4] sm:$0x1]
    %v669 = vperm.slane %v667, 0
    %v675 = vunpack.c.l.b16 %v663
    %v676 = vunpack.c.l.b16 %v664
    %v677 = vunpack.c.l.b16 %v665
    %v678 = vunpack.c.l.b16 %v666
    %v679 = vpack.c.b16 %v676, %v675
    %v680 = vpack.c.b16 %v678, %v677
    %vm683 = vcmask 261120
    %v685 = vsel %vm683, %v662, 0
    %687 = vmatpush.bf16.msra.mxu0 0
    %688 = vmatpush.bf16.msra.mxu0 0
    %689 = vmatpush.bf16.msra.mxu0 0
    %690 = vmatpush.bf16.msra.mxu0 0
    %691 = vmatpush.bf16.msra.mxu0 0
    %692 = vmatpush.bf16.msra.mxu0 0
    %693 = vmatpush.bf16.msra.mxu0 %v680
    %694 = vmatpush.bf16.msra.mxu0 %v679
    %695 = vmatmul.bf16.gmra.mxu0 %v685
    %v696 = vpop.f32.mrf.mxu0
    %v697 = vadd.f32 %v669, %v696
    %v698 = vpop.f32.mrf.mxu0
    %699 = vdwg.mxu0
    %vm700 = vcmask 33792
    %701 = vst.msk [vmem:[#allocation2] sm:$0x3] %vm700, %v697
    // Predicated region
    $region22: #{mark_forward.9} parent=1 // pred_check
      _
    $region23: #{mark_forward.9} parent=1 // pred_check_branch
      %703 = sbr.rel (0) target = $region25
    $region24: #{mark_forward.9} parent=1 // pred_region
      %705 = vsyncadd [#allocation3], 0
      %s707 = sshll.u32 [#allocation2], 4
      %s708 = int_to_ptr.vmem [resolvable:$true] %s707
      %s709 = sshll.u32 %s5, 4
      %s710 = int_to_ptr.hbm [resolvable:$true] %s709
      %712 = dma.vmem_to_hbm [thread:$0]  %s708, 32, %s710, [#allocation3]
    $region25: #{mark_forward.9} parent=1 // pred_fallthru
      _
    // Predicated region
    $region26: #{mark_forward.9} parent=1 // pred_check
      _
    $region27: #{mark_forward.9} parent=1 // pred_check_branch
      %714 = sbr.rel (0) target = $region29
    $region28: #{mark_forward.9} parent=1 // pred_region
      %716 = dma.done [#allocation3], 32
    $region29: #{mark_forward.9} parent=1 // pred_fallthru
      _
    %717 = vsyncpa [#allocation3], 1

</llo_original>
